<compile_context>
chip_gen: v7x
topology: tpu7x:2x2x1
jax: 0.10.0
libtpu: 0.0.40
codegen_flags: <defaults>
</compile_context>

<pallas_src>
import functools

import jax
import jax.numpy as jnp
from jax.experimental import pallas as pl
from jax.experimental.pallas import tpu as pltpu

_BN_SCALE = 1.0 / (1.0 + 1e-5) ** 0.5     # eval-mode BatchNorm with unit running stats
_OUT_PAD = 128                            # lane-dense padded output width (45 real ch.)


# ---------------------------------------------------------------------------
# 1. mapping_lang : Linear -> ReLU -> Linear -> ReLU -> L2-norm -> token mask
# ---------------------------------------------------------------------------

def _mapping_lang_kernel(t_ref, w1_ref, b1_ref, w2_ref, b2_ref, v_ref, o_ref):
    h = jnp.dot(t_ref[...], w1_ref[...], preferred_element_type=jnp.float32) + b1_ref[...]
    h = jnp.maximum(h, 0.0)
    y = jnp.dot(h.astype(jnp.bfloat16), w2_ref[...],
                preferred_element_type=jnp.float32) + b2_ref[...]
    y = jnp.maximum(y, 0.0)
    nrm2 = jnp.sum(y * y, axis=-1, keepdims=True)
    y = y * jax.lax.rsqrt(jnp.maximum(nrm2, 1e-24))     # == y / max(||y||, 1e-12)
    o_ref[...] = y * v_ref[...]                         # zero padding tokens


def mapping_lang(tok_bf16, w1, b1, w2, b2, valid):
    M, K = tok_bf16.shape
    E = w1.shape[1]
    return pl.pallas_call(
        _mapping_lang_kernel,
        out_shape=jax.ShapeDtypeStruct((M, E), jnp.float32),
        grid=(1,),
        in_specs=[pl.BlockSpec((M, K), lambda i: (0, 0)),
                  pl.BlockSpec((K, E), lambda i: (0, 0)),
                  pl.BlockSpec((1, E), lambda i: (0, 0)),
                  pl.BlockSpec((E, E), lambda i: (0, 0)),
                  pl.BlockSpec((1, E), lambda i: (0, 0)),
                  pl.BlockSpec((M, 1), lambda i: (0, 0))],
        out_specs=pl.BlockSpec((M, E), lambda i: (0, 0)),
        compiler_params=pltpu.CompilerParams(dimension_semantics=("arbitrary",)),
    )(tok_bf16, w1, b1, w2, b2, valid)


# ---------------------------------------------------------------------------
# 2. fused chain : mapping_visu -> film0 -> conv3x3 -> film1 -> fcn_out (per batch)
# ---------------------------------------------------------------------------

def _fused_chain_kernel(rawv_ref, fw_ref, mk_ref, mvw_ref,
                        amw_ref, amb_ref, asw_ref, asb_ref,
                        gw_ref, gb_ref, c1wv_ref, cbias_ref,
                        w3_ref, f1w_ref, f2w_ref, f2b_ref,
                        out_ref, as0_ref, as1_ref, *, H, W, E):
    HW = H * W
    fw = fw_ref[0]                                      # (N, E)  f32 language features
    mk = mk_ref[0]                                      # (N, 1)  mask_softmax word mask
    N = fw.shape[0]

    # ---- mapping_visu : 1x1 conv + BN + ReLU + channel L2-norm ----
    y = jnp.dot(rawv_ref[0], mvw_ref[...], preferred_element_type=jnp.float32)
    y = jnp.maximum(y * _BN_SCALE, 0.0)
    fv = y * jax.lax.rsqrt(jnp.maximum(jnp.sum(y * y, axis=-1, keepdims=True), 1e-24))

    # ---- one FiLMedConvBlock_context, resident on (HW, E) ----
    def film_block(idx, x, cscore):
        tile_visu = jnp.mean(x, axis=0, keepdims=True)                     # (1, E)
        ct = tile_visu * fw if cscore is None else tile_visu * fw * cscore
        ct = ct.astype(jnp.bfloat16)                                       # (N, E)
        attn_feat = jnp.tanh(
            jnp.dot(ct, amw_ref[idx], preferred_element_type=jnp.float32) + amb_ref[idx])
        attn_score = (jnp.sum(attn_feat * asw_ref[idx], axis=-1, keepdims=True)
                      + asb_ref[idx])                                      # (N, 1)

        # mask_softmax (temperature 10), exact divisions for parity
        s = attn_score * 10.0
        s = s - jnp.max(s, axis=0, keepdims=True)
        e = jnp.exp(s)
        p = e / jnp.sum(e, axis=0, keepdims=True)
        pm = p * mk
        pm = pm / (jnp.sum(pm, axis=0, keepdims=True) + 1e-8)
        attn_lang = jnp.sum(pm * fw, axis=0, keepdims=True)                # (1, E)

        # FiLM parameter decode: single (1,E)@(E,2E) lane-dense matmul, static slices
        film_par = jnp.tanh(
            jnp.dot(attn_lang.astype(jnp.bfloat16), gw_ref[idx],
                    preferred_element_type=jnp.float32) + gb_ref[idx])     # (1, 2E)
        gam = film_par[:, :E]
        bet = film_par[:, E:]

        # 1x1 conv over [x, coord]; coord branch pre-folded into cbias (HW, E)
        ymod = (jnp.dot(x.astype(jnp.bfloat16), c1wv_ref[idx],
                        preferred_element_type=jnp.float32) + cbias_ref[idx])

        # InstanceNorm2d (no affine, eps=1e-5) + FiLM + ReLU + residual
        mean = jnp.mean(ymod, axis=0, keepdims=True)
        var = jnp.mean(jnp.square(ymod - mean), axis=0, keepdims=True)
        yn = (ymod - mean) * jax.lax.rsqrt(var + 1e-5)
        return jnp.maximum(gam * yn + bet, 0.0) + x, attn_score, pm

    x0, as0, pm0 = film_block(0, fv, None)              # context_score == 1

    # ---- conv3x3(pad=1)+BN+ReLU as one (HW, 9E) @ (9E, E) MXU matmul ----
    # border masks built in-kernel (no lane-padded mask DMA)
    posf = jax.lax.broadcasted_iota(jnp.int32, (HW, 1), 0).astype(jnp.float32)
    rowf = jnp.floor((posf + 0.5) * (1.0 / W))
    colf = posf - rowf * W
    patches = []
    for dy in (-1, 0, 1):
        for dx in (-1, 0, 1):
            s = dy * W + dx
            sh = (-s) % HW
            shifted = pltpu.roll(x0, sh, axis=0) if sh else x0   # shifted[p] = x0[p + s]
            if dy == 0 and dx == 0:
                patches.append(shifted)
            else:
                valid = ((rowf + dy >= 0.0) & (rowf + dy < H)
                         & (colf + dx >= 0.0) & (colf + dx < W))
                patches.append(jnp.where(valid, shifted, 0.0))
    big = jnp.concatenate(patches, axis=-1).astype(jnp.bfloat16)          # (HW, 9E)
    x1 = jnp.maximum(
        jnp.dot(big, w3_ref[...], preferred_element_type=jnp.float32) * _BN_SCALE, 0.0)

    # ---- second FiLM block with cs1 = 1 - clip(mask_score0, 0, 1) ----
    cs1 = 1.0 - jnp.clip(pm0, 0.0, 1.0)
    x2, as1, _ = film_block(1, x1, cs1)

    # ---- fcn_out : ConvBNReLU(E -> E/2, lane-padded) + Conv2d(E/2 -> 45, padded) ----
    h = jnp.maximum(
        jnp.dot(x2.astype(jnp.bfloat16), f1w_ref[...],
                preferred_element_type=jnp.float32) * _BN_SCALE, 0.0)
    out_ref[0] = jnp.dot(h.astype(jnp.bfloat16), f2w_ref[...],
                         preferred_element_type=jnp.float32) + f2b_ref[...]
    as0_ref[0] = as0
    as1_ref[0] = as1


def fused_chain(x_cl, fword, mask_eff, cbias, params, H, W):
    B, HW, Cin = x_cl.shape
    E = params["mv_w"].shape[1]
    E2 = params["film_amw"].shape[2]
    E2P = params["fcn1_w"].shape[1]
    N = fword.shape[1]
    z2 = lambda b: (0, 0)
    z3 = lambda b: (0, 0, 0)
    bat = lambda b: (b, 0, 0)
    return pl.pallas_call(
        functools.partial(_fused_chain_kernel, H=H, W=W, E=E),
        out_shape=(jax.ShapeDtypeStruct((B, HW, _OUT_PAD), jnp.float32),
                   jax.ShapeDtypeStruct((B, N, 1), jnp.float32),
                   jax.ShapeDtypeStruct((B, N, 1), jnp.float32)),
        grid=(B,),
        in_specs=[pl.BlockSpec((1, HW, Cin), bat),        # raw visual (channel-last)
                  pl.BlockSpec((1, N, E), bat),           # fword
                  pl.BlockSpec((1, N, 1), bat),           # mask_softmax word mask
                  pl.BlockSpec((Cin, E), z2),             # mapping_visu W      (bf16)
                  pl.BlockSpec((2, E, E2), z3),           # attn_map W          (bf16)
                  pl.BlockSpec((2, 1, E2), z3),           # attn_map b
                  pl.BlockSpec((2, 1, E2), z3),           # attn_score W (row)
                  pl.BlockSpec((2, 1, 1), z3),            # attn_score b
                  pl.BlockSpec((2, E, 2 * E), z3),        # gamme_decode W      (bf16)
                  pl.BlockSpec((2, 1, 2 * E), z3),        # gamme_decode b
                  pl.BlockSpec((2, E, E), z3),            # conv1 W (visual)    (bf16)
                  pl.BlockSpec((2, HW, E), z3),           # coord@conv1_Wc + b  (f32)
                  pl.BlockSpec((9 * E, E), z2),           # conv3x3 W (single matmul)
                  pl.BlockSpec((E, E2P), z2),             # fcn_out conv1 W (padded)
                  pl.BlockSpec((E2P, _OUT_PAD), z2),      # fcn_out conv2 W (padded)
                  pl.BlockSpec((1, _OUT_PAD), z2)],       # fcn_out conv2 b (padded)
        out_specs=(pl.BlockSpec((1, HW, _OUT_PAD), bat),
                   pl.BlockSpec((1, N, 1), bat),
                   pl.BlockSpec((1, N, 1), bat)),
        compiler_params=pltpu.CompilerParams(dimension_semantics=("parallel",)),
    )(x_cl, fword, mask_eff, params["mv_w"],
      params["film_amw"], params["film_amb"], params["film_asw"], params["film_asb"],
      params["film_gw"], params["film_gb"], params["film_c1wv"], cbias,
      params["conv3_w"], params["fcn1_w"], params["fcn2_w"], params["fcn2_b"])


# ---------------------------------------------------------------------------
# Forward pass glue (plain JAX: layout changes, coord grid + coord-bias, token masks)
# ---------------------------------------------------------------------------

def _generate_coord(H, W):
    xv = jnp.arange(H, dtype=jnp.float32)[:, None] * jnp.ones((1, W), jnp.float32)
    yv = jnp.ones((H, 1), jnp.float32) * jnp.arange(W, dtype=jnp.float32)[None, :]
    xv_min = (xv * 2 - W) / W
    yv_min = (yv * 2 - H) / H
    xv_max = ((xv + 1) * 2 - W) / W
    yv_max = ((yv + 1) * 2 - H) / H
    xv_ctr = (xv_min + xv_max) / 2
    yv_ctr = (yv_min + yv_max) / 2
    hmap = jnp.full((H, W), 1.0 / H, jnp.float32)
    wmap = jnp.full((H, W), 1.0 / W, jnp.float32)
    return jnp.stack([xv_min, yv_min, xv_max, yv_max, xv_ctr, yv_ctr, hmap, wmap],
                     axis=-1).reshape(H * W, 8)


def resc_backbone_forward(params, raw_fword, raw_fvisu, word_mask):
    B, Cin, H, W = raw_fvisu.shape
    _, N, Dtext = raw_fword.shape
    E = params["mv_w"].shape[1]
    HW = H * W

    # mapping_lang per token + L2-norm; padding tokens stay zero
    # (assumes a contiguous-prefix binary word mask, like the BERT inputs upstream)
    tok = raw_fword.reshape(B * N, Dtext).astype(jnp.bfloat16)
    ntoken = jnp.sum((word_mask != 0).astype(jnp.int32), axis=1)
    valid = (jnp.arange(N)[None, :] < ntoken[:, None]).astype(jnp.float32)
    fword = mapping_lang(tok, params["lang1_w"], params["lang1_b"],
                         params["lang2_w"], params["lang2_b"],
                         valid.reshape(B * N, 1)).reshape(B, N, E)

    # effective word mask for mask_softmax (zero CLS token and last valid token)
    wm = (word_mask != 0).astype(jnp.float32)
    mask_cp = wm.at[:, 0].set(0.0)
    s_idx = jnp.sum(mask_cp, axis=1).astype(jnp.int32)
    mask_eff = (mask_cp * (1.0 - jax.nn.one_hot(s_idx, N, dtype=jnp.float32)))
    mask_eff = mask_eff.reshape(B, N, 1)

    # coord branch of each FiLM block's 1x1 conv pre-folded into an (HW, E) bias
    coord = _generate_coord(H, W)                                        # (HW, 8)
    cbias = (jnp.einsum("pc,kce->kpe", coord, params["film_c1wc"])
             + params["film_c1b"])                                       # (2, HW, E)

    # visual features in channel-last layout
    x_cl = (jnp.transpose(raw_fvisu, (0, 2, 3, 1))
            .reshape(B, HW, Cin).astype(jnp.bfloat16))

    out_slab, ascore0, ascore1 = fused_chain(x_cl, fword, mask_eff, cbias, params, H, W)

    out = out_slab[:, :, :45].reshape(B, H, W, 45).transpose(0, 3, 1, 2)  # NCHW
    attnscore_list = [ascore0.reshape(B, N, 1, 1), ascore1.reshape(B, N, 1, 1)]
    return [out], attnscore_list


# ---------------------------------------------------------------------------
# Deterministic parameter initialization (kernel-ready layouts, bf16 MXU weights)
# ---------------------------------------------------------------------------

def make_params(key, E, cin_visu=256, textdim=768):
    ks = iter(jax.random.split(key, 64))

    def kaiming(shape, fan_in):
        b = (6.0 / fan_in) ** 0.5
        return jax.random.uniform(next(ks), shape, jnp.float32, -b, b)

    def bias(shape, fan_in):
        b = 1.0 / (fan_in ** 0.5)
        return jax.random.uniform(next(ks), shape, jnp.float32, -b, b)

    bf = lambda a: a.astype(jnp.bfloat16)
    E2 = E // 2

    def film_params():
        return dict(
            amw=kaiming((E, E2), E),            # attn_map  Conv1d(E, E//2, 1)
            amb=bias((1, E2), E),
            asw=kaiming((1, E2), E2),           # attn_score Conv1d(E//2, 1, 1) as a row
            asb=bias((1, 1), E2),
            gw=kaiming((E, 2 * E), E),          # gamme_decode Linear(E, 2E)
            gb=bias((1, 2 * E), E),
            c1wv=kaiming((E, E), E + 8),        # conv1 Conv2d(E+8, E, 1): visual rows
            c1wc=kaiming((8, E), E + 8),        #                         coord rows
            c1b=bias((1, E), E + 8),
        )

    f0, f1 = film_params(), film_params()
    stack = lambda k: jnp.stack([f0[k], f1[k]], axis=0)

    # 3x3 conv (torch layout (Cout, Cin, 3, 3)) -> single-matmul weight (9*Cin, Cout)
    w3 = kaiming((E, E, 3, 3), E * 9)
    conv3_w = bf(jnp.transpose(w3, (2, 3, 1, 0)).reshape(9 * E, E))

    # fcn_out head, padded lane-dense (real channels: E//2 hidden, 45 output)
    E2P = max(128, -(-E2 // 128) * 128)
    fcn1_w = jnp.pad(kaiming((E, E2), E), ((0, 0), (0, E2P - E2)))
    fcn2_w = jnp.pad(kaiming((E2, 45), E2), ((0, E2P - E2), (0, _OUT_PAD - 45)))
    fcn2_b = jnp.pad(bias((45,), E2), (0, _OUT_PAD - 45)).reshape(1, _OUT_PAD)

    return dict(
        mv_w=bf(kaiming((cin_visu, E), cin_visu)),      # mapping_visu 1x1 conv
        lang1_w=bf(kaiming((textdim, E), textdim)),     # mapping_lang Linear(768, E)
        lang1_b=bias((1, E), textdim),
        lang2_w=bf(kaiming((E, E), E)),                 # mapping_lang Linear(E, E)
        lang2_b=bias((1, E), E),
        film_amw=bf(stack("amw")),
        film_amb=stack("amb"),
        film_asw=stack("asw"),
        film_asb=stack("asb"),
        film_gw=bf(stack("gw")),
        film_gb=stack("gb"),
        film_c1wv=bf(stack("c1wv")),
        film_c1wc=stack("c1wc"),       # f32: used only in the wrapper coord-bias fold
        film_c1b=stack("c1b"),
        conv3_w=conv3_w,
        fcn1_w=bf(fcn1_w),
        fcn2_w=bf(fcn2_w),
        fcn2_b=fcn2_b,
    )


# ---------------------------------------------------------------------------

if __name__ == "__main__":
    key = jax.random.PRNGKey(0)
    k_param, k_visu, k_word = jax.random.split(key, 3)

    E = 64            # emb_size (constructor arg of ReSC_BACKBONE)
    B, CIN, H, W = 2, 256, 8, 8
    N, DTEXT = 8, 768

    params = make_params(k_param, E, cin_visu=CIN, textdim=DTEXT)

    raw_fvisu = jax.random.normal(k_visu, (B, CIN, H, W), jnp.float32)
    raw_fword = jax.random.normal(k_word, (B, N, DTEXT), jnp.float32)
    # contiguous-prefix binary word mask (BERT style), ntoken per sample
    ntok = jnp.array([6, 4], jnp.int32)
    word_mask = (jnp.arange(N)[None, :] < ntok[:, None]).astype(jnp.int32)

    fwd = jax.jit(resc_backbone_forward)
    outbox, attnscore_list = fwd(params, raw_fword, raw_fvisu, word_mask)
    jax.block_until_ready(outbox[0])
    jax.block_until_ready(attnscore_list[-1])

    assert outbox[0].shape == (B, 45, H, W)
    assert attnscore_list[0].shape == (B, N, 1, 1)
    print("KERNEL_OK")
</pallas_src>

<mosaic_0001>
module attributes {stable_mosaic.version = 11 : i64} {
  func.func @_mapping_lang_kernel(%arg0: i32, %arg1: memref<16x768xbf16, #tpu.memory_space<vmem>>, %arg2: memref<768x64xbf16, #tpu.memory_space<vmem>>, %arg3: memref<1x64xf32, #tpu.memory_space<vmem>>, %arg4: memref<64x64xbf16, #tpu.memory_space<vmem>>, %arg5: memref<1x64xf32, #tpu.memory_space<vmem>>, %arg6: memref<16x1xf32, #tpu.memory_space<vmem>>, %arg7: memref<16x64xf32, #tpu.memory_space<vmem>>) attributes {dimension_semantics = [#tpu.dimension_semantics<arbitrary>], iteration_bounds = array<i64: 1>, scalar_prefetch = 0 : i64, scratch_operands = 0 : i64, tpu.core_type = #tpu.core_type<tc>, window_params = [{pipeline_mode = #tpu.pipeline_mode<synchronous>, transform_indices = @transform_0, window_bounds = array<i64: 16, 768>}, {pipeline_mode = #tpu.pipeline_mode<synchronous>, transform_indices = @transform_1, window_bounds = array<i64: 768, 64>}, {pipeline_mode = #tpu.pipeline_mode<synchronous>, transform_indices = @transform_2, window_bounds = array<i64: 1, 64>}, {pipeline_mode = #tpu.pipeline_mode<synchronous>, transform_indices = @transform_3, window_bounds = array<i64: 64, 64>}, {pipeline_mode = #tpu.pipeline_mode<synchronous>, transform_indices = @transform_4, window_bounds = array<i64: 1, 64>}, {pipeline_mode = #tpu.pipeline_mode<synchronous>, transform_indices = @transform_5, window_bounds = array<i64: 16, 1>}, {pipeline_mode = #tpu.pipeline_mode<synchronous>, transform_indices = @transform_6, window_bounds = array<i64: 16, 64>}]} {
    %c0 = arith.constant 0 : index
    %c0_0 = arith.constant 0 : index
    %0 = vector.load %arg1[%c0, %c0_0] : memref<16x768xbf16, #tpu.memory_space<vmem>>, vector<16x768xbf16>
    %c0_1 = arith.constant 0 : index
    %c0_2 = arith.constant 0 : index
    %1 = vector.load %arg2[%c0_1, %c0_2] : memref<768x64xbf16, #tpu.memory_space<vmem>>, vector<768x64xbf16>
    %cst = arith.constant dense<0.000000e+00> : vector<16x64xf32>
    %2 = tpu.matmul %0, %1, %cst {dimension_numbers = #tpu.dot_dimension_numbers<[1], [0], [0], [1], [0, 0, 1, 1], [], []>} : vector<16x768xbf16>, vector<768x64xbf16>, vector<16x64xf32> -> vector<16x64xf32>
    %c0_3 = arith.constant 0 : index
    %c0_4 = arith.constant 0 : index
    %3 = vector.load %arg3[%c0_3, %c0_4] : memref<1x64xf32, #tpu.memory_space<vmem>>, vector<1x64xf32>
    %4 = vector.broadcast %3 : vector<1x64xf32> to vector<16x64xf32>
    %5 = arith.addf %2, %4 : vector<16x64xf32>
    %cst_5 = arith.constant 0.000000e+00 : f32
    %6 = vector.broadcast %cst_5 : f32 to vector<16x64xf32>
    %7 = arith.maximumf %5, %6 : vector<16x64xf32>
    %8 = arith.truncf %7 : vector<16x64xf32> to vector<16x64xbf16>
    %c0_6 = arith.constant 0 : index
    %c0_7 = arith.constant 0 : index
    %9 = vector.load %arg4[%c0_6, %c0_7] : memref<64x64xbf16, #tpu.memory_space<vmem>>, vector<64x64xbf16>
    %cst_8 = arith.constant dense<0.000000e+00> : vector<16x64xf32>
    %10 = tpu.matmul %8, %9, %cst_8 {dimension_numbers = #tpu.dot_dimension_numbers<[1], [0], [0], [1], [0, 0, 1, 1], [], []>} : vector<16x64xbf16>, vector<64x64xbf16>, vector<16x64xf32> -> vector<16x64xf32>
    %c0_9 = arith.constant 0 : index
    %c0_10 = arith.constant 0 : index
    %11 = vector.load %arg5[%c0_9, %c0_10] : memref<1x64xf32, #tpu.memory_space<vmem>>, vector<1x64xf32>
    %12 = vector.broadcast %11 : vector<1x64xf32> to vector<16x64xf32>
    %13 = arith.addf %10, %12 : vector<16x64xf32>
    %cst_11 = arith.constant 0.000000e+00 : f32
    %14 = vector.broadcast %cst_11 : f32 to vector<16x64xf32>
    %15 = arith.maximumf %13, %14 : vector<16x64xf32>
    %16 = arith.mulf %15, %15 : vector<16x64xf32>
    %cst_12 = arith.constant dense<0.000000e+00> : vector<16xf32>
    %17 = vector.multi_reduction <add>, %16, %cst_12 [1] : vector<16x64xf32> to vector<16xf32>
    %18 = vector.shape_cast %17 : vector<16xf32> to vector<16x1xf32>
    %cst_13 = arith.constant 1.000000e-24 : f32
    %19 = vector.broadcast %cst_13 : f32 to vector<16x1xf32>
    %20 = arith.maximumf %18, %19 : vector<16x1xf32>
    %21 = math.rsqrt %20 : vector<16x1xf32>
    %22 = vector.broadcast %21 : vector<16x1xf32> to vector<16x64xf32>
    %23 = arith.mulf %15, %22 : vector<16x64xf32>
    %c0_14 = arith.constant 0 : index
    %c0_15 = arith.constant 0 : index
    %24 = vector.load %arg6[%c0_14, %c0_15] : memref<16x1xf32, #tpu.memory_space<vmem>>, vector<16x1xf32>
    %25 = vector.broadcast %24 : vector<16x1xf32> to vector<16x64xf32>
    %26 = arith.mulf %23, %25 : vector<16x64xf32>
    %c0_16 = arith.constant 0 : index
    %c0_17 = arith.constant 0 : index
    %27 = vector.load %arg7[%c0_16, %c0_17] : memref<16x64xf32, #tpu.memory_space<vmem>>, vector<16x64xf32>
    tpu.vector_store %arg7[%c0_16, %c0_17], %26 {strides = array<i32>} : memref<16x64xf32, #tpu.memory_space<vmem>>, vector<16x64xf32>,
    return
  }
  func.func @transform_0(%arg0: i32) -> (i32, i32) {
    %c0_i32 = arith.constant 0 : i32
    %c0_i32_0 = arith.constant 0 : i32
    %c0_i32_1 = arith.constant 0 : i32
    return %c0_i32, %c0_i32_0 : i32, i32
  }
  func.func @transform_1(%arg0: i32) -> (i32, i32) {
    %c0_i32 = arith.constant 0 : i32
    %c0_i32_0 = arith.constant 0 : i32
    %c0_i32_1 = arith.constant 0 : i32
    return %c0_i32, %c0_i32_0 : i32, i32
  }
  func.func @transform_2(%arg0: i32) -> (i32, i32) {
    %c0_i32 = arith.constant 0 : i32
    %c0_i32_0 = arith.constant 0 : i32
    %c0_i32_1 = arith.constant 0 : i32
    return %c0_i32, %c0_i32_0 : i32, i32
  }
  func.func @transform_3(%arg0: i32) -> (i32, i32) {
    %c0_i32 = arith.constant 0 : i32
    %c0_i32_0 = arith.constant 0 : i32
    %c0_i32_1 = arith.constant 0 : i32
    return %c0_i32, %c0_i32_0 : i32, i32
  }
  func.func @transform_4(%arg0: i32) -> (i32, i32) {
    %c0_i32 = arith.constant 0 : i32
    %c0_i32_0 = arith.constant 0 : i32
    %c0_i32_1 = arith.constant 0 : i32
    return %c0_i32, %c0_i32_0 : i32, i32
  }
  func.func @transform_5(%arg0: i32) -> (i32, i32) {
    %c0_i32 = arith.constant 0 : i32
    %c0_i32_0 = arith.constant 0 : i32
    %c0_i32_1 = arith.constant 0 : i32
    return %c0_i32, %c0_i32_0 : i32, i32
  }
  func.func @transform_6(%arg0: i32) -> (i32, i32) {
    %c0_i32 = arith.constant 0 : i32
    %c0_i32_0 = arith.constant 0 : i32
    %c0_i32_1 = arith.constant 0 : i32
    return %c0_i32, %c0_i32_0 : i32, i32
  }
}

module attributes {stable_mosaic.version = 11 : i64} {
  func.func @_fused_chain_kernel(%arg0: i32, %arg1: memref<1x64x256xbf16, #tpu.memory_space<vmem>>, %arg2: memref<1x8x64xf32, #tpu.memory_space<vmem>>, %arg3: memref<1x8x1xf32, #tpu.memory_space<vmem>>, %arg4: memref<256x64xbf16, #tpu.memory_space<vmem>>, %arg5: memref<2x64x32xbf16, #tpu.memory_space<vmem>>, %arg6: memref<2x1x32xf32, #tpu.memory_space<vmem>>, %arg7: memref<2x1x32xf32, #tpu.memory_space<vmem>>, %arg8: memref<2x1x1xf32, #tpu.memory_space<vmem>>, %arg9: memref<2x64x128xbf16, #tpu.memory_space<vmem>>, %arg10: memref<2x1x128xf32, #tpu.memory_space<vmem>>, %arg11: memref<2x64x64xbf16, #tpu.memory_space<vmem>>, %arg12: memref<2x64x64xf32, #tpu.memory_space<vmem>>, %arg13: memref<576x64xbf16, #tpu.memory_space<vmem>>, %arg14: memref<64x128xbf16, #tpu.memory_space<vmem>>, %arg15: memref<128x128xbf16, #tpu.memory_space<vmem>>, %arg16: memref<1x128xf32, #tpu.memory_space<vmem>>, %arg17: memref<1x64x128xf32, #tpu.memory_space<vmem>>, %arg18: memref<1x8x1xf32, #tpu.memory_space<vmem>>, %arg19: memref<1x8x1xf32, #tpu.memory_space<vmem>>) attributes {dimension_semantics = [#tpu.dimension_semantics<parallel>], iteration_bounds = array<i64: 2>, scalar_prefetch = 0 : i64, scratch_operands = 0 : i64, tpu.core_type = #tpu.core_type<tc>, window_params = [{transform_indices = @transform_0, window_bounds = array<i64: 1, 64, 256>}, {transform_indices = @transform_1, window_bounds = array<i64: 1, 8, 64>}, {transform_indices = @transform_2, window_bounds = array<i64: 1, 8, 1>}, {pipeline_mode = #tpu.pipeline_mode<synchronous>, transform_indices = @transform_3, window_bounds = array<i64: 256, 64>}, {pipeline_mode = #tpu.pipeline_mode<synchronous>, transform_indices = @transform_4, window_bounds = array<i64: 2, 64, 32>}, {pipeline_mode = #tpu.pipeline_mode<synchronous>, transform_indices = @transform_5, window_bounds = array<i64: 2, 1, 32>}, {pipeline_mode = #tpu.pipeline_mode<synchronous>, transform_indices = @transform_6, window_bounds = array<i64: 2, 1, 32>}, {pipeline_mode = #tpu.pipeline_mode<synchronous>, transform_indices = @transform_7, window_bounds = array<i64: 2, 1, 1>}, {pipeline_mode = #tpu.pipeline_mode<synchronous>, transform_indices = @transform_8, window_bounds = array<i64: 2, 64, 128>}, {pipeline_mode = #tpu.pipeline_mode<synchronous>, transform_indices = @transform_9, window_bounds = array<i64: 2, 1, 128>}, {pipeline_mode = #tpu.pipeline_mode<synchronous>, transform_indices = @transform_10, window_bounds = array<i64: 2, 64, 64>}, {pipeline_mode = #tpu.pipeline_mode<synchronous>, transform_indices = @transform_11, window_bounds = array<i64: 2, 64, 64>}, {pipeline_mode = #tpu.pipeline_mode<synchronous>, transform_indices = @transform_12, window_bounds = array<i64: 576, 64>}, {pipeline_mode = #tpu.pipeline_mode<synchronous>, transform_indices = @transform_13, window_bounds = array<i64: 64, 128>}, {pipeline_mode = #tpu.pipeline_mode<synchronous>, transform_indices = @transform_14, window_bounds = array<i64: 128, 128>}, {pipeline_mode = #tpu.pipeline_mode<synchronous>, transform_indices = @transform_15, window_bounds = array<i64: 1, 128>}, {transform_indices = @transform_16, window_bounds = array<i64: 1, 64, 128>}, {transform_indices = @transform_17, window_bounds = array<i64: 1, 8, 1>}, {transform_indices = @transform_18, window_bounds = array<i64: 1, 8, 1>}]} {
    %c0 = arith.constant 0 : index
    %c0_0 = arith.constant 0 : index
    %c0_1 = arith.constant 0 : index
    %0 = vector.load %arg2[%c0, %c0_0, %c0_1] : memref<1x8x64xf32, #tpu.memory_space<vmem>>, vector<1x8x64xf32>
    %1 = vector.shape_cast %0 : vector<1x8x64xf32> to vector<8x64xf32>
    %c0_2 = arith.constant 0 : index
    %c0_3 = arith.constant 0 : index
    %c0_4 = arith.constant 0 : index
    %2 = vector.load %arg3[%c0_2, %c0_3, %c0_4] : memref<1x8x1xf32, #tpu.memory_space<vmem>>, vector<1x8x1xf32>
    %3 = vector.shape_cast %2 : vector<1x8x1xf32> to vector<8x1xf32>
    %c0_5 = arith.constant 0 : index
    %c0_6 = arith.constant 0 : index
    %c0_7 = arith.constant 0 : index
    %4 = vector.load %arg1[%c0_5, %c0_6, %c0_7] : memref<1x64x256xbf16, #tpu.memory_space<vmem>>, vector<1x64x256xbf16>
    %5 = vector.shape_cast %4 : vector<1x64x256xbf16> to vector<64x256xbf16>
    %c0_8 = arith.constant 0 : index
    %c0_9 = arith.constant 0 : index
    %6 = vector.load %arg4[%c0_8, %c0_9] : memref<256x64xbf16, #tpu.memory_space<vmem>>, vector<256x64xbf16>
    %cst = arith.constant dense<0.000000e+00> : vector<64x64xf32>
    %7 = tpu.matmul %5, %6, %cst {dimension_numbers = #tpu.dot_dimension_numbers<[1], [0], [0], [1], [0, 0, 1, 1], [], []>} : vector<64x256xbf16>, vector<256x64xbf16>, vector<64x64xf32> -> vector<64x64xf32>
    %cst_10 = arith.constant 0.999994993 : f32
    %8 = vector.broadcast %cst_10 : f32 to vector<64x64xf32>
    %9 = arith.mulf %7, %8 : vector<64x64xf32>
    %cst_11 = arith.constant 0.000000e+00 : f32
    %10 = vector.broadcast %cst_11 : f32 to vector<64x64xf32>
    %11 = arith.maximumf %9, %10 : vector<64x64xf32>
    %12 = arith.mulf %11, %11 : vector<64x64xf32>
    %cst_12 = arith.constant dense<0.000000e+00> : vector<64xf32>
    %13 = vector.multi_reduction <add>, %12, %cst_12 [1] : vector<64x64xf32> to vector<64xf32>
    %14 = vector.shape_cast %13 : vector<64xf32> to vector<64x1xf32>
    %cst_13 = arith.constant 1.000000e-24 : f32
    %15 = vector.broadcast %cst_13 : f32 to vector<64x1xf32>
    %16 = arith.maximumf %14, %15 : vector<64x1xf32>
    %17 = math.rsqrt %16 : vector<64x1xf32>
    %18 = vector.broadcast %17 : vector<64x1xf32> to vector<64x64xf32>
    %19 = arith.mulf %11, %18 : vector<64x64xf32>
    %cst_14 = arith.constant dense<0.000000e+00> : vector<64xf32>
    %20 = vector.multi_reduction <add>, %19, %cst_14 [0] : vector<64x64xf32> to vector<64xf32>
    %21 = vector.shape_cast %20 : vector<64xf32> to vector<1x64xf32>
    %cst_15 = arith.constant 6.400000e+01 : f32
    %22 = vector.broadcast %cst_15 : f32 to vector<1x64xf32>
    %23 = arith.divf %21, %22 : vector<1x64xf32>
    %24 = vector.broadcast %23 : vector<1x64xf32> to vector<8x64xf32>
    %25 = arith.mulf %24, %1 : vector<8x64xf32>
    %26 = arith.truncf %25 : vector<8x64xf32> to vector<8x64xbf16>
    %c0_16 = arith.constant 0 : index
    %c0_17 = arith.constant 0 : index
    %c0_18 = arith.constant 0 : index
    %27 = vector.load %arg5[%c0_16, %c0_17, %c0_18] : memref<2x64x32xbf16, #tpu.memory_space<vmem>>, vector<1x64x32xbf16>
    %28 = vector.shape_cast %27 : vector<1x64x32xbf16> to vector<64x32xbf16>
    %cst_19 = arith.constant dense<0.000000e+00> : vector<8x32xf32>
    %29 = tpu.matmul %26, %28, %cst_19 {dimension_numbers = #tpu.dot_dimension_numbers<[1], [0], [0], [1], [0, 0, 1, 1], [], []>} : vector<8x64xbf16>, vector<64x32xbf16>, vector<8x32xf32> -> vector<8x32xf32>
    %c0_20 = arith.constant 0 : index
    %c0_21 = arith.constant 0 : index
    %c0_22 = arith.constant 0 : index
    %30 = vector.load %arg6[%c0_20, %c0_21, %c0_22] : memref<2x1x32xf32, #tpu.memory_space<vmem>>, vector<1x1x32xf32>
    %31 = vector.shape_cast %30 : vector<1x1x32xf32> to vector<1x32xf32>
    %32 = vector.broadcast %31 : vector<1x32xf32> to vector<8x32xf32>
    %33 = arith.addf %29, %32 : vector<8x32xf32>
    %34 = math.tanh %33 : vector<8x32xf32>
    %c0_23 = arith.constant 0 : index
    %c0_24 = arith.constant 0 : index
    %c0_25 = arith.constant 0 : index
    %35 = vector.load %arg7[%c0_23, %c0_24, %c0_25] : memref<2x1x32xf32, #tpu.memory_space<vmem>>, vector<1x1x32xf32>
    %36 = vector.shape_cast %35 : vector<1x1x32xf32> to vector<1x32xf32>
    %37 = vector.broadcast %36 : vector<1x32xf32> to vector<8x32xf32>
    %38 = arith.mulf %34, %37 : vector<8x32xf32>
    %cst_26 = arith.constant dense<0.000000e+00> : vector<8xf32>
    %39 = vector.multi_reduction <add>, %38, %cst_26 [1] : vector<8x32xf32> to vector<8xf32>
    %40 = vector.shape_cast %39 : vector<8xf32> to vector<8x1xf32>
    %c0_27 = arith.constant 0 : index
    %c0_28 = arith.constant 0 : index
    %c0_29 = arith.constant 0 : index
    %41 = vector.load %arg8[%c0_27, %c0_28, %c0_29] : memref<2x1x1xf32, #tpu.memory_space<vmem>>, vector<1x1x1xf32>
    %42 = vector.shape_cast %41 : vector<1x1x1xf32> to vector<1x1xf32>
    %43 = vector.broadcast %42 : vector<1x1xf32> to vector<8x1xf32>
    %44 = arith.addf %40, %43 : vector<8x1xf32>
    %cst_30 = arith.constant 1.000000e+01 : f32
    %45 = vector.broadcast %cst_30 : f32 to vector<8x1xf32>
    %46 = arith.mulf %44, %45 : vector<8x1xf32>
    %cst_31 = arith.constant dense<0xFF800000> : vector<1xf32>
    %47 = vector.multi_reduction <maximumf>, %46, %cst_31 [0] : vector<8x1xf32> to vector<1xf32>
    %48 = vector.shape_cast %47 : vector<1xf32> to vector<1x1xf32>
    %49 = vector.broadcast %48 : vector<1x1xf32> to vector<8x1xf32>
    %50 = arith.subf %46, %49 : vector<8x1xf32>
    %51 = math.exp %50 : vector<8x1xf32>
    %cst_32 = arith.constant dense<0.000000e+00> : vector<1xf32>
    %52 = vector.multi_reduction <add>, %51, %cst_32 [0] : vector<8x1xf32> to vector<1xf32>
    %53 = vector.shape_cast %52 : vector<1xf32> to vector<1x1xf32>
    %54 = vector.broadcast %53 : vector<1x1xf32> to vector<8x1xf32>
    %55 = arith.divf %51, %54 : vector<8x1xf32>
    %56 = arith.mulf %55, %3 : vector<8x1xf32>
    %cst_33 = arith.constant dense<0.000000e+00> : vector<1xf32>
    %57 = vector.multi_reduction <add>, %56, %cst_33 [0] : vector<8x1xf32> to vector<1xf32>
    %58 = vector.shape_cast %57 : vector<1xf32> to vector<1x1xf32>
    %cst_34 = arith.constant 9.99999993E-9 : f32
    %59 = vector.broadcast %cst_34 : f32 to vector<1x1xf32>
    %60 = arith.addf %58, %59 : vector<1x1xf32>
    %61 = vector.broadcast %60 : vector<1x1xf32> to vector<8x1xf32>
    %62 = arith.divf %56, %61 : vector<8x1xf32>
    %63 = vector.broadcast %62 : vector<8x1xf32> to vector<8x64xf32>
    %64 = arith.mulf %63, %1 : vector<8x64xf32>
    %cst_35 = arith.constant dense<0.000000e+00> : vector<64xf32>
    %65 = vector.multi_reduction <add>, %64, %cst_35 [0] : vector<8x64xf32> to vector<64xf32>
    %66 = vector.shape_cast %65 : vector<64xf32> to vector<1x64xf32>
    %67 = arith.truncf %66 : vector<1x64xf32> to vector<1x64xbf16>
    %c0_36 = arith.constant 0 : index
    %c0_37 = arith.constant 0 : index
    %c0_38 = arith.constant 0 : index
    %68 = vector.load %arg9[%c0_36, %c0_37, %c0_38] : memref<2x64x128xbf16, #tpu.memory_space<vmem>>, vector<1x64x128xbf16>
    %69 = vector.shape_cast %68 : vector<1x64x128xbf16> to vector<64x128xbf16>
    %cst_39 = arith.constant dense<0.000000e+00> : vector<1x128xf32>
    %70 = tpu.matmul %67, %69, %cst_39 {dimension_numbers = #tpu.dot_dimension_numbers<[1], [0], [0], [1], [0, 0, 1, 1], [], []>} : vector<1x64xbf16>, vector<64x128xbf16>, vector<1x128xf32> -> vector<1x128xf32>
    %c0_40 = arith.constant 0 : index
    %c0_41 = arith.constant 0 : index
    %c0_42 = arith.constant 0 : index
    %71 = vector.load %arg10[%c0_40, %c0_41, %c0_42] : memref<2x1x128xf32, #tpu.memory_space<vmem>>, vector<1x1x128xf32>
    %72 = vector.shape_cast %71 : vector<1x1x128xf32> to vector<1x128xf32>
    %73 = arith.addf %70, %72 : vector<1x128xf32>
    %74 = math.tanh %73 : vector<1x128xf32>
    %75 = vector.extract_strided_slice %74 {offsets = [0, 0], sizes = [1, 64], strides = [1, 1]} : vector<1x128xf32> to vector<1x64xf32>
    %76 = vector.extract_strided_slice %74 {offsets = [0, 64], sizes = [1, 64], strides = [1, 1]} : vector<1x128xf32> to vector<1x64xf32>
    %77 = arith.truncf %19 : vector<64x64xf32> to vector<64x64xbf16>
    %c0_43 = arith.constant 0 : index
    %c0_44 = arith.constant 0 : index
    %c0_45 = arith.constant 0 : index
    %78 = vector.load %arg11[%c0_43, %c0_44, %c0_45] : memref<2x64x64xbf16, #tpu.memory_space<vmem>>, vector<1x64x64xbf16>
    %79 = vector.shape_cast %78 : vector<1x64x64xbf16> to vector<64x64xbf16>
    %cst_46 = arith.constant dense<0.000000e+00> : vector<64x64xf32>
    %80 = tpu.matmul %77, %79, %cst_46 {dimension_numbers = #tpu.dot_dimension_numbers<[1], [0], [0], [1], [0, 0, 1, 1], [], []>} : vector<64x64xbf16>, vector<64x64xbf16>, vector<64x64xf32> -> vector<64x64xf32>
    %c0_47 = arith.constant 0 : index
    %c0_48 = arith.constant 0 : index
    %c0_49 = arith.constant 0 : index
    %81 = vector.load %arg12[%c0_47, %c0_48, %c0_49] : memref<2x64x64xf32, #tpu.memory_space<vmem>>, vector<1x64x64xf32>
    %82 = vector.shape_cast %81 : vector<1x64x64xf32> to vector<64x64xf32>
    %83 = arith.addf %80, %82 : vector<64x64xf32>
    %cst_50 = arith.constant dense<0.000000e+00> : vector<64xf32>
    %84 = vector.multi_reduction <add>, %83, %cst_50 [0] : vector<64x64xf32> to vector<64xf32>
    %85 = vector.shape_cast %84 : vector<64xf32> to vector<1x64xf32>
    %cst_51 = arith.constant 6.400000e+01 : f32
    %86 = vector.broadcast %cst_51 : f32 to vector<1x64xf32>
    %87 = arith.divf %85, %86 : vector<1x64xf32>
    %88 = vector.broadcast %87 : vector<1x64xf32> to vector<64x64xf32>
    %89 = arith.subf %83, %88 : vector<64x64xf32>
    %90 = arith.mulf %89, %89 : vector<64x64xf32>
    %cst_52 = arith.constant dense<0.000000e+00> : vector<64xf32>
    %91 = vector.multi_reduction <add>, %90, %cst_52 [0] : vector<64x64xf32> to vector<64xf32>
    %92 = vector.shape_cast %91 : vector<64xf32> to vector<1x64xf32>
    %cst_53 = arith.constant 6.400000e+01 : f32
    %93 = vector.broadcast %cst_53 : f32 to vector<1x64xf32>
    %94 = arith.divf %92, %93 : vector<1x64xf32>
    %95 = vector.broadcast %87 : vector<1x64xf32> to vector<64x64xf32>
    %96 = arith.subf %83, %95 : vector<64x64xf32>
    %cst_54 = arith.constant 9.99999974E-6 : f32
    %97 = vector.broadcast %cst_54 : f32 to vector<1x64xf32>
    %98 = arith.addf %94, %97 : vector<1x64xf32>
    %99 = math.rsqrt %98 : vector<1x64xf32>
    %100 = vector.broadcast %99 : vector<1x64xf32> to vector<64x64xf32>
    %101 = arith.mulf %96, %100 : vector<64x64xf32>
    %102 = vector.broadcast %75 : vector<1x64xf32> to vector<64x64xf32>
    %103 = arith.mulf %102, %101 : vector<64x64xf32>
    %104 = vector.broadcast %76 : vector<1x64xf32> to vector<64x64xf32>
    %105 = arith.addf %103, %104 : vector<64x64xf32>
    %cst_55 = arith.constant 0.000000e+00 : f32
    %106 = vector.broadcast %cst_55 : f32 to vector<64x64xf32>
    %107 = arith.maximumf %105, %106 : vector<64x64xf32>
    %108 = arith.addf %107, %19 : vector<64x64xf32>
    %109 = tpu.iota {dimensions = array<i32: 0>} : vector<64x1xi32>
    %110 = arith.sitofp %109 : vector<64x1xi32> to vector<64x1xf32>
    %cst_56 = arith.constant 5.000000e-01 : f32
    %111 = vector.broadcast %cst_56 : f32 to vector<64x1xf32>
    %112 = arith.addf %110, %111 : vector<64x1xf32>
    %cst_57 = arith.constant 1.250000e-01 : f32
    %113 = vector.broadcast %cst_57 : f32 to vector<64x1xf32>
    %114 = arith.mulf %112, %113 : vector<64x1xf32>
    %115 = math.floor %114 : vector<64x1xf32>
    %cst_58 = arith.constant 8.000000e+00 : f32
    %116 = vector.broadcast %cst_58 : f32 to vector<64x1xf32>
    %117 = arith.mulf %115, %116 : vector<64x1xf32>
    %118 = arith.subf %110, %117 : vector<64x1xf32>
    %c9_i32 = arith.constant 9 : i32
    %119 = tpu.dynamic_rotate %108 by %c9_i32 dim 0 : vector<64x64xf32>, i32 -> vector<64x64xf32>
    %cst_59 = arith.constant -1.000000e+00 : f32
    %120 = vector.broadcast %cst_59 : f32 to vector<64x1xf32>
    %121 = arith.addf %115, %120 : vector<64x1xf32>
    %cst_60 = arith.constant 0.000000e+00 : f32
    %122 = vector.broadcast %cst_60 : f32 to vector<64x1xf32>
    %123 = arith.cmpf oge, %121, %122 : vector<64x1xf32>
    %cst_61 = arith.constant -1.000000e+00 : f32
    %124 = vector.broadcast %cst_61 : f32 to vector<64x1xf32>
    %125 = arith.addf %115, %124 : vector<64x1xf32>
    %cst_62 = arith.constant 8.000000e+00 : f32
    %126 = vector.broadcast %cst_62 : f32 to vector<64x1xf32>
    %127 = arith.cmpf olt, %125, %126 : vector<64x1xf32>
    %128 = arith.andi %123, %127 : vector<64x1xi1>
    %cst_63 = arith.constant -1.000000e+00 : f32
    %129 = vector.broadcast %cst_63 : f32 to vector<64x1xf32>
    %130 = arith.addf %118, %129 : vector<64x1xf32>
    %cst_64 = arith.constant 0.000000e+00 : f32
    %131 = vector.broadcast %cst_64 : f32 to vector<64x1xf32>
    %132 = arith.cmpf oge, %130, %131 : vector<64x1xf32>
    %133 = arith.andi %128, %132 : vector<64x1xi1>
    %cst_65 = arith.constant -1.000000e+00 : f32
    %134 = vector.broadcast %cst_65 : f32 to vector<64x1xf32>
    %135 = arith.addf %118, %134 : vector<64x1xf32>
    %cst_66 = arith.constant 8.000000e+00 : f32
    %136 = vector.broadcast %cst_66 : f32 to vector<64x1xf32>
    %137 = arith.cmpf olt, %135, %136 : vector<64x1xf32>
    %138 = arith.andi %133, %137 : vector<64x1xi1>
    %cst_67 = arith.constant 0.000000e+00 : f32
    %139 = vector.shape_cast %138 : vector<64x1xi1> to vector<64x1xi1>
    %140 = vector.broadcast %139 : vector<64x1xi1> to vector<64x64xi1>
    %141 = vector.broadcast %cst_67 : f32 to vector<64x64xf32>
    %142 = arith.select %140, %119, %141 : vector<64x64xi1>, vector<64x64xf32>
    %c8_i32 = arith.constant 8 : i32
    %143 = tpu.dynamic_rotate %108 by %c8_i32 dim 0 : vector<64x64xf32>, i32 -> vector<64x64xf32>
    %cst_68 = arith.constant -1.000000e+00 : f32
    %144 = vector.broadcast %cst_68 : f32 to vector<64x1xf32>
    %145 = arith.addf %115, %144 : vector<64x1xf32>
    %cst_69 = arith.constant 0.000000e+00 : f32
    %146 = vector.broadcast %cst_69 : f32 to vector<64x1xf32>
    %147 = arith.cmpf oge, %145, %146 : vector<64x1xf32>
    %cst_70 = arith.constant -1.000000e+00 : f32
    %148 = vector.broadcast %cst_70 : f32 to vector<64x1xf32>
    %149 = arith.addf %115, %148 : vector<64x1xf32>
    %cst_71 = arith.constant 8.000000e+00 : f32
    %150 = vector.broadcast %cst_71 : f32 to vector<64x1xf32>
    %151 = arith.cmpf olt, %149, %150 : vector<64x1xf32>
    %152 = arith.andi %147, %151 : vector<64x1xi1>
    %cst_72 = arith.constant 0.000000e+00 : f32
    %153 = vector.broadcast %cst_72 : f32 to vector<64x1xf32>
    %154 = arith.addf %118, %153 : vector<64x1xf32>
    %cst_73 = arith.constant 0.000000e+00 : f32
    %155 = vector.broadcast %cst_73 : f32 to vector<64x1xf32>
    %156 = arith.cmpf oge, %154, %155 : vector<64x1xf32>
    %157 = arith.andi %152, %156 : vector<64x1xi1>
    %cst_74 = arith.constant 0.000000e+00 : f32
    %158 = vector.broadcast %cst_74 : f32 to vector<64x1xf32>
    %159 = arith.addf %118, %158 : vector<64x1xf32>
    %cst_75 = arith.constant 8.000000e+00 : f32
    %160 = vector.broadcast %cst_75 : f32 to vector<64x1xf32>
    %161 = arith.cmpf olt, %159, %160 : vector<64x1xf32>
    %162 = arith.andi %157, %161 : vector<64x1xi1>
    %cst_76 = arith.constant 0.000000e+00 : f32
    %163 = vector.shape_cast %162 : vector<64x1xi1> to vector<64x1xi1>
    %164 = vector.broadcast %163 : vector<64x1xi1> to vector<64x64xi1>
    %165 = vector.broadcast %cst_76 : f32 to vector<64x64xf32>
    %166 = arith.select %164, %143, %165 : vector<64x64xi1>, vector<64x64xf32>
    %c7_i32 = arith.constant 7 : i32
    %167 = tpu.dynamic_rotate %108 by %c7_i32 dim 0 : vector<64x64xf32>, i32 -> vector<64x64xf32>
    %cst_77 = arith.constant -1.000000e+00 : f32
    %168 = vector.broadcast %cst_77 : f32 to vector<64x1xf32>
    %169 = arith.addf %115, %168 : vector<64x1xf32>
    %cst_78 = arith.constant 0.000000e+00 : f32
    %170 = vector.broadcast %cst_78 : f32 to vector<64x1xf32>
    %171 = arith.cmpf oge, %169, %170 : vector<64x1xf32>
    %cst_79 = arith.constant -1.000000e+00 : f32
    %172 = vector.broadcast %cst_79 : f32 to vector<64x1xf32>
    %173 = arith.addf %115, %172 : vector<64x1xf32>
    %cst_80 = arith.constant 8.000000e+00 : f32
    %174 = vector.broadcast %cst_80 : f32 to vector<64x1xf32>
    %175 = arith.cmpf olt, %173, %174 : vector<64x1xf32>
    %176 = arith.andi %171, %175 : vector<64x1xi1>
    %cst_81 = arith.constant 1.000000e+00 : f32
    %177 = vector.broadcast %cst_81 : f32 to vector<64x1xf32>
    %178 = arith.addf %118, %177 : vector<64x1xf32>
    %cst_82 = arith.constant 0.000000e+00 : f32
    %179 = vector.broadcast %cst_82 : f32 to vector<64x1xf32>
    %180 = arith.cmpf oge, %178, %179 : vector<64x1xf32>
    %181 = arith.andi %176, %180 : vector<64x1xi1>
    %cst_83 = arith.constant 1.000000e+00 : f32
    %182 = vector.broadcast %cst_83 : f32 to vector<64x1xf32>
    %183 = arith.addf %118, %182 : vector<64x1xf32>
    %cst_84 = arith.constant 8.000000e+00 : f32
    %184 = vector.broadcast %cst_84 : f32 to vector<64x1xf32>
    %185 = arith.cmpf olt, %183, %184 : vector<64x1xf32>
    %186 = arith.andi %181, %185 : vector<64x1xi1>
    %cst_85 = arith.constant 0.000000e+00 : f32
    %187 = vector.shape_cast %186 : vector<64x1xi1> to vector<64x1xi1>
    %188 = vector.broadcast %187 : vector<64x1xi1> to vector<64x64xi1>
    %189 = vector.broadcast %cst_85 : f32 to vector<64x64xf32>
    %190 = arith.select %188, %167, %189 : vector<64x64xi1>, vector<64x64xf32>
    %c1_i32 = arith.constant 1 : i32
    %191 = tpu.dynamic_rotate %108 by %c1_i32 dim 0 : vector<64x64xf32>, i32 -> vector<64x64xf32>
    %cst_86 = arith.constant 0.000000e+00 : f32
    %192 = vector.broadcast %cst_86 : f32 to vector<64x1xf32>
    %193 = arith.addf %115, %192 : vector<64x1xf32>
    %cst_87 = arith.constant 0.000000e+00 : f32
    %194 = vector.broadcast %cst_87 : f32 to vector<64x1xf32>
    %195 = arith.cmpf oge, %193, %194 : vector<64x1xf32>
    %cst_88 = arith.constant 0.000000e+00 : f32
    %196 = vector.broadcast %cst_88 : f32 to vector<64x1xf32>
    %197 = arith.addf %115, %196 : vector<64x1xf32>
    %cst_89 = arith.constant 8.000000e+00 : f32
    %198 = vector.broadcast %cst_89 : f32 to vector<64x1xf32>
    %199 = arith.cmpf olt, %197, %198 : vector<64x1xf32>
    %200 = arith.andi %195, %199 : vector<64x1xi1>
    %cst_90 = arith.constant -1.000000e+00 : f32
    %201 = vector.broadcast %cst_90 : f32 to vector<64x1xf32>
    %202 = arith.addf %118, %201 : vector<64x1xf32>
    %cst_91 = arith.constant 0.000000e+00 : f32
    %203 = vector.broadcast %cst_91 : f32 to vector<64x1xf32>
    %204 = arith.cmpf oge, %202, %203 : vector<64x1xf32>
    %205 = arith.andi %200, %204 : vector<64x1xi1>
    %cst_92 = arith.constant -1.000000e+00 : f32
    %206 = vector.broadcast %cst_92 : f32 to vector<64x1xf32>
    %207 = arith.addf %118, %206 : vector<64x1xf32>
    %cst_93 = arith.constant 8.000000e+00 : f32
    %208 = vector.broadcast %cst_93 : f32 to vector<64x1xf32>
    %209 = arith.cmpf olt, %207, %208 : vector<64x1xf32>
    %210 = arith.andi %205, %209 : vector<64x1xi1>
    %cst_94 = arith.constant 0.000000e+00 : f32
    %211 = vector.shape_cast %210 : vector<64x1xi1> to vector<64x1xi1>
    %212 = vector.broadcast %211 : vector<64x1xi1> to vector<64x64xi1>
    %213 = vector.broadcast %cst_94 : f32 to vector<64x64xf32>
    %214 = arith.select %212, %191, %213 : vector<64x64xi1>, vector<64x64xf32>
    %c63_i32 = arith.constant 63 : i32
    %215 = tpu.dynamic_rotate %108 by %c63_i32 dim 0 : vector<64x64xf32>, i32 -> vector<64x64xf32>
    %cst_95 = arith.constant 0.000000e+00 : f32
    %216 = vector.broadcast %cst_95 : f32 to vector<64x1xf32>
    %217 = arith.addf %115, %216 : vector<64x1xf32>
    %cst_96 = arith.constant 0.000000e+00 : f32
    %218 = vector.broadcast %cst_96 : f32 to vector<64x1xf32>
    %219 = arith.cmpf oge, %217, %218 : vector<64x1xf32>
    %cst_97 = arith.constant 0.000000e+00 : f32
    %220 = vector.broadcast %cst_97 : f32 to vector<64x1xf32>
    %221 = arith.addf %115, %220 : vector<64x1xf32>
    %cst_98 = arith.constant 8.000000e+00 : f32
    %222 = vector.broadcast %cst_98 : f32 to vector<64x1xf32>
    %223 = arith.cmpf olt, %221, %222 : vector<64x1xf32>
    %224 = arith.andi %219, %223 : vector<64x1xi1>
    %cst_99 = arith.constant 1.000000e+00 : f32
    %225 = vector.broadcast %cst_99 : f32 to vector<64x1xf32>
    %226 = arith.addf %118, %225 : vector<64x1xf32>
    %cst_100 = arith.constant 0.000000e+00 : f32
    %227 = vector.broadcast %cst_100 : f32 to vector<64x1xf32>
    %228 = arith.cmpf oge, %226, %227 : vector<64x1xf32>
    %229 = arith.andi %224, %228 : vector<64x1xi1>
    %cst_101 = arith.constant 1.000000e+00 : f32
    %230 = vector.broadcast %cst_101 : f32 to vector<64x1xf32>
    %231 = arith.addf %118, %230 : vector<64x1xf32>
    %cst_102 = arith.constant 8.000000e+00 : f32
    %232 = vector.broadcast %cst_102 : f32 to vector<64x1xf32>
    %233 = arith.cmpf olt, %231, %232 : vector<64x1xf32>
    %234 = arith.andi %229, %233 : vector<64x1xi1>
    %cst_103 = arith.constant 0.000000e+00 : f32
    %235 = vector.shape_cast %234 : vector<64x1xi1> to vector<64x1xi1>
    %236 = vector.broadcast %235 : vector<64x1xi1> to vector<64x64xi1>
    %237 = vector.broadcast %cst_103 : f32 to vector<64x64xf32>
    %238 = arith.select %236, %215, %237 : vector<64x64xi1>, vector<64x64xf32>
    %c57_i32 = arith.constant 57 : i32
    %239 = tpu.dynamic_rotate %108 by %c57_i32 dim 0 : vector<64x64xf32>, i32 -> vector<64x64xf32>
    %cst_104 = arith.constant 1.000000e+00 : f32
    %240 = vector.broadcast %cst_104 : f32 to vector<64x1xf32>
    %241 = arith.addf %115, %240 : vector<64x1xf32>
    %cst_105 = arith.constant 0.000000e+00 : f32
    %242 = vector.broadcast %cst_105 : f32 to vector<64x1xf32>
    %243 = arith.cmpf oge, %241, %242 : vector<64x1xf32>
    %cst_106 = arith.constant 1.000000e+00 : f32
    %244 = vector.broadcast %cst_106 : f32 to vector<64x1xf32>
    %245 = arith.addf %115, %244 : vector<64x1xf32>
    %cst_107 = arith.constant 8.000000e+00 : f32
    %246 = vector.broadcast %cst_107 : f32 to vector<64x1xf32>
    %247 = arith.cmpf olt, %245, %246 : vector<64x1xf32>
    %248 = arith.andi %243, %247 : vector<64x1xi1>
    %cst_108 = arith.constant -1.000000e+00 : f32
    %249 = vector.broadcast %cst_108 : f32 to vector<64x1xf32>
    %250 = arith.addf %118, %249 : vector<64x1xf32>
    %cst_109 = arith.constant 0.000000e+00 : f32
    %251 = vector.broadcast %cst_109 : f32 to vector<64x1xf32>
    %252 = arith.cmpf oge, %250, %251 : vector<64x1xf32>
    %253 = arith.andi %248, %252 : vector<64x1xi1>
    %cst_110 = arith.constant -1.000000e+00 : f32
    %254 = vector.broadcast %cst_110 : f32 to vector<64x1xf32>
    %255 = arith.addf %118, %254 : vector<64x1xf32>
    %cst_111 = arith.constant 8.000000e+00 : f32
    %256 = vector.broadcast %cst_111 : f32 to vector<64x1xf32>
    %257 = arith.cmpf olt, %255, %256 : vector<64x1xf32>
    %258 = arith.andi %253, %257 : vector<64x1xi1>
    %cst_112 = arith.constant 0.000000e+00 : f32
    %259 = vector.shape_cast %258 : vector<64x1xi1> to vector<64x1xi1>
    %260 = vector.broadcast %259 : vector<64x1xi1> to vector<64x64xi1>
    %261 = vector.broadcast %cst_112 : f32 to vector<64x64xf32>
    %262 = arith.select %260, %239, %261 : vector<64x64xi1>, vector<64x64xf32>
    %c56_i32 = arith.constant 56 : i32
    %263 = tpu.dynamic_rotate %108 by %c56_i32 dim 0 : vector<64x64xf32>, i32 -> vector<64x64xf32>
    %cst_113 = arith.constant 1.000000e+00 : f32
    %264 = vector.broadcast %cst_113 : f32 to vector<64x1xf32>
    %265 = arith.addf %115, %264 : vector<64x1xf32>
    %cst_114 = arith.constant 0.000000e+00 : f32
    %266 = vector.broadcast %cst_114 : f32 to vector<64x1xf32>
    %267 = arith.cmpf oge, %265, %266 : vector<64x1xf32>
    %cst_115 = arith.constant 1.000000e+00 : f32
    %268 = vector.broadcast %cst_115 : f32 to vector<64x1xf32>
    %269 = arith.addf %115, %268 : vector<64x1xf32>
    %cst_116 = arith.constant 8.000000e+00 : f32
    %270 = vector.broadcast %cst_116 : f32 to vector<64x1xf32>
    %271 = arith.cmpf olt, %269, %270 : vector<64x1xf32>
    %272 = arith.andi %267, %271 : vector<64x1xi1>
    %cst_117 = arith.constant 0.000000e+00 : f32
    %273 = vector.broadcast %cst_117 : f32 to vector<64x1xf32>
    %274 = arith.addf %118, %273 : vector<64x1xf32>
    %cst_118 = arith.constant 0.000000e+00 : f32
    %275 = vector.broadcast %cst_118 : f32 to vector<64x1xf32>
    %276 = arith.cmpf oge, %274, %275 : vector<64x1xf32>
    %277 = arith.andi %272, %276 : vector<64x1xi1>
    %cst_119 = arith.constant 0.000000e+00 : f32
    %278 = vector.broadcast %cst_119 : f32 to vector<64x1xf32>
    %279 = arith.addf %118, %278 : vector<64x1xf32>
    %cst_120 = arith.constant 8.000000e+00 : f32
    %280 = vector.broadcast %cst_120 : f32 to vector<64x1xf32>
    %281 = arith.cmpf olt, %279, %280 : vector<64x1xf32>
    %282 = arith.andi %277, %281 : vector<64x1xi1>
    %cst_121 = arith.constant 0.000000e+00 : f32
    %283 = vector.shape_cast %282 : vector<64x1xi1> to vector<64x1xi1>
    %284 = vector.broadcast %283 : vector<64x1xi1> to vector<64x64xi1>
    %285 = vector.broadcast %cst_121 : f32 to vector<64x64xf32>
    %286 = arith.select %284, %263, %285 : vector<64x64xi1>, vector<64x64xf32>
    %c55_i32 = arith.constant 55 : i32
    %287 = tpu.dynamic_rotate %108 by %c55_i32 dim 0 : vector<64x64xf32>, i32 -> vector<64x64xf32>
    %cst_122 = arith.constant 1.000000e+00 : f32
    %288 = vector.broadcast %cst_122 : f32 to vector<64x1xf32>
    %289 = arith.addf %115, %288 : vector<64x1xf32>
    %cst_123 = arith.constant 0.000000e+00 : f32
    %290 = vector.broadcast %cst_123 : f32 to vector<64x1xf32>
    %291 = arith.cmpf oge, %289, %290 : vector<64x1xf32>
    %cst_124 = arith.constant 1.000000e+00 : f32
    %292 = vector.broadcast %cst_124 : f32 to vector<64x1xf32>
    %293 = arith.addf %115, %292 : vector<64x1xf32>
    %cst_125 = arith.constant 8.000000e+00 : f32
    %294 = vector.broadcast %cst_125 : f32 to vector<64x1xf32>
    %295 = arith.cmpf olt, %293, %294 : vector<64x1xf32>
    %296 = arith.andi %291, %295 : vector<64x1xi1>
    %cst_126 = arith.constant 1.000000e+00 : f32
    %297 = vector.broadcast %cst_126 : f32 to vector<64x1xf32>
    %298 = arith.addf %118, %297 : vector<64x1xf32>
    %cst_127 = arith.constant 0.000000e+00 : f32
    %299 = vector.broadcast %cst_127 : f32 to vector<64x1xf32>
    %300 = arith.cmpf oge, %298, %299 : vector<64x1xf32>
    %301 = arith.andi %296, %300 : vector<64x1xi1>
    %cst_128 = arith.constant 1.000000e+00 : f32
    %302 = vector.broadcast %cst_128 : f32 to vector<64x1xf32>
    %303 = arith.addf %118, %302 : vector<64x1xf32>
    %cst_129 = arith.constant 8.000000e+00 : f32
    %304 = vector.broadcast %cst_129 : f32 to vector<64x1xf32>
    %305 = arith.cmpf olt, %303, %304 : vector<64x1xf32>
    %306 = arith.andi %301, %305 : vector<64x1xi1>
    %cst_130 = arith.constant 0.000000e+00 : f32
    %307 = vector.shape_cast %306 : vector<64x1xi1> to vector<64x1xi1>
    %308 = vector.broadcast %307 : vector<64x1xi1> to vector<64x64xi1>
    %309 = vector.broadcast %cst_130 : f32 to vector<64x64xf32>
    %310 = arith.select %308, %287, %309 : vector<64x64xi1>, vector<64x64xf32>
    %311 = tpu.concatenate %142, %166, %190, %214, %108, %238, %262, %286, %310 in 1 : vector<64x64xf32>, vector<64x64xf32>, vector<64x64xf32>, vector<64x64xf32>, vector<64x64xf32>, vector<64x64xf32>, vector<64x64xf32>, vector<64x64xf32>, vector<64x64xf32> -> vector<64x576xf32>
    %312 = arith.truncf %311 : vector<64x576xf32> to vector<64x576xbf16>
    %c0_131 = arith.constant 0 : index
    %c0_132 = arith.constant 0 : index
    %313 = vector.load %arg13[%c0_131, %c0_132] : memref<576x64xbf16, #tpu.memory_space<vmem>>, vector<576x64xbf16>
    %cst_133 = arith.constant dense<0.000000e+00> : vector<64x64xf32>
    %314 = tpu.matmul %312, %313, %cst_133 {dimension_numbers = #tpu.dot_dimension_numbers<[1], [0], [0], [1], [0, 0, 1, 1], [], []>} : vector<64x576xbf16>, vector<576x64xbf16>, vector<64x64xf32> -> vector<64x64xf32>
    %cst_134 = arith.constant 0.999994993 : f32
    %315 = vector.broadcast %cst_134 : f32 to vector<64x64xf32>
    %316 = arith.mulf %314, %315 : vector<64x64xf32>
    %cst_135 = arith.constant 0.000000e+00 : f32
    %317 = vector.broadcast %cst_135 : f32 to vector<64x64xf32>
    %318 = arith.maximumf %316, %317 : vector<64x64xf32>
    %cst_136 = arith.constant 0.000000e+00 : f32
    %cst_137 = arith.constant 1.000000e+00 : f32
    %319 = vector.broadcast %cst_136 : f32 to vector<8x1xf32>
    %320 = arith.maximumf %319, %62 : vector<8x1xf32>
    %321 = vector.broadcast %cst_137 : f32 to vector<8x1xf32>
    %322 = arith.minimumf %321, %320 : vector<8x1xf32>
    %cst_138 = arith.constant 1.000000e+00 : f32
    %323 = vector.broadcast %cst_138 : f32 to vector<8x1xf32>
    %324 = arith.subf %323, %322 : vector<8x1xf32>
    %cst_139 = arith.constant dense<0.000000e+00> : vector<64xf32>
    %325 = vector.multi_reduction <add>, %318, %cst_139 [0] : vector<64x64xf32> to vector<64xf32>
    %326 = vector.shape_cast %325 : vector<64xf32> to vector<1x64xf32>
    %cst_140 = arith.constant 6.400000e+01 : f32
    %327 = vector.broadcast %cst_140 : f32 to vector<1x64xf32>
    %328 = arith.divf %326, %327 : vector<1x64xf32>
    %329 = vector.broadcast %328 : vector<1x64xf32> to vector<8x64xf32>
    %330 = arith.mulf %329, %1 : vector<8x64xf32>
    %331 = vector.broadcast %324 : vector<8x1xf32> to vector<8x64xf32>
    %332 = arith.mulf %330, %331 : vector<8x64xf32>
    %333 = arith.truncf %332 : vector<8x64xf32> to vector<8x64xbf16>
    %c1 = arith.constant 1 : index
    %c0_141 = arith.constant 0 : index
    %c0_142 = arith.constant 0 : index
    %334 = vector.load %arg5[%c1, %c0_141, %c0_142] : memref<2x64x32xbf16, #tpu.memory_space<vmem>>, vector<1x64x32xbf16>
    %335 = vector.shape_cast %334 : vector<1x64x32xbf16> to vector<64x32xbf16>
    %cst_143 = arith.constant dense<0.000000e+00> : vector<8x32xf32>
    %336 = tpu.matmul %333, %335, %cst_143 {dimension_numbers = #tpu.dot_dimension_numbers<[1], [0], [0], [1], [0, 0, 1, 1], [], []>} : vector<8x64xbf16>, vector<64x32xbf16>, vector<8x32xf32> -> vector<8x32xf32>
    %c1_144 = arith.constant 1 : index
    %c0_145 = arith.constant 0 : index
    %c0_146 = arith.constant 0 : index
    %337 = vector.load %arg6[%c1_144, %c0_145, %c0_146] : memref<2x1x32xf32, #tpu.memory_space<vmem>>, vector<1x1x32xf32>
    %338 = vector.shape_cast %337 : vector<1x1x32xf32> to vector<1x32xf32>
    %339 = vector.broadcast %338 : vector<1x32xf32> to vector<8x32xf32>
    %340 = arith.addf %336, %339 : vector<8x32xf32>
    %341 = math.tanh %340 : vector<8x32xf32>
    %c1_147 = arith.constant 1 : index
    %c0_148 = arith.constant 0 : index
    %c0_149 = arith.constant 0 : index
    %342 = vector.load %arg7[%c1_147, %c0_148, %c0_149] : memref<2x1x32xf32, #tpu.memory_space<vmem>>, vector<1x1x32xf32>
    %343 = vector.shape_cast %342 : vector<1x1x32xf32> to vector<1x32xf32>
    %344 = vector.broadcast %343 : vector<1x32xf32> to vector<8x32xf32>
    %345 = arith.mulf %341, %344 : vector<8x32xf32>
    %cst_150 = arith.constant dense<0.000000e+00> : vector<8xf32>
    %346 = vector.multi_reduction <add>, %345, %cst_150 [1] : vector<8x32xf32> to vector<8xf32>
    %347 = vector.shape_cast %346 : vector<8xf32> to vector<8x1xf32>
    %c1_151 = arith.constant 1 : index
    %c0_152 = arith.constant 0 : index
    %c0_153 = arith.constant 0 : index
    %348 = vector.load %arg8[%c1_151, %c0_152, %c0_153] : memref<2x1x1xf32, #tpu.memory_space<vmem>>, vector<1x1x1xf32>
    %349 = vector.shape_cast %348 : vector<1x1x1xf32> to vector<1x1xf32>
    %350 = vector.broadcast %349 : vector<1x1xf32> to vector<8x1xf32>
    %351 = arith.addf %347, %350 : vector<8x1xf32>
    %cst_154 = arith.constant 1.000000e+01 : f32
    %352 = vector.broadcast %cst_154 : f32 to vector<8x1xf32>
    %353 = arith.mulf %351, %352 : vector<8x1xf32>
    %cst_155 = arith.constant dense<0xFF800000> : vector<1xf32>
    %354 = vector.multi_reduction <maximumf>, %353, %cst_155 [0] : vector<8x1xf32> to vector<1xf32>
    %355 = vector.shape_cast %354 : vector<1xf32> to vector<1x1xf32>
    %356 = vector.broadcast %355 : vector<1x1xf32> to vector<8x1xf32>
    %357 = arith.subf %353, %356 : vector<8x1xf32>
    %358 = math.exp %357 : vector<8x1xf32>
    %cst_156 = arith.constant dense<0.000000e+00> : vector<1xf32>
    %359 = vector.multi_reduction <add>, %358, %cst_156 [0] : vector<8x1xf32> to vector<1xf32>
    %360 = vector.shape_cast %359 : vector<1xf32> to vector<1x1xf32>
    %361 = vector.broadcast %360 : vector<1x1xf32> to vector<8x1xf32>
    %362 = arith.divf %358, %361 : vector<8x1xf32>
    %363 = arith.mulf %362, %3 : vector<8x1xf32>
    %cst_157 = arith.constant dense<0.000000e+00> : vector<1xf32>
    %364 = vector.multi_reduction <add>, %363, %cst_157 [0] : vector<8x1xf32> to vector<1xf32>
    %365 = vector.shape_cast %364 : vector<1xf32> to vector<1x1xf32>
    %cst_158 = arith.constant 9.99999993E-9 : f32
    %366 = vector.broadcast %cst_158 : f32 to vector<1x1xf32>
    %367 = arith.addf %365, %366 : vector<1x1xf32>
    %368 = vector.broadcast %367 : vector<1x1xf32> to vector<8x1xf32>
    %369 = arith.divf %363, %368 : vector<8x1xf32>
    %370 = vector.broadcast %369 : vector<8x1xf32> to vector<8x64xf32>
    %371 = arith.mulf %370, %1 : vector<8x64xf32>
    %cst_159 = arith.constant dense<0.000000e+00> : vector<64xf32>
    %372 = vector.multi_reduction <add>, %371, %cst_159 [0] : vector<8x64xf32> to vector<64xf32>
    %373 = vector.shape_cast %372 : vector<64xf32> to vector<1x64xf32>
    %374 = arith.truncf %373 : vector<1x64xf32> to vector<1x64xbf16>
    %c1_160 = arith.constant 1 : index
    %c0_161 = arith.constant 0 : index
    %c0_162 = arith.constant 0 : index
    %375 = vector.load %arg9[%c1_160, %c0_161, %c0_162] : memref<2x64x128xbf16, #tpu.memory_space<vmem>>, vector<1x64x128xbf16>
    %376 = vector.shape_cast %375 : vector<1x64x128xbf16> to vector<64x128xbf16>
    %cst_163 = arith.constant dense<0.000000e+00> : vector<1x128xf32>
    %377 = tpu.matmul %374, %376, %cst_163 {dimension_numbers = #tpu.dot_dimension_numbers<[1], [0], [0], [1], [0, 0, 1, 1], [], []>} : vector<1x64xbf16>, vector<64x128xbf16>, vector<1x128xf32> -> vector<1x128xf32>
    %c1_164 = arith.constant 1 : index
    %c0_165 = arith.constant 0 : index
    %c0_166 = arith.constant 0 : index
    %378 = vector.load %arg10[%c1_164, %c0_165, %c0_166] : memref<2x1x128xf32, #tpu.memory_space<vmem>>, vector<1x1x128xf32>
    %379 = vector.shape_cast %378 : vector<1x1x128xf32> to vector<1x128xf32>
    %380 = arith.addf %377, %379 : vector<1x128xf32>
    %381 = math.tanh %380 : vector<1x128xf32>
    %382 = vector.extract_strided_slice %381 {offsets = [0, 0], sizes = [1, 64], strides = [1, 1]} : vector<1x128xf32> to vector<1x64xf32>
    %383 = vector.extract_strided_slice %381 {offsets = [0, 64], sizes = [1, 64], strides = [1, 1]} : vector<1x128xf32> to vector<1x64xf32>
    %384 = arith.truncf %318 : vector<64x64xf32> to vector<64x64xbf16>
    %c1_167 = arith.constant 1 : index
    %c0_168 = arith.constant 0 : index
    %c0_169 = arith.constant 0 : index
    %385 = vector.load %arg11[%c1_167, %c0_168, %c0_169] : memref<2x64x64xbf16, #tpu.memory_space<vmem>>, vector<1x64x64xbf16>
    %386 = vector.shape_cast %385 : vector<1x64x64xbf16> to vector<64x64xbf16>
    %cst_170 = arith.constant dense<0.000000e+00> : vector<64x64xf32>
    %387 = tpu.matmul %384, %386, %cst_170 {dimension_numbers = #tpu.dot_dimension_numbers<[1], [0], [0], [1], [0, 0, 1, 1], [], []>} : vector<64x64xbf16>, vector<64x64xbf16>, vector<64x64xf32> -> vector<64x64xf32>
    %c1_171 = arith.constant 1 : index
    %c0_172 = arith.constant 0 : index
    %c0_173 = arith.constant 0 : index
    %388 = vector.load %arg12[%c1_171, %c0_172, %c0_173] : memref<2x64x64xf32, #tpu.memory_space<vmem>>, vector<1x64x64xf32>
    %389 = vector.shape_cast %388 : vector<1x64x64xf32> to vector<64x64xf32>
    %390 = arith.addf %387, %389 : vector<64x64xf32>
    %cst_174 = arith.constant dense<0.000000e+00> : vector<64xf32>
    %391 = vector.multi_reduction <add>, %390, %cst_174 [0] : vector<64x64xf32> to vector<64xf32>
    %392 = vector.shape_cast %391 : vector<64xf32> to vector<1x64xf32>
    %cst_175 = arith.constant 6.400000e+01 : f32
    %393 = vector.broadcast %cst_175 : f32 to vector<1x64xf32>
    %394 = arith.divf %392, %393 : vector<1x64xf32>
    %395 = vector.broadcast %394 : vector<1x64xf32> to vector<64x64xf32>
    %396 = arith.subf %390, %395 : vector<64x64xf32>
    %397 = arith.mulf %396, %396 : vector<64x64xf32>
    %cst_176 = arith.constant dense<0.000000e+00> : vector<64xf32>
    %398 = vector.multi_reduction <add>, %397, %cst_176 [0] : vector<64x64xf32> to vector<64xf32>
    %399 = vector.shape_cast %398 : vector<64xf32> to vector<1x64xf32>
    %cst_177 = arith.constant 6.400000e+01 : f32
    %400 = vector.broadcast %cst_177 : f32 to vector<1x64xf32>
    %401 = arith.divf %399, %400 : vector<1x64xf32>
    %402 = vector.broadcast %394 : vector<1x64xf32> to vector<64x64xf32>
    %403 = arith.subf %390, %402 : vector<64x64xf32>
    %cst_178 = arith.constant 9.99999974E-6 : f32
    %404 = vector.broadcast %cst_178 : f32 to vector<1x64xf32>
    %405 = arith.addf %401, %404 : vector<1x64xf32>
    %406 = math.rsqrt %405 : vector<1x64xf32>
    %407 = vector.broadcast %406 : vector<1x64xf32> to vector<64x64xf32>
    %408 = arith.mulf %403, %407 : vector<64x64xf32>
    %409 = vector.broadcast %382 : vector<1x64xf32> to vector<64x64xf32>
    %410 = arith.mulf %409, %408 : vector<64x64xf32>
    %411 = vector.broadcast %383 : vector<1x64xf32> to vector<64x64xf32>
    %412 = arith.addf %410, %411 : vector<64x64xf32>
    %cst_179 = arith.constant 0.000000e+00 : f32
    %413 = vector.broadcast %cst_179 : f32 to vector<64x64xf32>
    %414 = arith.maximumf %412, %413 : vector<64x64xf32>
    %415 = arith.addf %414, %318 : vector<64x64xf32>
    %416 = arith.truncf %415 : vector<64x64xf32> to vector<64x64xbf16>
    %c0_180 = arith.constant 0 : index
    %c0_181 = arith.constant 0 : index
    %417 = vector.load %arg14[%c0_180, %c0_181] : memref<64x128xbf16, #tpu.memory_space<vmem>>, vector<64x128xbf16>
    %cst_182 = arith.constant dense<0.000000e+00> : vector<64x128xf32>
    %418 = tpu.matmul %416, %417, %cst_182 {dimension_numbers = #tpu.dot_dimension_numbers<[1], [0], [0], [1], [0, 0, 1, 1], [], []>} : vector<64x64xbf16>, vector<64x128xbf16>, vector<64x128xf32> -> vector<64x128xf32>
    %cst_183 = arith.constant 0.999994993 : f32
    %419 = vector.broadcast %cst_183 : f32 to vector<64x128xf32>
    %420 = arith.mulf %418, %419 : vector<64x128xf32>
    %cst_184 = arith.constant 0.000000e+00 : f32
    %421 = vector.broadcast %cst_184 : f32 to vector<64x128xf32>
    %422 = arith.maximumf %420, %421 : vector<64x128xf32>
    %423 = arith.truncf %422 : vector<64x128xf32> to vector<64x128xbf16>
    %c0_185 = arith.constant 0 : index
    %c0_186 = arith.constant 0 : index
    %424 = vector.load %arg15[%c0_185, %c0_186] : memref<128x128xbf16, #tpu.memory_space<vmem>>, vector<128x128xbf16>
    %cst_187 = arith.constant dense<0.000000e+00> : vector<64x128xf32>
    %425 = tpu.matmul %423, %424, %cst_187 {dimension_numbers = #tpu.dot_dimension_numbers<[1], [0], [0], [1], [0, 0, 1, 1], [], []>} : vector<64x128xbf16>, vector<128x128xbf16>, vector<64x128xf32> -> vector<64x128xf32>
    %c0_188 = arith.constant 0 : index
    %c0_189 = arith.constant 0 : index
    %426 = vector.load %arg16[%c0_188, %c0_189] : memref<1x128xf32, #tpu.memory_space<vmem>>, vector<1x128xf32>
    %427 = vector.broadcast %426 : vector<1x128xf32> to vector<64x128xf32>
    %428 = arith.addf %425, %427 : vector<64x128xf32>
    %c0_190 = arith.constant 0 : index
    %c0_191 = arith.constant 0 : index
    %c0_192 = arith.constant 0 : index
    %429 = vector.load %arg17[%c0_190, %c0_191, %c0_192] : memref<1x64x128xf32, #tpu.memory_space<vmem>>, vector<1x64x128xf32>
    %430 = vector.shape_cast %429 : vector<1x64x128xf32> to vector<64x128xf32>
    %431 = vector.shape_cast %428 : vector<64x128xf32> to vector<1x64x128xf32>
    tpu.vector_store %arg17[%c0_190, %c0_191, %c0_192], %431 {strides = array<i32>} : memref<1x64x128xf32, #tpu.memory_space<vmem>>, vector<1x64x128xf32>,
    %c0_193 = arith.constant 0 : index
    %c0_194 = arith.constant 0 : index
    %c0_195 = arith.constant 0 : index
    %432 = vector.load %arg18[%c0_193, %c0_194, %c0_195] : memref<1x8x1xf32, #tpu.memory_space<vmem>>, vector<1x8x1xf32>
    %433 = vector.shape_cast %432 : vector<1x8x1xf32> to vector<8x1xf32>
    %434 = vector.shape_cast %44 : vector<8x1xf32> to vector<1x8x1xf32>
    tpu.vector_store %arg18[%c0_193, %c0_194, %c0_195], %434 {strides = array<i32>} : memref<1x8x1xf32, #tpu.memory_space<vmem>>, vector<1x8x1xf32>,
    %c0_196 = arith.constant 0 : index
    %c0_197 = arith.constant 0 : index
    %c0_198 = arith.constant 0 : index
    %435 = vector.load %arg19[%c0_196, %c0_197, %c0_198] : memref<1x8x1xf32, #tpu.memory_space<vmem>>, vector<1x8x1xf32>
    %436 = vector.shape_cast %435 : vector<1x8x1xf32> to vector<8x1xf32>
    %437 = vector.shape_cast %351 : vector<8x1xf32> to vector<1x8x1xf32>
    tpu.vector_store %arg19[%c0_196, %c0_197, %c0_198], %437 {strides = array<i32>} : memref<1x8x1xf32, #tpu.memory_space<vmem>>, vector<1x8x1xf32>,
    return
  }
  func.func @transform_0(%arg0: i32) -> (i32, i32, i32) {
    %c0_i32 = arith.constant 0 : i32
    %c0_i32_0 = arith.constant 0 : i32
    %c0_i32_1 = arith.constant 0 : i32
    return %arg0, %c0_i32, %c0_i32_0 : i32, i32, i32
  }
  func.func @transform_1(%arg0: i32) -> (i32, i32, i32) {
    %c0_i32 = arith.constant 0 : i32
    %c0_i32_0 = arith.constant 0 : i32
    %c0_i32_1 = arith.constant 0 : i32
    return %arg0, %c0_i32, %c0_i32_0 : i32, i32, i32
  }
  func.func @transform_2(%arg0: i32) -> (i32, i32, i32) {
    %c0_i32 = arith.constant 0 : i32
    %c0_i32_0 = arith.constant 0 : i32
    %c0_i32_1 = arith.constant 0 : i32
    return %arg0, %c0_i32, %c0_i32_0 : i32, i32, i32
  }
  func.func @transform_3(%arg0: i32) -> (i32, i32) {
    %c0_i32 = arith.constant 0 : i32
    %c0_i32_0 = arith.constant 0 : i32
    %c0_i32_1 = arith.constant 0 : i32
    return %c0_i32, %c0_i32_0 : i32, i32
  }
  func.func @transform_4(%arg0: i32) -> (i32, i32, i32) {
    %c0_i32 = arith.constant 0 : i32
    %c0_i32_0 = arith.constant 0 : i32
    %c0_i32_1 = arith.constant 0 : i32
    %c0_i32_2 = arith.constant 0 : i32
    return %c0_i32, %c0_i32_0, %c0_i32_1 : i32, i32, i32
  }
  func.func @transform_5(%arg0: i32) -> (i32, i32, i32) {
    %c0_i32 = arith.constant 0 : i32
    %c0_i32_0 = arith.constant 0 : i32
    %c0_i32_1 = arith.constant 0 : i32
    %c0_i32_2 = arith.constant 0 : i32
    return %c0_i32, %c0_i32_0, %c0_i32_1 : i32, i32, i32
  }
  func.func @transform_6(%arg0: i32) -> (i32, i32, i32) {
    %c0_i32 = arith.constant 0 : i32
    %c0_i32_0 = arith.constant 0 : i32
    %c0_i32_1 = arith.constant 0 : i32
    %c0_i32_2 = arith.constant 0 : i32
    return %c0_i32, %c0_i32_0, %c0_i32_1 : i32, i32, i32
  }
  func.func @transform_7(%arg0: i32) -> (i32, i32, i32) {
    %c0_i32 = arith.constant 0 : i32
    %c0_i32_0 = arith.constant 0 : i32
    %c0_i32_1 = arith.constant 0 : i32
    %c0_i32_2 = arith.constant 0 : i32
    return %c0_i32, %c0_i32_0, %c0_i32_1 : i32, i32, i32
  }
  func.func @transform_8(%arg0: i32) -> (i32, i32, i32) {
    %c0_i32 = arith.constant 0 : i32
    %c0_i32_0 = arith.constant 0 : i32
    %c0_i32_1 = arith.constant 0 : i32
    %c0_i32_2 = arith.constant 0 : i32
    return %c0_i32, %c0_i32_0, %c0_i32_1 : i32, i32, i32
  }
  func.func @transform_9(%arg0: i32) -> (i32, i32, i32) {
    %c0_i32 = arith.constant 0 : i32
    %c0_i32_0 = arith.constant 0 : i32
    %c0_i32_1 = arith.constant 0 : i32
    %c0_i32_2 = arith.constant 0 : i32
    return %c0_i32, %c0_i32_0, %c0_i32_1 : i32, i32, i32
  }
  func.func @transform_10(%arg0: i32) -> (i32, i32, i32) {
    %c0_i32 = arith.constant 0 : i32
    %c0_i32_0 = arith.constant 0 : i32
    %c0_i32_1 = arith.constant 0 : i32
    %c0_i32_2 = arith.constant 0 : i32
    return %c0_i32, %c0_i32_0, %c0_i32_1 : i32, i32, i32
  }
  func.func @transform_11(%arg0: i32) -> (i32, i32, i32) {
    %c0_i32 = arith.constant 0 : i32
    %c0_i32_0 = arith.constant 0 : i32
    %c0_i32_1 = arith.constant 0 : i32
    %c0_i32_2 = arith.constant 0 : i32
    return %c0_i32, %c0_i32_0, %c0_i32_1 : i32, i32, i32
  }
  func.func @transform_12(%arg0: i32) -> (i32, i32) {
    %c0_i32 = arith.constant 0 : i32
    %c0_i32_0 = arith.constant 0 : i32
    %c0_i32_1 = arith.constant 0 : i32
    return %c0_i32, %c0_i32_0 : i32, i32
  }
  func.func @transform_13(%arg0: i32) -> (i32, i32) {
    %c0_i32 = arith.constant 0 : i32
    %c0_i32_0 = arith.constant 0 : i32
    %c0_i32_1 = arith.constant 0 : i32
    return %c0_i32, %c0_i32_0 : i32, i32
  }
  func.func @transform_14(%arg0: i32) -> (i32, i32) {
    %c0_i32 = arith.constant 0 : i32
    %c0_i32_0 = arith.constant 0 : i32
    %c0_i32_1 = arith.constant 0 : i32
    return %c0_i32, %c0_i32_0 : i32, i32
  }
  func.func @transform_15(%arg0: i32) -> (i32, i32) {
    %c0_i32 = arith.constant 0 : i32
    %c0_i32_0 = arith.constant 0 : i32
    %c0_i32_1 = arith.constant 0 : i32
    return %c0_i32, %c0_i32_0 : i32, i32
  }
  func.func @transform_16(%arg0: i32) -> (i32, i32, i32) {
    %c0_i32 = arith.constant 0 : i32
    %c0_i32_0 = arith.constant 0 : i32
    %c0_i32_1 = arith.constant 0 : i32
    return %arg0, %c0_i32, %c0_i32_0 : i32, i32, i32
  }
  func.func @transform_17(%arg0: i32) -> (i32, i32, i32) {
    %c0_i32 = arith.constant 0 : i32
    %c0_i32_0 = arith.constant 0 : i32
    %c0_i32_1 = arith.constant 0 : i32
    return %arg0, %c0_i32, %c0_i32_0 : i32, i32, i32
  }
  func.func @transform_18(%arg0: i32) -> (i32, i32, i32) {
    %c0_i32 = arith.constant 0 : i32
    %c0_i32_0 = arith.constant 0 : i32
    %c0_i32_1 = arith.constant 0 : i32
    return %arg0, %c0_i32, %c0_i32_0 : i32, i32, i32
  }
}

</mosaic_0001>

<llo_original>
// kernel: resc_backbone_forward.2
$region0: #{resc_backbone_forward.2}
  #allocation0 [shape = 'u32[]', space=smem, size = 0x4, offset = 0x4, fixed_abs, tag = 'smem constant byte address 0x4 - core index']
  #allocation1 [shape = 'u32[144,128]{1,0:T(1,128)}', space=vmem, size = 0x12000, scoped, tag = 'internal scratch']
  %s0 = inlined_call_operand.vmem [shape: bf16[16,768], index: 0, kind: input, shape index: {}]
  %s1 = inlined_call_operand.vmem [shape: bf16[768,64], index: 1, kind: input, shape index: {}]
  %s2 = inlined_call_operand.vmem [shape: f32[1,64], index: 2, kind: input, shape index: {}]
  %s3 = inlined_call_operand.vmem [shape: bf16[64,64], index: 3, kind: input, shape index: {}]
  %s4 = inlined_call_operand.vmem [shape: f32[1,64], index: 4, kind: input, shape index: {}]
  %s5 = inlined_call_operand.vmem [shape: f32[16,1], index: 5, kind: input, shape index: {}]
  %s6 = inlined_call_operand.vmem [shape: f32[16,64], index: 6, kind: output, shape index: {}]
  %s7 = sld [smem:[#allocation0]]
  $region34: #{resc_backbone_forward.2} parent=0
    _
  %s9 = ssub.s32 1, %s7
  %s10 = scalar_select 0, %s9, %s7
  // Predicated region
  $region2: #{resc_backbone_forward.2} parent=0 // pred_check
    _
  $region3: #{resc_backbone_forward.2} parent=0 // pred_check_branch
    %12 = sbr.rel (0) target = $region5
  $region4: #{resc_backbone_forward.2} parent=0 // pred_region
    _
  $region5: #{resc_backbone_forward.2} parent=0 // pred_fallthru
    _
  // Predicated region
  $region6: #{resc_backbone_forward.2} parent=0 // pred_check
    _
  $region7: #{resc_backbone_forward.2} parent=0 // pred_check_branch
    %14 = sbr.rel (0) target = $region9
  $region8: #{resc_backbone_forward.2} parent=0 // pred_region
    _
  $region9: #{resc_backbone_forward.2} parent=0 // pred_fallthru
    _
  // Predicated region
  $region10: #{resc_backbone_forward.2} parent=0 // pred_check
    _
  $region11: #{resc_backbone_forward.2} parent=0 // pred_check_branch
    %16 = sbr.rel (0) target = $region13
  $region12: #{resc_backbone_forward.2} parent=0 // pred_region
    _
  $region13: #{resc_backbone_forward.2} parent=0 // pred_fallthru
    _
  // Predicated region
  $region14: #{resc_backbone_forward.2} parent=0 // pred_check
    _
  $region15: #{resc_backbone_forward.2} parent=0 // pred_check_branch
    %18 = sbr.rel (0) target = $region17
  $region16: #{resc_backbone_forward.2} parent=0 // pred_region
    _
  $region17: #{resc_backbone_forward.2} parent=0 // pred_fallthru
    _
  // Predicated region
  $region18: #{resc_backbone_forward.2} parent=0 // pred_check
    _
  $region19: #{resc_backbone_forward.2} parent=0 // pred_check_branch
    %20 = sbr.rel (0) target = $region21
  $region20: #{resc_backbone_forward.2} parent=0 // pred_region
    _
  $region21: #{resc_backbone_forward.2} parent=0 // pred_fallthru
    _
  // Predicated region
  $region22: #{resc_backbone_forward.2} parent=0 // pred_check
    _
  $region23: #{resc_backbone_forward.2} parent=0 // pred_check_branch
    %22 = sbr.rel (0) target = $region25
  $region24: #{resc_backbone_forward.2} parent=0 // pred_region
    _
  $region25: #{resc_backbone_forward.2} parent=0 // pred_fallthru
    _
  %v24 = vld [vmem:[%s0] sm:$0xff]
  %v25 = vld [vmem:[%s0 + $0x8] sm:$0xff]
  %v26 = vld [vmem:[%s0 + $0x10] sm:$0xff]
  %v27 = vld [vmem:[%s0 + $0x18] sm:$0xff]
  %v28 = vld [vmem:[%s0 + $0x20] sm:$0xff]
  %v29 = vld [vmem:[%s0 + $0x28] sm:$0xff]
  %v30 = vld [vmem:[%s1] sm:$0xf]
  %v31 = vld [vmem:[%s1 + $0x4] sm:$0xf]
  %v32 = vld [vmem:[%s1 + $0x8] sm:$0xf]
  %v33 = vld [vmem:[%s1 + $0xc] sm:$0xf]
  %v34 = vld [vmem:[%s1 + $0x10] sm:$0xf]
  %v35 = vld [vmem:[%s1 + $0x14] sm:$0xf]
  %v36 = vld [vmem:[%s1 + $0x18] sm:$0xf]
  %v37 = vld [vmem:[%s1 + $0x1c] sm:$0xf]
  %v38 = vld [vmem:[%s1 + $0x20] sm:$0xf]
  %v39 = vld [vmem:[%s1 + $0x24] sm:$0xf]
  %v40 = vld [vmem:[%s1 + $0x28] sm:$0xf]
  %v41 = vld [vmem:[%s1 + $0x2c] sm:$0xf]
  %v42 = vld [vmem:[%s1 + $0x30] sm:$0xf]
  %v43 = vld [vmem:[%s1 + $0x34] sm:$0xf]
  %v44 = vld [vmem:[%s1 + $0x38] sm:$0xf]
  %v45 = vld [vmem:[%s1 + $0x3c] sm:$0xf]
  %v46 = vld [vmem:[%s1 + $0x40] sm:$0xf]
  %v47 = vld [vmem:[%s1 + $0x44] sm:$0xf]
  %v48 = vld [vmem:[%s1 + $0x48] sm:$0xf]
  %v49 = vld [vmem:[%s1 + $0x4c] sm:$0xf]
  %v50 = vld [vmem:[%s1 + $0x50] sm:$0xf]
  %v51 = vld [vmem:[%s1 + $0x54] sm:$0xf]
  %v52 = vld [vmem:[%s1 + $0x58] sm:$0xf]
  %v53 = vld [vmem:[%s1 + $0x5c] sm:$0xf]
  %v54 = vld [vmem:[%s1 + $0x60] sm:$0xf]
  %v55 = vld [vmem:[%s1 + $0x64] sm:$0xf]
  %v56 = vld [vmem:[%s1 + $0x68] sm:$0xf]
  %v57 = vld [vmem:[%s1 + $0x6c] sm:$0xf]
  %v58 = vld [vmem:[%s1 + $0x70] sm:$0xf]
  %v59 = vld [vmem:[%s1 + $0x74] sm:$0xf]
  %v60 = vld [vmem:[%s1 + $0x78] sm:$0xf]
  %v61 = vld [vmem:[%s1 + $0x7c] sm:$0xf]
  %v62 = vld [vmem:[%s1 + $0x80] sm:$0xf]
  %v63 = vld [vmem:[%s1 + $0x84] sm:$0xf]
  %v64 = vld [vmem:[%s1 + $0x88] sm:$0xf]
  %v65 = vld [vmem:[%s1 + $0x8c] sm:$0xf]
  %v66 = vld [vmem:[%s1 + $0x90] sm:$0xf]
  %v67 = vld [vmem:[%s1 + $0x94] sm:$0xf]
  %v68 = vld [vmem:[%s1 + $0x98] sm:$0xf]
  %v69 = vld [vmem:[%s1 + $0x9c] sm:$0xf]
  %v70 = vld [vmem:[%s1 + $0xa0] sm:$0xf]
  %v71 = vld [vmem:[%s1 + $0xa4] sm:$0xf]
  %v72 = vld [vmem:[%s1 + $0xa8] sm:$0xf]
  %v73 = vld [vmem:[%s1 + $0xac] sm:$0xf]
  %v74 = vld [vmem:[%s1 + $0xb0] sm:$0xf]
  %v75 = vld [vmem:[%s1 + $0xb4] sm:$0xf]
  %v76 = vld [vmem:[%s1 + $0xb8] sm:$0xf]
  %v77 = vld [vmem:[%s1 + $0xbc] sm:$0xf]
  %v78 = vld [vmem:[%s1 + $0xc0] sm:$0xf]
  %v79 = vld [vmem:[%s1 + $0xc4] sm:$0xf]
  %v80 = vld [vmem:[%s1 + $0xc8] sm:$0xf]
  %v81 = vld [vmem:[%s1 + $0xcc] sm:$0xf]
  %v82 = vld [vmem:[%s1 + $0xd0] sm:$0xf]
  %v83 = vld [vmem:[%s1 + $0xd4] sm:$0xf]
  %v84 = vld [vmem:[%s1 + $0xd8] sm:$0xf]
  %v85 = vld [vmem:[%s1 + $0xdc] sm:$0xf]
  %v86 = vld [vmem:[%s1 + $0xe0] sm:$0xf]
  %v87 = vld [vmem:[%s1 + $0xe4] sm:$0xf]
  %v88 = vld [vmem:[%s1 + $0xe8] sm:$0xf]
  %v89 = vld [vmem:[%s1 + $0xec] sm:$0xf]
  %v90 = vld [vmem:[%s1 + $0xf0] sm:$0xf]
  %v91 = vld [vmem:[%s1 + $0xf4] sm:$0xf]
  %v92 = vld [vmem:[%s1 + $0xf8] sm:$0xf]
  %v93 = vld [vmem:[%s1 + $0xfc] sm:$0xf]
  %v94 = vld [vmem:[%s1 + $0x100] sm:$0xf]
  %v95 = vld [vmem:[%s1 + $0x104] sm:$0xf]
  %v96 = vld [vmem:[%s1 + $0x108] sm:$0xf]
  %v97 = vld [vmem:[%s1 + $0x10c] sm:$0xf]
  %v98 = vld [vmem:[%s1 + $0x110] sm:$0xf]
  %v99 = vld [vmem:[%s1 + $0x114] sm:$0xf]
  %v100 = vld [vmem:[%s1 + $0x118] sm:$0xf]
  %v101 = vld [vmem:[%s1 + $0x11c] sm:$0xf]
  %v102 = vld [vmem:[%s1 + $0x120] sm:$0xf]
  %v103 = vld [vmem:[%s1 + $0x124] sm:$0xf]
  %v104 = vld [vmem:[%s1 + $0x128] sm:$0xf]
  %v105 = vld [vmem:[%s1 + $0x12c] sm:$0xf]
  %v106 = vld [vmem:[%s1 + $0x130] sm:$0xf]
  %v107 = vld [vmem:[%s1 + $0x134] sm:$0xf]
  %v108 = vld [vmem:[%s1 + $0x138] sm:$0xf]
  %v109 = vld [vmem:[%s1 + $0x13c] sm:$0xf]
  %v110 = vld [vmem:[%s1 + $0x140] sm:$0xf]
  %v111 = vld [vmem:[%s1 + $0x144] sm:$0xf]
  %v112 = vld [vmem:[%s1 + $0x148] sm:$0xf]
  %v113 = vld [vmem:[%s1 + $0x14c] sm:$0xf]
  %v114 = vld [vmem:[%s1 + $0x150] sm:$0xf]
  %v115 = vld [vmem:[%s1 + $0x154] sm:$0xf]
  %v116 = vld [vmem:[%s1 + $0x158] sm:$0xf]
  %v117 = vld [vmem:[%s1 + $0x15c] sm:$0xf]
  %v118 = vld [vmem:[%s1 + $0x160] sm:$0xf]
  %v119 = vld [vmem:[%s1 + $0x164] sm:$0xf]
  %v120 = vld [vmem:[%s1 + $0x168] sm:$0xf]
  %v121 = vld [vmem:[%s1 + $0x16c] sm:$0xf]
  %v122 = vld [vmem:[%s1 + $0x170] sm:$0xf]
  %v123 = vld [vmem:[%s1 + $0x174] sm:$0xf]
  %v124 = vld [vmem:[%s1 + $0x178] sm:$0xf]
  %v125 = vld [vmem:[%s1 + $0x17c] sm:$0xf]
  %v126 = vld [vmem:[%s2] sm:$0x1]
  %v128 = vlaneseq
  %v129 = vshrl.u32 %v128, 7
  %v130 = vsub.s32 0, %v129
  %v131 = vrot.slane %v126, %v130
  %v139 = vunpack.c.l.b16 %v24
  %v140 = vunpack.c.h.b16 %v24
  %v141 = vunpack.c.l.b16 %v25
  %v142 = vunpack.c.h.b16 %v25
  %v143 = vunpack.c.l.b16 %v26
  %v144 = vunpack.c.h.b16 %v26
  %v145 = vunpack.c.l.b16 %v27
  %v146 = vunpack.c.h.b16 %v27
  %v147 = vunpack.c.l.b16 %v28
  %v148 = vunpack.c.h.b16 %v28
  %v149 = vunpack.c.l.b16 %v29
  %v150 = vunpack.c.h.b16 %v29
  %v151 = vpack.c.b16 %v145, %v139
  %v152 = vpack.c.b16 %v146, %v140
  %v153 = vpack.c.b16 %v147, %v141
  %v154 = vpack.c.b16 %v148, %v142
  %v155 = vpack.c.b16 %v149, %v143
  %v156 = vpack.c.b16 %v150, %v144
  %v259 = vunpack.c.l.b16 %v30
  %v260 = vunpack.c.l.b16 %v31
  %v261 = vunpack.c.l.b16 %v32
  %v262 = vunpack.c.l.b16 %v33
  %v263 = vunpack.c.l.b16 %v34
  %v264 = vunpack.c.l.b16 %v35
  %v265 = vunpack.c.l.b16 %v36
  %v266 = vunpack.c.l.b16 %v37
  %v267 = vunpack.c.l.b16 %v38
  %v268 = vunpack.c.l.b16 %v39
  %v269 = vunpack.c.l.b16 %v40
  %v270 = vunpack.c.l.b16 %v41
  %v271 = vunpack.c.l.b16 %v42
  %v272 = vunpack.c.l.b16 %v43
  %v273 = vunpack.c.l.b16 %v44
  %v274 = vunpack.c.l.b16 %v45
  %v275 = vunpack.c.l.b16 %v46
  %v276 = vunpack.c.l.b16 %v47
  %v277 = vunpack.c.l.b16 %v48
  %v278 = vunpack.c.l.b16 %v49
  %v279 = vunpack.c.l.b16 %v50
  %v280 = vunpack.c.l.b16 %v51
  %v281 = vunpack.c.l.b16 %v52
  %v282 = vunpack.c.l.b16 %v53
  %v283 = vunpack.c.l.b16 %v54
  %v284 = vunpack.c.l.b16 %v55
  %v285 = vunpack.c.l.b16 %v56
  %v286 = vunpack.c.l.b16 %v57
  %v287 = vunpack.c.l.b16 %v58
  %v288 = vunpack.c.l.b16 %v59
  %v289 = vunpack.c.l.b16 %v60
  %v290 = vunpack.c.l.b16 %v61
  %v291 = vunpack.c.l.b16 %v62
  %v292 = vunpack.c.l.b16 %v63
  %v293 = vunpack.c.l.b16 %v64
  %v294 = vunpack.c.l.b16 %v65
  %v295 = vunpack.c.l.b16 %v66
  %v296 = vunpack.c.l.b16 %v67
  %v297 = vunpack.c.l.b16 %v68
  %v298 = vunpack.c.l.b16 %v69
  %v299 = vunpack.c.l.b16 %v70
  %v300 = vunpack.c.l.b16 %v71
  %v301 = vunpack.c.l.b16 %v72
  %v302 = vunpack.c.l.b16 %v73
  %v303 = vunpack.c.l.b16 %v74
  %v304 = vunpack.c.l.b16 %v75
  %v305 = vunpack.c.l.b16 %v76
  %v306 = vunpack.c.l.b16 %v77
  %v307 = vunpack.c.l.b16 %v78
  %v308 = vunpack.c.l.b16 %v79
  %v309 = vunpack.c.l.b16 %v80
  %v310 = vunpack.c.l.b16 %v81
  %v311 = vunpack.c.l.b16 %v82
  %v312 = vunpack.c.l.b16 %v83
  %v313 = vunpack.c.l.b16 %v84
  %v314 = vunpack.c.l.b16 %v85
  %v315 = vunpack.c.l.b16 %v86
  %v316 = vunpack.c.l.b16 %v87
  %v317 = vunpack.c.l.b16 %v88
  %v318 = vunpack.c.l.b16 %v89
  %v319 = vunpack.c.l.b16 %v90
  %v320 = vunpack.c.l.b16 %v91
  %v321 = vunpack.c.l.b16 %v92
  %v322 = vunpack.c.l.b16 %v93
  %v323 = vunpack.c.l.b16 %v94
  %v324 = vunpack.c.l.b16 %v95
  %v325 = vunpack.c.l.b16 %v96
  %v326 = vunpack.c.l.b16 %v97
  %v327 = vunpack.c.l.b16 %v98
  %v328 = vunpack.c.l.b16 %v99
  %v329 = vunpack.c.l.b16 %v100
  %v330 = vunpack.c.l.b16 %v101
  %v331 = vunpack.c.l.b16 %v102
  %v332 = vunpack.c.l.b16 %v103
  %v333 = vunpack.c.l.b16 %v104
  %v334 = vunpack.c.l.b16 %v105
  %v335 = vunpack.c.l.b16 %v106
  %v336 = vunpack.c.l.b16 %v107
  %v337 = vunpack.c.l.b16 %v108
  %v338 = vunpack.c.l.b16 %v109
  %v339 = vunpack.c.l.b16 %v110
  %v340 = vunpack.c.l.b16 %v111
  %v341 = vunpack.c.l.b16 %v112
  %v342 = vunpack.c.l.b16 %v113
  %v343 = vunpack.c.l.b16 %v114
  %v344 = vunpack.c.l.b16 %v115
  %v345 = vunpack.c.l.b16 %v116
  %v346 = vunpack.c.l.b16 %v117
  %v347 = vunpack.c.l.b16 %v118
  %v348 = vunpack.c.l.b16 %v119
  %v349 = vunpack.c.l.b16 %v120
  %v350 = vunpack.c.l.b16 %v121
  %v351 = vunpack.c.l.b16 %v122
  %v352 = vunpack.c.l.b16 %v123
  %v353 = vunpack.c.l.b16 %v124
  %v354 = vunpack.c.l.b16 %v125
  %v355 = vpack.c.b16 %v260, %v259
  %v356 = vpack.c.b16 %v262, %v261
  %v357 = vpack.c.b16 %v264, %v263
  %v358 = vpack.c.b16 %v266, %v265
  %v359 = vpack.c.b16 %v268, %v267
  %v360 = vpack.c.b16 %v270, %v269
  %v361 = vpack.c.b16 %v272, %v271
  %v362 = vpack.c.b16 %v274, %v273
  %v363 = vpack.c.b16 %v276, %v275
  %v364 = vpack.c.b16 %v278, %v277
  %v365 = vpack.c.b16 %v280, %v279
  %v366 = vpack.c.b16 %v282, %v281
  %v367 = vpack.c.b16 %v284, %v283
  %v368 = vpack.c.b16 %v286, %v285
  %v369 = vpack.c.b16 %v288, %v287
  %v370 = vpack.c.b16 %v290, %v289
  %v371 = vpack.c.b16 %v292, %v291
  %v372 = vpack.c.b16 %v294, %v293
  %v373 = vpack.c.b16 %v296, %v295
  %v374 = vpack.c.b16 %v298, %v297
  %v375 = vpack.c.b16 %v300, %v299
  %v376 = vpack.c.b16 %v302, %v301
  %v377 = vpack.c.b16 %v304, %v303
  %v378 = vpack.c.b16 %v306, %v305
  %v379 = vpack.c.b16 %v308, %v307
  %v380 = vpack.c.b16 %v310, %v309
  %v381 = vpack.c.b16 %v312, %v311
  %v382 = vpack.c.b16 %v314, %v313
  %v383 = vpack.c.b16 %v316, %v315
  %v384 = vpack.c.b16 %v318, %v317
  %v385 = vpack.c.b16 %v320, %v319
  %v386 = vpack.c.b16 %v322, %v321
  %v387 = vpack.c.b16 %v324, %v323
  %v388 = vpack.c.b16 %v326, %v325
  %v389 = vpack.c.b16 %v328, %v327
  %v390 = vpack.c.b16 %v330, %v329
  %v391 = vpack.c.b16 %v332, %v331
  %v392 = vpack.c.b16 %v334, %v333
  %v393 = vpack.c.b16 %v336, %v335
  %v394 = vpack.c.b16 %v338, %v337
  %v395 = vpack.c.b16 %v340, %v339
  %v396 = vpack.c.b16 %v342, %v341
  %v397 = vpack.c.b16 %v344, %v343
  %v398 = vpack.c.b16 %v346, %v345
  %v399 = vpack.c.b16 %v348, %v347
  %v400 = vpack.c.b16 %v350, %v349
  %v401 = vpack.c.b16 %v352, %v351
  %v402 = vpack.c.b16 %v354, %v353
  %451 = vmatprep.subr.bf16.mxu0 0
  %452 = vmatpush1.bf16.msra.mxu0 %v355
  %453 = vmatprep.subr.bf16.mxu0 0
  %454 = vmatpush1.bf16.msra.mxu0 %v356
  %455 = vmatprep.subr.bf16.mxu0 0
  %456 = vmatpush1.bf16.msra.mxu0 %v357
  %457 = vmatprep.subr.bf16.mxu0 0
  %458 = vmatpush1.bf16.msra.mxu0 %v358
  %459 = vmatprep.subr.bf16.mxu0 0
  %460 = vmatpush1.bf16.msra.mxu0 %v359
  %461 = vmatprep.subr.bf16.mxu0 0
  %462 = vmatpush1.bf16.msra.mxu0 %v360
  %463 = vmatprep.subr.bf16.mxu0 0
  %464 = vmatpush1.bf16.msra.mxu0 %v361
  %465 = vmatprep.subr.bf16.mxu0 0
  %466 = vmatpush1.bf16.msra.mxu0 %v362
  %467 = vmatprep.subr.bf16.mxu0 0
  %468 = vmatpush1.bf16.msra.mxu0 %v363
  %469 = vmatprep.subr.bf16.mxu0 0
  %470 = vmatpush1.bf16.msra.mxu0 %v364
  %471 = vmatprep.subr.bf16.mxu0 0
  %472 = vmatpush1.bf16.msra.mxu0 %v365
  %473 = vmatprep.subr.bf16.mxu0 0
  %474 = vmatpush1.bf16.msra.mxu0 %v366
  %475 = vmatprep.subr.bf16.mxu0 0
  %476 = vmatpush1.bf16.msra.mxu0 %v367
  %477 = vmatprep.subr.bf16.mxu0 0
  %478 = vmatpush1.bf16.msra.mxu0 %v368
  %479 = vmatprep.subr.bf16.mxu0 0
  %480 = vmatpush1.bf16.msra.mxu0 %v369
  %481 = vmatprep.subr.bf16.mxu0 0
  %482 = vmatpush1.bf16.msra.mxu0 %v370
  %483 = vmatprep.mubr.bf16.mxu0 %v152
  %484 = vmatmul.mubr.bf16.gmra.mrb[0].mxu0 %v151
  %v485 = vpop.f32.mrb[0].mxu0
  %v486 = vadd.f32 %v131, %v485
  %v487 = vpop.f32.mrb[0].mxu0
  %v488 = vpop.f32.mrb[0].mxu0
  %v489 = vadd.f32 %v131, %v488
  %v490 = vpop.f32.mrb[0].mxu0
  %491 = vdwg.mxu0
  %492 = vmatprep.subr.bf16.mxu0 0
  %493 = vmatpush1.bf16.msra.mxu0 %v371
  %494 = vmatprep.subr.bf16.mxu0 0
  %495 = vmatpush1.bf16.msra.mxu0 %v372
  %496 = vmatprep.subr.bf16.mxu0 0
  %497 = vmatpush1.bf16.msra.mxu0 %v373
  %498 = vmatprep.subr.bf16.mxu0 0
  %499 = vmatpush1.bf16.msra.mxu0 %v374
  %500 = vmatprep.subr.bf16.mxu0 0
  %501 = vmatpush1.bf16.msra.mxu0 %v375
  %502 = vmatprep.subr.bf16.mxu0 0
  %503 = vmatpush1.bf16.msra.mxu0 %v376
  %504 = vmatprep.subr.bf16.mxu0 0
  %505 = vmatpush1.bf16.msra.mxu0 %v377
  %506 = vmatprep.subr.bf16.mxu0 0
  %507 = vmatpush1.bf16.msra.mxu0 %v378
  %508 = vmatprep.subr.bf16.mxu0 0
  %509 = vmatpush1.bf16.msra.mxu0 %v379
  %510 = vmatprep.subr.bf16.mxu0 0
  %511 = vmatpush1.bf16.msra.mxu0 %v380
  %512 = vmatprep.subr.bf16.mxu0 0
  %513 = vmatpush1.bf16.msra.mxu0 %v381
  %514 = vmatprep.subr.bf16.mxu0 0
  %515 = vmatpush1.bf16.msra.mxu0 %v382
  %516 = vmatprep.subr.bf16.mxu0 0
  %517 = vmatpush1.bf16.msra.mxu0 %v383
  %518 = vmatprep.subr.bf16.mxu0 0
  %519 = vmatpush1.bf16.msra.mxu0 %v384
  %520 = vmatprep.subr.bf16.mxu0 0
  %521 = vmatpush1.bf16.msra.mxu0 %v385
  %522 = vmatprep.subr.bf16.mxu0 0
  %523 = vmatpush1.bf16.msra.mxu0 %v386
  %524 = vmatprep.mubr.bf16.mxu0 %v154
  %525 = vmatmul.mubr.bf16.gmra.mrb[0].mxu0 %v153
  %v526 = vpop.f32.mrb[0].mxu0
  %v527 = vadd.f32 %v486, %v526
  %v528 = vpop.f32.mrb[0].mxu0
  %v529 = vpop.f32.mrb[0].mxu0
  %v530 = vadd.f32 %v489, %v529
  %v531 = vpop.f32.mrb[0].mxu0
  %532 = vdwg.mxu0
  %533 = vmatprep.subr.bf16.mxu0 0
  %534 = vmatpush1.bf16.msra.mxu0 %v387
  %535 = vmatprep.subr.bf16.mxu0 0
  %536 = vmatpush1.bf16.msra.mxu0 %v388
  %537 = vmatprep.subr.bf16.mxu0 0
  %538 = vmatpush1.bf16.msra.mxu0 %v389
  %539 = vmatprep.subr.bf16.mxu0 0
  %540 = vmatpush1.bf16.msra.mxu0 %v390
  %541 = vmatprep.subr.bf16.mxu0 0
  %542 = vmatpush1.bf16.msra.mxu0 %v391
  %543 = vmatprep.subr.bf16.mxu0 0
  %544 = vmatpush1.bf16.msra.mxu0 %v392
  %545 = vmatprep.subr.bf16.mxu0 0
  %546 = vmatpush1.bf16.msra.mxu0 %v393
  %547 = vmatprep.subr.bf16.mxu0 0
  %548 = vmatpush1.bf16.msra.mxu0 %v394
  %549 = vmatprep.subr.bf16.mxu0 0
  %550 = vmatpush1.bf16.msra.mxu0 %v395
  %551 = vmatprep.subr.bf16.mxu0 0
  %552 = vmatpush1.bf16.msra.mxu0 %v396
  %553 = vmatprep.subr.bf16.mxu0 0
  %554 = vmatpush1.bf16.msra.mxu0 %v397
  %555 = vmatprep.subr.bf16.mxu0 0
  %556 = vmatpush1.bf16.msra.mxu0 %v398
  %557 = vmatprep.subr.bf16.mxu0 0
  %558 = vmatpush1.bf16.msra.mxu0 %v399
  %559 = vmatprep.subr.bf16.mxu0 0
  %560 = vmatpush1.bf16.msra.mxu0 %v400
  %561 = vmatprep.subr.bf16.mxu0 0
  %562 = vmatpush1.bf16.msra.mxu0 %v401
  %563 = vmatprep.subr.bf16.mxu0 0
  %564 = vmatpush1.bf16.msra.mxu0 %v402
  %565 = vmatprep.mubr.bf16.mxu0 %v156
  %566 = vmatmul.mubr.bf16.gmra.mrb[0].mxu0 %v155
  %v567 = vpop.f32.mrb[0].mxu0
  %v568 = vadd.f32 %v527, %v567
  %v569 = vpop.f32.mrb[0].mxu0
  %v570 = vpop.f32.mrb[0].mxu0
  %v571 = vadd.f32 %v530, %v570
  %v572 = vpop.f32.mrb[0].mxu0
  %573 = vdwg.mxu0
  %v574 = vmax.f32 %v568, 0.0
  %v575 = vmax.f32 %v571, 0.0
  %v576 = vpack.c.bf16 %v575, %v574
  %v577 = vld [vmem:[%s3] sm:$0xf]
  %v578 = vld [vmem:[%s3 + $0x4] sm:$0xf]
  %v579 = vld [vmem:[%s3 + $0x8] sm:$0xf]
  %v580 = vld [vmem:[%s3 + $0xc] sm:$0xf]
  %v581 = vld [vmem:[%s3 + $0x10] sm:$0xf]
  %v582 = vld [vmem:[%s3 + $0x14] sm:$0xf]
  %v583 = vld [vmem:[%s3 + $0x18] sm:$0xf]
  %v584 = vld [vmem:[%s3 + $0x1c] sm:$0xf]
  %v585 = vld [vmem:[%s4] sm:$0x1]
  %v587 = vlaneseq
  %v588 = vshrl.u32 %v587, 7
  %v589 = vsub.s32 0, %v588
  %v590 = vrot.slane %v585, %v589
  %v600 = vunpack.c.l.b16 %v577
  %v601 = vunpack.c.l.b16 %v578
  %v602 = vunpack.c.l.b16 %v579
  %v603 = vunpack.c.l.b16 %v580
  %v604 = vunpack.c.l.b16 %v581
  %v605 = vunpack.c.l.b16 %v582
  %v606 = vunpack.c.l.b16 %v583
  %v607 = vunpack.c.l.b16 %v584
  %v608 = vpack.c.b16 %v601, %v600
  %v609 = vpack.c.b16 %v603, %v602
  %v610 = vpack.c.b16 %v605, %v604
  %v611 = vpack.c.b16 %v607, %v606
  %vm616 = vcmask 523264
  %v618 = vsel %vm616, %v576, 0
  %620 = vmatprep.subr.bf16.mxu0 0
  %621 = vmatpush1.bf16.msra.mxu0 %v608
  %622 = vmatprep.subr.bf16.mxu0 0
  %623 = vmatpush1.bf16.msra.mxu0 %v609
  %624 = vmatprep.subr.bf16.mxu0 0
  %625 = vmatpush1.bf16.msra.mxu0 %v610
  %626 = vmatprep.subr.bf16.mxu0 0
  %627 = vmatpush1.bf16.msra.mxu0 %v611
  %628 = vmatprep.subr.bf16.mxu0 0
  %629 = vmatpush1.bf16.msra.mxu0 0
  %630 = vmatprep.subr.bf16.mxu0 0
  %631 = vmatpush1.bf16.msra.mxu0 0
  %632 = vmatprep.subr.bf16.mxu0 0
  %633 = vmatpush1.bf16.msra.mxu0 0
  %634 = vmatprep.subr.bf16.mxu0 0
  %635 = vmatpush1.bf16.msra.mxu0 0
  %636 = vmatprep.subr.bf16.mxu0 0
  %637 = vmatpush1.bf16.msra.mxu0 0
  %638 = vmatprep.subr.bf16.mxu0 0
  %639 = vmatpush1.bf16.msra.mxu0 0
  %640 = vmatprep.subr.bf16.mxu0 0
  %641 = vmatpush1.bf16.msra.mxu0 0
  %642 = vmatprep.subr.bf16.mxu0 0
  %643 = vmatpush1.bf16.msra.mxu0 0
  %644 = vmatprep.subr.bf16.mxu0 0
  %645 = vmatpush1.bf16.msra.mxu0 0
  %646 = vmatprep.subr.bf16.mxu0 0
  %647 = vmatpush1.bf16.msra.mxu0 0
  %648 = vmatprep.subr.bf16.mxu0 0
  %649 = vmatpush1.bf16.msra.mxu0 0
  %650 = vmatprep.subr.bf16.mxu0 0
  %651 = vmatpush1.bf16.msra.mxu0 0
  %652 = vmatprep.mubr.bf16.mxu0 0
  %653 = vmatmul.mubr.bf16.gmra.mrb[0].mxu0 %v618
  %v654 = vpop.f32.mrb[0].mxu0
  %v655 = vadd.f32 %v590, %v654
  %v656 = vpop.f32.mrb[0].mxu0
  %v657 = vpop.f32.mrb[0].mxu0
  %v658 = vadd.f32 %v590, %v657
  %v659 = vpop.f32.mrb[0].mxu0
  %660 = vdwg.mxu0
  %v661 = vmax.f32 %v655, 0.0
  %v662 = vmax.f32 %v658, 0.0
  %v663 = vmul.f32 %v661, %v661
  %v664 = vmul.f32 %v662, %v662
  %v665 = vsel %vm616, %v663, 0.0
  %666 = vadd.xlane.f32.xlu0 %v665
  %v667 = vpop.xlane.xlu0 %666
  %v668 = vsel %vm616, %v664, 0.0
  %669 = vadd.xlane.f32.xlu0 %v668
  %v670 = vpop.xlane.xlu0 %669
  %v671 = vmax.f32 %v667, 1e-24
  %v672 = vmax.f32 %v670, 1e-24
  %v673 = vrsqrt.pop %v671
  %v674 = vrsqrt.pop %v672
  %v675 = vmul.f32 %v661, %v673
  %v676 = vmul.f32 %v662, %v674
  %v677 = vld [vmem:[%s5] sm:$0xff]
  %v678 = vld [vmem:[%s5 + $0x8] sm:$0xff]
  %680 = vset.pattern.permute.xlu0 0
  %681 = vperm.xlu0 %680, %v677
  %v682 = vpop.permute.xlu0 %681
  %685 = vset.pattern.permute.xlu0 0
  %686 = vperm.xlu0 %685, %v678
  %v687 = vpop.permute.xlu0 %686
  %v689 = vmul.f32 %v675, %v682
  %v690 = vmul.f32 %v676, %v687
  %691 = vst.msk [vmem:[%s6] sm:$0xff] %vm616, %v689
  %692 = vst.msk [vmem:[%s6 + $0x8] sm:$0xff] %vm616, %v690
  // Predicated region
  $region26: #{resc_backbone_forward.2} parent=0 // pred_check
    _
  $region27: #{resc_backbone_forward.2} parent=0 // pred_check_branch
    %694 = sbr.rel (0) target = $region29
  $region28: #{resc_backbone_forward.2} parent=0 // pred_region
    _
  $region29: #{resc_backbone_forward.2} parent=0 // pred_fallthru
    _
  // Predicated region
  $region30: #{resc_backbone_forward.2} parent=0 // pred_check
    _
  $region31: #{resc_backbone_forward.2} parent=0 // pred_check_branch
    %696 = sbr.rel (0) target = $region33
  $region32: #{resc_backbone_forward.2} parent=0 // pred_region
    _
  $region33: #{resc_backbone_forward.2} parent=0 // pred_fallthru
    _

// kernel: resc_backbone_forward.3
$region0: #{resc_backbone_forward.3}
  #allocation0 [shape = 'u32[]', space=smem, size = 0x4, offset = 0x4, fixed_abs, tag = 'smem constant byte address 0x4 - core index']
  #allocation1 [shape = 'u32[144,128]{1,0:T(1,128)}', space=vmem, size = 0x12000, scoped, tag = 'internal scratch']
  %s0 = inlined_call_operand.vmem [shape: bf16[2,64,256], index: 0, kind: input, shape index: {}]
  %s1 = inlined_call_operand.vmem [shape: f32[2,8,64], index: 1, kind: input, shape index: {}]
  %s2 = inlined_call_operand.vmem [shape: f32[2,8,1], index: 2, kind: input, shape index: {}]
  %s3 = inlined_call_operand.vmem [shape: bf16[256,64], index: 3, kind: input, shape index: {}]
  %s4 = inlined_call_operand.vmem [shape: bf16[2,64,32], index: 4, kind: input, shape index: {}]
  %s5 = inlined_call_operand.vmem [shape: f32[2,1,32], index: 5, kind: input, shape index: {}]
  %s6 = inlined_call_operand.vmem [shape: f32[2,1,32], index: 6, kind: input, shape index: {}]
  %s7 = inlined_call_operand.vmem [shape: f32[2,1,1], index: 7, kind: input, shape index: {}]
  %s8 = inlined_call_operand.vmem [shape: bf16[2,64,128], index: 8, kind: input, shape index: {}]
  %s9 = inlined_call_operand.vmem [shape: f32[2,1,128], index: 9, kind: input, shape index: {}]
  %s10 = inlined_call_operand.vmem [shape: bf16[2,64,64], index: 10, kind: input, shape index: {}]
  %s11 = inlined_call_operand.vmem [shape: f32[2,64,64], index: 11, kind: input, shape index: {}]
  %s12 = inlined_call_operand.vmem [shape: bf16[576,64], index: 12, kind: input, shape index: {}]
  %s13 = inlined_call_operand.vmem [shape: bf16[64,128], index: 13, kind: input, shape index: {}]
  %s14 = inlined_call_operand.vmem [shape: bf16[128,128], index: 14, kind: input, shape index: {}]
  %s15 = inlined_call_operand.vmem [shape: f32[1,128], index: 15, kind: input, shape index: {}]
  %s16 = inlined_call_operand.vmem [shape: f32[2,64,128], index: 16, kind: output, shape index: {0}]
  %s17 = inlined_call_operand.vmem [shape: f32[2,8,1], index: 17, kind: output, shape index: {1}]
  %s18 = inlined_call_operand.vmem [shape: f32[2,8,1], index: 18, kind: output, shape index: {2}]
  %19 = xla_tuple %s16, %s17, %s18
  %s20 = sld [smem:[#allocation0]]
  $region113: #{resc_backbone_forward.3} parent=0
    _
  %s22 = ssub.s32 1, %s20
  %s23 = scalar_select 0, %s22, %s20
  loop: start=0, step=1, limit=4
  $region2: #{resc_backbone_forward.3} parent=0 // loop_pre_header
    _
  $region3: #{resc_backbone_forward.3} parent=0 // loop_header
    %s25 = sphi 0, %s29
    %p26 = scmp.ge.s32.totalorder %s25, 4
    %s35 = sphi 0, %s37
    %s38 = sphi 0, %s35
    %s39 = sphi 0, %s38
    %s55 = sphi 0, %s39
    %s61 = sphi 0, %s63
    %s64 = sphi 0, %s61
    %s65 = sphi 0, %s64
    %s81 = sphi 0, %s65
    %s87 = sphi 0, %s89
    %s90 = sphi 0, %s87
    %s91 = sphi 0, %s90
    %s107 = sphi 0, %s91
    %s111 = sphi 0, %s111
    %s113 = sphi 0, %s111
    %s114 = sphi 0, %s113
    %s128 = sphi 0, %s114
    %s132 = sphi 0, %s132
    %s134 = sphi 0, %s132
    %s135 = sphi 0, %s134
    %s149 = sphi 0, %s135
    %s153 = sphi 0, %s153
    %s155 = sphi 0, %s153
    %s156 = sphi 0, %s155
    %s170 = sphi 0, %s156
    %s174 = sphi 0, %s174
    %s176 = sphi 0, %s174
    %s177 = sphi 0, %s176
    %s191 = sphi 0, %s177
    %s195 = sphi 0, %s195
    %s197 = sphi 0, %s195
    %s198 = sphi 0, %s197
    %s212 = sphi 0, %s198
    %s216 = sphi 0, %s216
    %s218 = sphi 0, %s216
    %s219 = sphi 0, %s218
    %s233 = sphi 0, %s219
    %s237 = sphi 0, %s237
    %s239 = sphi 0, %s237
    %s240 = sphi 0, %s239
    %s254 = sphi 0, %s240
    %s258 = sphi 0, %s258
    %s260 = sphi 0, %s258
    %s261 = sphi 0, %s260
    %s275 = sphi 0, %s261
    %s279 = sphi 0, %s279
    %s281 = sphi 0, %s279
    %s282 = sphi 0, %s281
    %s296 = sphi 0, %s282
    %s300 = sphi 0, %s300
    %s302 = sphi 0, %s300
    %s303 = sphi 0, %s302
    %s317 = sphi 0, %s303
    %s321 = sphi 0, %s321
    %s323 = sphi 0, %s321
    %s324 = sphi 0, %s323
    %s338 = sphi 0, %s324
    %s342 = sphi 0, %s342
    %s344 = sphi 0, %s342
    %s345 = sphi 0, %s344
    %s359 = sphi 0, %s345
    %s363 = sphi 0, %s363
    %s365 = sphi 0, %s363
    %s366 = sphi 0, %s365
    %s380 = sphi 0, %s366
    %s386 = sphi 0, %s388
    %s389 = sphi 0, %s386
    %s390 = sphi 0, %s389
    %s406 = sphi 0, %s390
    %s412 = sphi 0, %s414
    %s415 = sphi 0, %s412
    %s416 = sphi 0, %s415
    %s432 = sphi 0, %s416
    %s438 = sphi 0, %s440
    %s441 = sphi 0, %s438
    %s442 = sphi 0, %s441
    %s458 = sphi 0, %s442
  $region4: #{resc_backbone_forward.3} parent=0 // loop_header_branch
    %28 = sbr.rel (%p26) target = $region8
  $region5: #{resc_backbone_forward.3} parent=0 // loop_body
    %s30 = ssub.s32 %s25, 1
    %s31 = ssub.s32 %s25, 2
    %s32 = sadd.s32 %s25, 1
    %s33 = ssub.s32 %s25, %s32
    %p34 = scmp.eq.s32.totalorder %s33, 0
    %s36 = sadd.s32 %s35, 1
    %s37 = scalar_select %p34, %s35, %s36
    %p40 = pneg %p34
    %p41 = scmp.eq.s32.totalorder %s25, 1
    %p42 = por %p40, %p41
    %p43 = scmp.ne.s32.totalorder %s35, %s38
    %p44 = scmp.eq.s32.totalorder %s25, 0
    %p45 = por %p43, %p44
    %p46 = scmp.ne.s32.totalorder %s35, %s38
    %p47 = scmp.eq.s32.totalorder %s30, 1
    %p48 = por %p46, %p47
    %p49 = scmp.ne.s32.totalorder %s38, %s39
    %p50 = scmp.eq.s32.totalorder %s30, 0
    %p51 = por %p49, %p50
    %p52 = scmp.ne.s32.totalorder %s38, %s39
    %p53 = scmp.eq.s32.totalorder %s31, 1
    %p54 = por %p52, %p53
    %p56 = scmp.ne.s32.totalorder %s39, %s55
    %p57 = scmp.eq.s32.totalorder %s31, 0
    %p58 = por %p56, %p57
    %s59 = ssub.s32 %s25, %s32
    %p60 = scmp.eq.s32.totalorder %s59, 0
    %s62 = sadd.s32 %s61, 1
    %s63 = scalar_select %p60, %s61, %s62
    %p66 = pneg %p60
    %p67 = scmp.eq.s32.totalorder %s25, 1
    %p68 = por %p66, %p67
    %p69 = scmp.ne.s32.totalorder %s61, %s64
    %p70 = scmp.eq.s32.totalorder %s25, 0
    %p71 = por %p69, %p70
    %p72 = scmp.ne.s32.totalorder %s61, %s64
    %p73 = scmp.eq.s32.totalorder %s30, 1
    %p74 = por %p72, %p73
    %p75 = scmp.ne.s32.totalorder %s64, %s65
    %p76 = scmp.eq.s32.totalorder %s30, 0
    %p77 = por %p75, %p76
    %p78 = scmp.ne.s32.totalorder %s64, %s65
    %p79 = scmp.eq.s32.totalorder %s31, 1
    %p80 = por %p78, %p79
    %p82 = scmp.ne.s32.totalorder %s65, %s81
    %p83 = scmp.eq.s32.totalorder %s31, 0
    %p84 = por %p82, %p83
    %s85 = ssub.s32 %s25, %s32
    %p86 = scmp.eq.s32.totalorder %s85, 0
    %s88 = sadd.s32 %s87, 1
    %s89 = scalar_select %p86, %s87, %s88
    %p92 = pneg %p86
    %p93 = scmp.eq.s32.totalorder %s25, 1
    %p94 = por %p92, %p93
    %p95 = scmp.ne.s32.totalorder %s87, %s90
    %p96 = scmp.eq.s32.totalorder %s25, 0
    %p97 = por %p95, %p96
    %p98 = scmp.ne.s32.totalorder %s87, %s90
    %p99 = scmp.eq.s32.totalorder %s30, 1
    %p100 = por %p98, %p99
    %p101 = scmp.ne.s32.totalorder %s90, %s91
    %p102 = scmp.eq.s32.totalorder %s30, 0
    %p103 = por %p101, %p102
    %p104 = scmp.ne.s32.totalorder %s90, %s91
    %p105 = scmp.eq.s32.totalorder %s31, 1
    %p106 = por %p104, %p105
    %p108 = scmp.ne.s32.totalorder %s91, %s107
    %p109 = scmp.eq.s32.totalorder %s31, 0
    %p110 = por %p108, %p109
    %s112 = sadd.s32 %s111, 1
    %p115 = scmp.eq.s32.totalorder %s25, 1
    %p116 = scmp.ne.s32.totalorder %s111, %s113
    %p117 = scmp.eq.s32.totalorder %s25, 0
    %p118 = por %p116, %p117
    %p119 = scmp.ne.s32.totalorder %s111, %s113
    %p120 = scmp.eq.s32.totalorder %s30, 1
    %p121 = por %p119, %p120
    %p122 = scmp.ne.s32.totalorder %s113, %s114
    %p123 = scmp.eq.s32.totalorder %s30, 0
    %p124 = por %p122, %p123
    %p125 = scmp.ne.s32.totalorder %s113, %s114
    %p126 = scmp.eq.s32.totalorder %s31, 1
    %p127 = por %p125, %p126
    %p129 = scmp.ne.s32.totalorder %s114, %s128
    %p130 = scmp.eq.s32.totalorder %s31, 0
    %p131 = por %p129, %p130
    %s133 = sadd.s32 %s132, 1
    %p136 = scmp.eq.s32.totalorder %s25, 1
    %p137 = scmp.ne.s32.totalorder %s132, %s134
    %p138 = scmp.eq.s32.totalorder %s25, 0
    %p139 = por %p137, %p138
    %p140 = scmp.ne.s32.totalorder %s132, %s134
    %p141 = scmp.eq.s32.totalorder %s30, 1
    %p142 = por %p140, %p141
    %p143 = scmp.ne.s32.totalorder %s134, %s135
    %p144 = scmp.eq.s32.totalorder %s30, 0
    %p145 = por %p143, %p144
    %p146 = scmp.ne.s32.totalorder %s134, %s135
    %p147 = scmp.eq.s32.totalorder %s31, 1
    %p148 = por %p146, %p147
    %p150 = scmp.ne.s32.totalorder %s135, %s149
    %p151 = scmp.eq.s32.totalorder %s31, 0
    %p152 = por %p150, %p151
    %s154 = sadd.s32 %s153, 1
    %p157 = scmp.eq.s32.totalorder %s25, 1
    %p158 = scmp.ne.s32.totalorder %s153, %s155
    %p159 = scmp.eq.s32.totalorder %s25, 0
    %p160 = por %p158, %p159
    %p161 = scmp.ne.s32.totalorder %s153, %s155
    %p162 = scmp.eq.s32.totalorder %s30, 1
    %p163 = por %p161, %p162
    %p164 = scmp.ne.s32.totalorder %s155, %s156
    %p165 = scmp.eq.s32.totalorder %s30, 0
    %p166 = por %p164, %p165
    %p167 = scmp.ne.s32.totalorder %s155, %s156
    %p168 = scmp.eq.s32.totalorder %s31, 1
    %p169 = por %p167, %p168
    %p171 = scmp.ne.s32.totalorder %s156, %s170
    %p172 = scmp.eq.s32.totalorder %s31, 0
    %p173 = por %p171, %p172
    %s175 = sadd.s32 %s174, 1
    %p178 = scmp.eq.s32.totalorder %s25, 1
    %p179 = scmp.ne.s32.totalorder %s174, %s176
    %p180 = scmp.eq.s32.totalorder %s25, 0
    %p181 = por %p179, %p180
    %p182 = scmp.ne.s32.totalorder %s174, %s176
    %p183 = scmp.eq.s32.totalorder %s30, 1
    %p184 = por %p182, %p183
    %p185 = scmp.ne.s32.totalorder %s176, %s177
    %p186 = scmp.eq.s32.totalorder %s30, 0
    %p187 = por %p185, %p186
    %p188 = scmp.ne.s32.totalorder %s176, %s177
    %p189 = scmp.eq.s32.totalorder %s31, 1
    %p190 = por %p188, %p189
    %p192 = scmp.ne.s32.totalorder %s177, %s191
    %p193 = scmp.eq.s32.totalorder %s31, 0
    %p194 = por %p192, %p193
    %s196 = sadd.s32 %s195, 1
    %p199 = scmp.eq.s32.totalorder %s25, 1
    %p200 = scmp.ne.s32.totalorder %s195, %s197
    %p201 = scmp.eq.s32.totalorder %s25, 0
    %p202 = por %p200, %p201
    %p203 = scmp.ne.s32.totalorder %s195, %s197
    %p204 = scmp.eq.s32.totalorder %s30, 1
    %p205 = por %p203, %p204
    %p206 = scmp.ne.s32.totalorder %s197, %s198
    %p207 = scmp.eq.s32.totalorder %s30, 0
    %p208 = por %p206, %p207
    %p209 = scmp.ne.s32.totalorder %s197, %s198
    %p210 = scmp.eq.s32.totalorder %s31, 1
    %p211 = por %p209, %p210
    %p213 = scmp.ne.s32.totalorder %s198, %s212
    %p214 = scmp.eq.s32.totalorder %s31, 0
    %p215 = por %p213, %p214
    %s217 = sadd.s32 %s216, 1
    %p220 = scmp.eq.s32.totalorder %s25, 1
    %p221 = scmp.ne.s32.totalorder %s216, %s218
    %p222 = scmp.eq.s32.totalorder %s25, 0
    %p223 = por %p221, %p222
    %p224 = scmp.ne.s32.totalorder %s216, %s218
    %p225 = scmp.eq.s32.totalorder %s30, 1
    %p226 = por %p224, %p225
    %p227 = scmp.ne.s32.totalorder %s218, %s219
    %p228 = scmp.eq.s32.totalorder %s30, 0
    %p229 = por %p227, %p228
    %p230 = scmp.ne.s32.totalorder %s218, %s219
    %p231 = scmp.eq.s32.totalorder %s31, 1
    %p232 = por %p230, %p231
    %p234 = scmp.ne.s32.totalorder %s219, %s233
    %p235 = scmp.eq.s32.totalorder %s31, 0
    %p236 = por %p234, %p235
    %s238 = sadd.s32 %s237, 1
    %p241 = scmp.eq.s32.totalorder %s25, 1
    %p242 = scmp.ne.s32.totalorder %s237, %s239
    %p243 = scmp.eq.s32.totalorder %s25, 0
    %p244 = por %p242, %p243
    %p245 = scmp.ne.s32.totalorder %s237, %s239
    %p246 = scmp.eq.s32.totalorder %s30, 1
    %p247 = por %p245, %p246
    %p248 = scmp.ne.s32.totalorder %s239, %s240
    %p249 = scmp.eq.s32.totalorder %s30, 0
    %p250 = por %p248, %p249
    %p251 = scmp.ne.s32.totalorder %s239, %s240
    %p252 = scmp.eq.s32.totalorder %s31, 1
    %p253 = por %p251, %p252
    %p255 = scmp.ne.s32.totalorder %s240, %s254
    %p256 = scmp.eq.s32.totalorder %s31, 0
    %p257 = por %p255, %p256
    %s259 = sadd.s32 %s258, 1
    %p262 = scmp.eq.s32.totalorder %s25, 1
    %p263 = scmp.ne.s32.totalorder %s258, %s260
    %p264 = scmp.eq.s32.totalorder %s25, 0
    %p265 = por %p263, %p264
    %p266 = scmp.ne.s32.totalorder %s258, %s260
    %p267 = scmp.eq.s32.totalorder %s30, 1
    %p268 = por %p266, %p267
    %p269 = scmp.ne.s32.totalorder %s260, %s261
    %p270 = scmp.eq.s32.totalorder %s30, 0
    %p271 = por %p269, %p270
    %p272 = scmp.ne.s32.totalorder %s260, %s261
    %p273 = scmp.eq.s32.totalorder %s31, 1
    %p274 = por %p272, %p273
    %p276 = scmp.ne.s32.totalorder %s261, %s275
    %p277 = scmp.eq.s32.totalorder %s31, 0
    %p278 = por %p276, %p277
    %s280 = sadd.s32 %s279, 1
    %p283 = scmp.eq.s32.totalorder %s25, 1
    %p284 = scmp.ne.s32.totalorder %s279, %s281
    %p285 = scmp.eq.s32.totalorder %s25, 0
    %p286 = por %p284, %p285
    %p287 = scmp.ne.s32.totalorder %s279, %s281
    %p288 = scmp.eq.s32.totalorder %s30, 1
    %p289 = por %p287, %p288
    %p290 = scmp.ne.s32.totalorder %s281, %s282
    %p291 = scmp.eq.s32.totalorder %s30, 0
    %p292 = por %p290, %p291
    %p293 = scmp.ne.s32.totalorder %s281, %s282
    %p294 = scmp.eq.s32.totalorder %s31, 1
    %p295 = por %p293, %p294
    %p297 = scmp.ne.s32.totalorder %s282, %s296
    %p298 = scmp.eq.s32.totalorder %s31, 0
    %p299 = por %p297, %p298
    %s301 = sadd.s32 %s300, 1
    %p304 = scmp.eq.s32.totalorder %s25, 1
    %p305 = scmp.ne.s32.totalorder %s300, %s302
    %p306 = scmp.eq.s32.totalorder %s25, 0
    %p307 = por %p305, %p306
    %p308 = scmp.ne.s32.totalorder %s300, %s302
    %p309 = scmp.eq.s32.totalorder %s30, 1
    %p310 = por %p308, %p309
    %p311 = scmp.ne.s32.totalorder %s302, %s303
    %p312 = scmp.eq.s32.totalorder %s30, 0
    %p313 = por %p311, %p312
    %p314 = scmp.ne.s32.totalorder %s302, %s303
    %p315 = scmp.eq.s32.totalorder %s31, 1
    %p316 = por %p314, %p315
    %p318 = scmp.ne.s32.totalorder %s303, %s317
    %p319 = scmp.eq.s32.totalorder %s31, 0
    %p320 = por %p318, %p319
    %s322 = sadd.s32 %s321, 1
    %p325 = scmp.eq.s32.totalorder %s25, 1
    %p326 = scmp.ne.s32.totalorder %s321, %s323
    %p327 = scmp.eq.s32.totalorder %s25, 0
    %p328 = por %p326, %p327
    %p329 = scmp.ne.s32.totalorder %s321, %s323
    %p330 = scmp.eq.s32.totalorder %s30, 1
    %p331 = por %p329, %p330
    %p332 = scmp.ne.s32.totalorder %s323, %s324
    %p333 = scmp.eq.s32.totalorder %s30, 0
    %p334 = por %p332, %p333
    %p335 = scmp.ne.s32.totalorder %s323, %s324
    %p336 = scmp.eq.s32.totalorder %s31, 1
    %p337 = por %p335, %p336
    %p339 = scmp.ne.s32.totalorder %s324, %s338
    %p340 = scmp.eq.s32.totalorder %s31, 0
    %p341 = por %p339, %p340
    %s343 = sadd.s32 %s342, 1
    %p346 = scmp.eq.s32.totalorder %s25, 1
    %p347 = scmp.ne.s32.totalorder %s342, %s344
    %p348 = scmp.eq.s32.totalorder %s25, 0
    %p349 = por %p347, %p348
    %p350 = scmp.ne.s32.totalorder %s342, %s344
    %p351 = scmp.eq.s32.totalorder %s30, 1
    %p352 = por %p350, %p351
    %p353 = scmp.ne.s32.totalorder %s344, %s345
    %p354 = scmp.eq.s32.totalorder %s30, 0
    %p355 = por %p353, %p354
    %p356 = scmp.ne.s32.totalorder %s344, %s345
    %p357 = scmp.eq.s32.totalorder %s31, 1
    %p358 = por %p356, %p357
    %p360 = scmp.ne.s32.totalorder %s345, %s359
    %p361 = scmp.eq.s32.totalorder %s31, 0
    %p362 = por %p360, %p361
    %s364 = sadd.s32 %s363, 1
    %p367 = scmp.eq.s32.totalorder %s25, 1
    %p368 = scmp.ne.s32.totalorder %s363, %s365
    %p369 = scmp.eq.s32.totalorder %s25, 0
    %p370 = por %p368, %p369
    %p371 = scmp.ne.s32.totalorder %s363, %s365
    %p372 = scmp.eq.s32.totalorder %s30, 1
    %p373 = por %p371, %p372
    %p374 = scmp.ne.s32.totalorder %s365, %s366
    %p375 = scmp.eq.s32.totalorder %s30, 0
    %p376 = por %p374, %p375
    %p377 = scmp.ne.s32.totalorder %s365, %s366
    %p378 = scmp.eq.s32.totalorder %s31, 1
    %p379 = por %p377, %p378
    %p381 = scmp.ne.s32.totalorder %s366, %s380
    %p382 = scmp.eq.s32.totalorder %s31, 0
    %p383 = por %p381, %p382
    %s384 = ssub.s32 %s25, %s32
    %p385 = scmp.eq.s32.totalorder %s384, 0
    %s387 = sadd.s32 %s386, 1
    %s388 = scalar_select %p385, %s386, %s387
    %p391 = pneg %p385
    %p392 = scmp.eq.s32.totalorder %s25, 1
    %p393 = por %p391, %p392
    %p394 = scmp.ne.s32.totalorder %s386, %s389
    %p395 = scmp.eq.s32.totalorder %s25, 0
    %p396 = por %p394, %p395
    %p397 = scmp.ne.s32.totalorder %s386, %s389
    %p398 = scmp.eq.s32.totalorder %s30, 1
    %p399 = por %p397, %p398
    %p400 = scmp.ne.s32.totalorder %s389, %s390
    %p401 = scmp.eq.s32.totalorder %s30, 0
    %p402 = por %p400, %p401
    %p403 = scmp.ne.s32.totalorder %s389, %s390
    %p404 = scmp.eq.s32.totalorder %s31, 1
    %p405 = por %p403, %p404
    %p407 = scmp.ne.s32.totalorder %s390, %s406
    %p408 = scmp.eq.s32.totalorder %s31, 0
    %p409 = por %p407, %p408
    %s410 = ssub.s32 %s25, %s32
    %p411 = scmp.eq.s32.totalorder %s410, 0
    %s413 = sadd.s32 %s412, 1
    %s414 = scalar_select %p411, %s412, %s413
    %p417 = pneg %p411
    %p418 = scmp.eq.s32.totalorder %s25, 1
    %p419 = por %p417, %p418
    %p420 = scmp.ne.s32.totalorder %s412, %s415
    %p421 = scmp.eq.s32.totalorder %s25, 0
    %p422 = por %p420, %p421
    %p423 = scmp.ne.s32.totalorder %s412, %s415
    %p424 = scmp.eq.s32.totalorder %s30, 1
    %p425 = por %p423, %p424
    %p426 = scmp.ne.s32.totalorder %s415, %s416
    %p427 = scmp.eq.s32.totalorder %s30, 0
    %p428 = por %p426, %p427
    %p429 = scmp.ne.s32.totalorder %s415, %s416
    %p430 = scmp.eq.s32.totalorder %s31, 1
    %p431 = por %p429, %p430
    %p433 = scmp.ne.s32.totalorder %s416, %s432
    %p434 = scmp.eq.s32.totalorder %s31, 0
    %p435 = por %p433, %p434
    %s436 = ssub.s32 %s25, %s32
    %p437 = scmp.eq.s32.totalorder %s436, 0
    %s439 = sadd.s32 %s438, 1
    %s440 = scalar_select %p437, %s438, %s439
    %p443 = pneg %p437
    %p444 = scmp.eq.s32.totalorder %s25, 1
    %p445 = por %p443, %p444
    %p446 = scmp.ne.s32.totalorder %s438, %s441
    %p447 = scmp.eq.s32.totalorder %s25, 0
    %p448 = por %p446, %p447
    %p449 = scmp.ne.s32.totalorder %s438, %s441
    %p450 = scmp.eq.s32.totalorder %s30, 1
    %p451 = por %p449, %p450
    %p452 = scmp.ne.s32.totalorder %s441, %s442
    %p453 = scmp.eq.s32.totalorder %s30, 0
    %p454 = por %p452, %p453
    %p455 = scmp.ne.s32.totalorder %s441, %s442
    %p456 = scmp.eq.s32.totalorder %s31, 1
    %p457 = por %p455, %p456
    %p459 = scmp.ne.s32.totalorder %s442, %s458
    %p460 = scmp.eq.s32.totalorder %s31, 0
    %p461 = por %p459, %p460
    %p462 = scmp.le.s32.totalorder 1, %s25
    %p463 = scmp.lt.s32.totalorder %s25, 3
    %p464 = pnand %p462, %p463
    %p465 = pneg %p464
    // Predicated region
    $region9: #{resc_backbone_forward.3} parent=5 // pred_check
      _
    $region10: #{resc_backbone_forward.3} parent=5 // pred_check_branch
      %467 = sbr.rel (%p464) target = $region12
    $region11: #{resc_backbone_forward.3} parent=5 // pred_region
      %s468 = ssub.s32 %s25, 1
      // Predicated region
      $region13: #{resc_backbone_forward.3} parent=11 // pred_check
        %p469 = pneg %p124
      $region14: #{resc_backbone_forward.3} parent=11 // pred_check_branch
        %471 = sbr.rel (%p469) target = $region16
      $region15: #{resc_backbone_forward.3} parent=11 // pred_region
        _
      $region16: #{resc_backbone_forward.3} parent=11 // pred_fallthru
        _
      // Predicated region
      $region17: #{resc_backbone_forward.3} parent=11 // pred_check
        %p472 = pneg %p145
      $region18: #{resc_backbone_forward.3} parent=11 // pred_check_branch
        %474 = sbr.rel (%p472) target = $region20
      $region19: #{resc_backbone_forward.3} parent=11 // pred_region
        _
      $region20: #{resc_backbone_forward.3} parent=11 // pred_fallthru
        _
      // Predicated region
      $region21: #{resc_backbone_forward.3} parent=11 // pred_check
        %p475 = pneg %p166
      $region22: #{resc_backbone_forward.3} parent=11 // pred_check_branch
        %477 = sbr.rel (%p475) target = $region24
      $region23: #{resc_backbone_forward.3} parent=11 // pred_region
        _
      $region24: #{resc_backbone_forward.3} parent=11 // pred_fallthru
        _
      // Predicated region
      $region25: #{resc_backbone_forward.3} parent=11 // pred_check
        %p478 = pneg %p187
      $region26: #{resc_backbone_forward.3} parent=11 // pred_check_branch
        %480 = sbr.rel (%p478) target = $region28
      $region27: #{resc_backbone_forward.3} parent=11 // pred_region
        _
      $region28: #{resc_backbone_forward.3} parent=11 // pred_fallthru
        _
      // Predicated region
      $region29: #{resc_backbone_forward.3} parent=11 // pred_check
        %p481 = pneg %p208
      $region30: #{resc_backbone_forward.3} parent=11 // pred_check_branch
        %483 = sbr.rel (%p481) target = $region32
      $region31: #{resc_backbone_forward.3} parent=11 // pred_region
        _
      $region32: #{resc_backbone_forward.3} parent=11 // pred_fallthru
        _
      // Predicated region
      $region33: #{resc_backbone_forward.3} parent=11 // pred_check
        %p484 = pneg %p229
      $region34: #{resc_backbone_forward.3} parent=11 // pred_check_branch
        %486 = sbr.rel (%p484) target = $region36
      $region35: #{resc_backbone_forward.3} parent=11 // pred_region
        _
      $region36: #{resc_backbone_forward.3} parent=11 // pred_fallthru
        _
      // Predicated region
      $region37: #{resc_backbone_forward.3} parent=11 // pred_check
        %p487 = pneg %p250
      $region38: #{resc_backbone_forward.3} parent=11 // pred_check_branch
        %489 = sbr.rel (%p487) target = $region40
      $region39: #{resc_backbone_forward.3} parent=11 // pred_region
        _
      $region40: #{resc_backbone_forward.3} parent=11 // pred_fallthru
        _
      // Predicated region
      $region41: #{resc_backbone_forward.3} parent=11 // pred_check
        %p490 = pneg %p271
      $region42: #{resc_backbone_forward.3} parent=11 // pred_check_branch
        %492 = sbr.rel (%p490) target = $region44
      $region43: #{resc_backbone_forward.3} parent=11 // pred_region
        _
      $region44: #{resc_backbone_forward.3} parent=11 // pred_fallthru
        _
      // Predicated region
      $region45: #{resc_backbone_forward.3} parent=11 // pred_check
        %p493 = pneg %p292
      $region46: #{resc_backbone_forward.3} parent=11 // pred_check_branch
        %495 = sbr.rel (%p493) target = $region48
      $region47: #{resc_backbone_forward.3} parent=11 // pred_region
        _
      $region48: #{resc_backbone_forward.3} parent=11 // pred_fallthru
        _
      // Predicated region
      $region49: #{resc_backbone_forward.3} parent=11 // pred_check
        %p496 = pneg %p313
      $region50: #{resc_backbone_forward.3} parent=11 // pred_check_branch
        %498 = sbr.rel (%p496) target = $region52
      $region51: #{resc_backbone_forward.3} parent=11 // pred_region
        _
      $region52: #{resc_backbone_forward.3} parent=11 // pred_fallthru
        _
      // Predicated region
      $region53: #{resc_backbone_forward.3} parent=11 // pred_check
        %p499 = pneg %p334
      $region54: #{resc_backbone_forward.3} parent=11 // pred_check_branch
        %501 = sbr.rel (%p499) target = $region56
      $region55: #{resc_backbone_forward.3} parent=11 // pred_region
        _
      $region56: #{resc_backbone_forward.3} parent=11 // pred_fallthru
        _
      // Predicated region
      $region57: #{resc_backbone_forward.3} parent=11 // pred_check
        %p502 = pneg %p355
      $region58: #{resc_backbone_forward.3} parent=11 // pred_check_branch
        %504 = sbr.rel (%p502) target = $region60
      $region59: #{resc_backbone_forward.3} parent=11 // pred_region
        _
      $region60: #{resc_backbone_forward.3} parent=11 // pred_fallthru
        _
      // Predicated region
      $region61: #{resc_backbone_forward.3} parent=11 // pred_check
        %p505 = pneg %p376
      $region62: #{resc_backbone_forward.3} parent=11 // pred_check_branch
        %507 = sbr.rel (%p505) target = $region64
      $region63: #{resc_backbone_forward.3} parent=11 // pred_region
        _
      $region64: #{resc_backbone_forward.3} parent=11 // pred_fallthru
        _
    $region12: #{resc_backbone_forward.3} parent=5 // pred_fallthru
      _
    %p508 = scmp.lt.s32.totalorder %s25, 2
    // Predicated region
    $region65: #{resc_backbone_forward.3} parent=5 // pred_check
      %p509 = pneg %p508
    $region66: #{resc_backbone_forward.3} parent=5 // pred_check_branch
      %511 = sbr.rel (%p509) target = $region68
    $region67: #{resc_backbone_forward.3} parent=5 // pred_region
      // Predicated region
      $region69: #{resc_backbone_forward.3} parent=67 // pred_check
        %p512 = pneg %p45
      $region70: #{resc_backbone_forward.3} parent=67 // pred_check_branch
        %514 = sbr.rel (%p512) target = $region72
      $region71: #{resc_backbone_forward.3} parent=67 // pred_region
        %p515 = scmp.lt.s32.totalorder %s25, 1
        %s516 = scalar_select %p515, %s25, 1
        %s517 = smul.addr %s516, 16
        %s518 = smul.addr %s517, 4
        %s519 = scalar_lea.vmem %s0, %s518
      $region72: #{resc_backbone_forward.3} parent=67 // pred_fallthru
        _
      // Predicated region
      $region73: #{resc_backbone_forward.3} parent=67 // pred_check
        %p520 = pneg %p71
      $region74: #{resc_backbone_forward.3} parent=67 // pred_check_branch
        %522 = sbr.rel (%p520) target = $region76
      $region75: #{resc_backbone_forward.3} parent=67 // pred_region
        %p523 = scmp.lt.s32.totalorder %s25, 1
        %s524 = scalar_select %p523, %s25, 1
        %s525 = smul.addr %s524, 8
        %s526 = scalar_lea.vmem %s1, %s525
      $region76: #{resc_backbone_forward.3} parent=67 // pred_fallthru
        _
      // Predicated region
      $region77: #{resc_backbone_forward.3} parent=67 // pred_check
        %p527 = pneg %p97
      $region78: #{resc_backbone_forward.3} parent=67 // pred_check_branch
        %529 = sbr.rel (%p527) target = $region80
      $region79: #{resc_backbone_forward.3} parent=67 // pred_region
        %p530 = scmp.lt.s32.totalorder %s25, 1
        %s531 = scalar_select %p530, %s25, 1
        %s532 = smul.addr %s531, 8
        %s533 = scalar_lea.vmem %s2, %s532
      $region80: #{resc_backbone_forward.3} parent=67 // pred_fallthru
        _
    $region68: #{resc_backbone_forward.3} parent=5 // pred_fallthru
      _
    %p534 = scmp.le.s32.totalorder 1, %s25
    %p535 = scmp.lt.s32.totalorder %s25, 3
    %p536 = pnand %p534, %p535
    %p537 = pneg %p536
    // Predicated region
    $region81: #{resc_backbone_forward.3} parent=5 // pred_check
      _
    $region82: #{resc_backbone_forward.3} parent=5 // pred_check_branch
      %539 = sbr.rel (%p536) target = $region84
    $region83: #{resc_backbone_forward.3} parent=5 // pred_region
      %s540 = ssub.s32 %s25, 1
      %p541 = scmp.lt.s32.totalorder %s30, 1
      %s542 = scalar_select %p541, %s30, 1
      %s543 = smul.addr %s542, 16
      %s544 = smul.addr %s543, 4
      %s545 = scalar_lea.vmem %s0, %s544
      %p546 = pneg %p51
      %p547 = pneg %p48
      %p548 = scmp.lt.s32.totalorder %s30, 1
      %s549 = scalar_select %p548, %s30, 1
      %s550 = smul.addr %s549, 8
      %s551 = scalar_lea.vmem %s1, %s550
      %p552 = pneg %p77
      %p553 = pneg %p74
      %p554 = scmp.lt.s32.totalorder %s30, 1
      %s555 = scalar_select %p554, %s30, 1
      %s556 = smul.addr %s555, 8
      %s557 = scalar_lea.vmem %s2, %s556
      %p558 = pneg %p103
      %p559 = pneg %p100
      %p560 = pneg %p124
      %p561 = pneg %p121
      %p562 = pneg %p145
      %p563 = pneg %p142
      %p564 = pneg %p166
      %p565 = pneg %p163
      %p566 = pneg %p187
      %p567 = pneg %p184
      %p568 = pneg %p208
      %p569 = pneg %p205
      %p570 = pneg %p229
      %p571 = pneg %p226
      %p572 = pneg %p250
      %p573 = pneg %p247
      %p574 = pneg %p271
      %p575 = pneg %p268
      %p576 = pneg %p292
      %p577 = pneg %p289
      %p578 = pneg %p313
      %p579 = pneg %p310
      %p580 = pneg %p334
      %p581 = pneg %p331
      %p582 = pneg %p355
      %p583 = pneg %p352
      %p584 = pneg %p376
      %p585 = pneg %p373
      %p586 = pneg %p402
      %p587 = pneg %p399
      %p588 = scmp.lt.s32.totalorder %s30, 1
      %s589 = scalar_select %p588, %s30, 1
      %s590 = smul.addr %s589, 8
      %s591 = smul.addr %s590, 8
      %s592 = scalar_lea.vmem %s16, %s591
      %p593 = pneg %p428
      %p594 = pneg %p425
      %p595 = scmp.lt.s32.totalorder %s30, 1
      %s596 = scalar_select %p595, %s30, 1
      %s597 = smul.addr %s596, 8
      %s598 = scalar_lea.vmem %s17, %s597
      %p599 = pneg %p454
      %p600 = pneg %p451
      %p601 = scmp.lt.s32.totalorder %s30, 1
      %s602 = scalar_select %p601, %s30, 1
      %s603 = smul.addr %s602, 8
      %s604 = scalar_lea.vmem %s18, %s603
      %p605 = scmp.lt.s32.totalorder %s30, 1
      %s606 = scalar_select %p605, %s30, 1
      %s607 = smul.addr %s606, 16
      %s608 = smul.addr %s607, 4
      %s609 = scalar_lea.vmem %s0, %s608
      %p610 = scmp.lt.s32.totalorder %s30, 1
      %s611 = scalar_select %p610, %s30, 1
      %s612 = smul.addr %s611, 8
      %s613 = scalar_lea.vmem %s1, %s612
      %p614 = scmp.lt.s32.totalorder %s30, 1
      %s615 = scalar_select %p614, %s30, 1
      %s616 = smul.addr %s615, 8
      %s617 = scalar_lea.vmem %s2, %s616
      %p618 = scmp.lt.s32.totalorder %s30, 1
      %s619 = scalar_select %p618, %s30, 1
      %s620 = smul.addr %s619, 8
      %s621 = smul.addr %s620, 8
      %s622 = scalar_lea.vmem %s16, %s621
      %p623 = scmp.lt.s32.totalorder %s30, 1
      %s624 = scalar_select %p623, %s30, 1
      %s625 = smul.addr %s624, 8
      %s626 = scalar_lea.vmem %s17, %s625
      %p627 = scmp.lt.s32.totalorder %s30, 1
      %s628 = scalar_select %p627, %s30, 1
      %s629 = smul.addr %s628, 8
      %s630 = scalar_lea.vmem %s18, %s629
      %v632 = vld [vmem:[%s613] sm:$0xff]
      %v633 = vld [vmem:[%s617] sm:$0xff]
      %v634 = vld [vmem:[%s609] sm:$0xff]
      %v635 = vld [vmem:[%s609 + $0x8] sm:$0xff]
      %v636 = vld [vmem:[%s609 + $0x10] sm:$0xff]
      %v637 = vld [vmem:[%s609 + $0x18] sm:$0xff]
      %v638 = vld [vmem:[%s609 + $0x20] sm:$0xff]
      %v639 = vld [vmem:[%s609 + $0x28] sm:$0xff]
      %v640 = vld [vmem:[%s609 + $0x30] sm:$0xff]
      %v641 = vld [vmem:[%s609 + $0x38] sm:$0xff]
      %v642 = vld [vmem:[%s3] sm:$0xf]
      %v643 = vld [vmem:[%s3 + $0x4] sm:$0xf]
      %v644 = vld [vmem:[%s3 + $0x8] sm:$0xf]
      %v645 = vld [vmem:[%s3 + $0xc] sm:$0xf]
      %v646 = vld [vmem:[%s3 + $0x10] sm:$0xf]
      %v647 = vld [vmem:[%s3 + $0x14] sm:$0xf]
      %v648 = vld [vmem:[%s3 + $0x18] sm:$0xf]
      %v649 = vld [vmem:[%s3 + $0x1c] sm:$0xf]
      %v650 = vld [vmem:[%s3 + $0x20] sm:$0xf]
      %v651 = vld [vmem:[%s3 + $0x24] sm:$0xf]
      %v652 = vld [vmem:[%s3 + $0x28] sm:$0xf]
      %v653 = vld [vmem:[%s3 + $0x2c] sm:$0xf]
      %v654 = vld [vmem:[%s3 + $0x30] sm:$0xf]
      %v655 = vld [vmem:[%s3 + $0x34] sm:$0xf]
      %v656 = vld [vmem:[%s3 + $0x38] sm:$0xf]
      %v657 = vld [vmem:[%s3 + $0x3c] sm:$0xf]
      %v658 = vld [vmem:[%s3 + $0x40] sm:$0xf]
      %v659 = vld [vmem:[%s3 + $0x44] sm:$0xf]
      %v660 = vld [vmem:[%s3 + $0x48] sm:$0xf]
      %v661 = vld [vmem:[%s3 + $0x4c] sm:$0xf]
      %v662 = vld [vmem:[%s3 + $0x50] sm:$0xf]
      %v663 = vld [vmem:[%s3 + $0x54] sm:$0xf]
      %v664 = vld [vmem:[%s3 + $0x58] sm:$0xf]
      %v665 = vld [vmem:[%s3 + $0x5c] sm:$0xf]
      %v666 = vld [vmem:[%s3 + $0x60] sm:$0xf]
      %v667 = vld [vmem:[%s3 + $0x64] sm:$0xf]
      %v668 = vld [vmem:[%s3 + $0x68] sm:$0xf]
      %v669 = vld [vmem:[%s3 + $0x6c] sm:$0xf]
      %v670 = vld [vmem:[%s3 + $0x70] sm:$0xf]
      %v671 = vld [vmem:[%s3 + $0x74] sm:$0xf]
      %v672 = vld [vmem:[%s3 + $0x78] sm:$0xf]
      %v673 = vld [vmem:[%s3 + $0x7c] sm:$0xf]
      %v682 = vunpack.c.l.b16 %v634
      %v683 = vunpack.c.h.b16 %v634
      %v684 = vunpack.c.l.b16 %v635
      %v685 = vunpack.c.h.b16 %v635
      %v686 = vunpack.c.l.b16 %v636
      %v687 = vunpack.c.h.b16 %v636
      %v688 = vunpack.c.l.b16 %v637
      %v689 = vunpack.c.h.b16 %v637
      %v690 = vunpack.c.l.b16 %v638
      %v691 = vunpack.c.h.b16 %v638
      %v692 = vunpack.c.l.b16 %v639
      %v693 = vunpack.c.h.b16 %v639
      %v694 = vunpack.c.l.b16 %v640
      %v695 = vunpack.c.h.b16 %v640
      %v696 = vunpack.c.l.b16 %v641
      %v697 = vunpack.c.h.b16 %v641
      %v698 = vpack.c.b16 %v684, %v682
      %v699 = vpack.c.b16 %v685, %v683
      %v700 = vpack.c.b16 %v688, %v686
      %v701 = vpack.c.b16 %v689, %v687
      %v702 = vpack.c.b16 %v692, %v690
      %v703 = vpack.c.b16 %v693, %v691
      %v704 = vpack.c.b16 %v696, %v694
      %v705 = vpack.c.b16 %v697, %v695
      %v746 = vunpack.c.l.b16 %v642
      %v747 = vunpack.c.l.b16 %v643
      %v748 = vunpack.c.l.b16 %v644
      %v749 = vunpack.c.l.b16 %v645
      %v750 = vunpack.c.l.b16 %v646
      %v751 = vunpack.c.l.b16 %v647
      %v752 = vunpack.c.l.b16 %v648
      %v753 = vunpack.c.l.b16 %v649
      %v754 = vunpack.c.l.b16 %v650
      %v755 = vunpack.c.l.b16 %v651
      %v756 = vunpack.c.l.b16 %v652
      %v757 = vunpack.c.l.b16 %v653
      %v758 = vunpack.c.l.b16 %v654
      %v759 = vunpack.c.l.b16 %v655
      %v760 = vunpack.c.l.b16 %v656
      %v761 = vunpack.c.l.b16 %v657
      %v762 = vunpack.c.l.b16 %v658
      %v763 = vunpack.c.l.b16 %v659
      %v764 = vunpack.c.l.b16 %v660
      %v765 = vunpack.c.l.b16 %v661
      %v766 = vunpack.c.l.b16 %v662
      %v767 = vunpack.c.l.b16 %v663
      %v768 = vunpack.c.l.b16 %v664
      %v769 = vunpack.c.l.b16 %v665
      %v770 = vunpack.c.l.b16 %v666
      %v771 = vunpack.c.l.b16 %v667
      %v772 = vunpack.c.l.b16 %v668
      %v773 = vunpack.c.l.b16 %v669
      %v774 = vunpack.c.l.b16 %v670
      %v775 = vunpack.c.l.b16 %v671
      %v776 = vunpack.c.l.b16 %v672
      %v777 = vunpack.c.l.b16 %v673
      %v778 = vpack.c.b16 %v747, %v746
      %v779 = vpack.c.b16 %v749, %v748
      %v780 = vpack.c.b16 %v751, %v750
      %v781 = vpack.c.b16 %v753, %v752
      %v782 = vpack.c.b16 %v755, %v754
      %v783 = vpack.c.b16 %v757, %v756
      %v784 = vpack.c.b16 %v759, %v758
      %v785 = vpack.c.b16 %v761, %v760
      %v786 = vpack.c.b16 %v763, %v762
      %v787 = vpack.c.b16 %v765, %v764
      %v788 = vpack.c.b16 %v767, %v766
      %v789 = vpack.c.b16 %v769, %v768
      %v790 = vpack.c.b16 %v771, %v770
      %v791 = vpack.c.b16 %v773, %v772
      %v792 = vpack.c.b16 %v775, %v774
      %v793 = vpack.c.b16 %v777, %v776
      %810 = vmatprep.subr.bf16.mxu0 0
      %811 = vmatpush1.bf16.msra.mxu0 %v778
      %812 = vmatprep.subr.bf16.mxu0 0
      %813 = vmatpush1.bf16.msra.mxu0 %v779
      %814 = vmatprep.subr.bf16.mxu0 0
      %815 = vmatpush1.bf16.msra.mxu0 %v780
      %816 = vmatprep.subr.bf16.mxu0 0
      %817 = vmatpush1.bf16.msra.mxu0 %v781
      %818 = vmatprep.subr.bf16.mxu0 0
      %819 = vmatpush1.bf16.msra.mxu0 %v782
      %820 = vmatprep.subr.bf16.mxu0 0
      %821 = vmatpush1.bf16.msra.mxu0 %v783
      %822 = vmatprep.subr.bf16.mxu0 0
      %823 = vmatpush1.bf16.msra.mxu0 %v784
      %824 = vmatprep.subr.bf16.mxu0 0
      %825 = vmatpush1.bf16.msra.mxu0 %v785
      %826 = vmatprep.subr.bf16.mxu0 0
      %827 = vmatpush1.bf16.msra.mxu0 %v786
      %828 = vmatprep.subr.bf16.mxu0 0
      %829 = vmatpush1.bf16.msra.mxu0 %v787
      %830 = vmatprep.subr.bf16.mxu0 0
      %831 = vmatpush1.bf16.msra.mxu0 %v788
      %832 = vmatprep.subr.bf16.mxu0 0
      %833 = vmatpush1.bf16.msra.mxu0 %v789
      %834 = vmatprep.subr.bf16.mxu0 0
      %835 = vmatpush1.bf16.msra.mxu0 %v790
      %836 = vmatprep.subr.bf16.mxu0 0
      %837 = vmatpush1.bf16.msra.mxu0 %v791
      %838 = vmatprep.subr.bf16.mxu0 0
      %839 = vmatpush1.bf16.msra.mxu0 %v792
      %840 = vmatprep.subr.bf16.mxu0 0
      %841 = vmatpush1.bf16.msra.mxu0 %v793
      %842 = vmatprep.mubr.bf16.mxu0 %v699
      %843 = vmatmul.mubr.bf16.gmra.mrb[0].mxu0 %v698
      %v844 = vpop.f32.mrb[0].mxu0
      %v845 = vadd.f32 0.0, %v844
      %v846 = vpop.f32.mrb[0].mxu0
      %v847 = vpop.f32.mrb[0].mxu0
      %v848 = vadd.f32 0.0, %v847
      %v849 = vpop.f32.mrb[0].mxu0
      %850 = vmatprep.mubr.bf16.mxu0 %v701
      %851 = vmatmul.mubr.bf16.gmra.mrb[0].mxu0 %v700
      %v852 = vpop.f32.mrb[0].mxu0
      %v853 = vadd.f32 0.0, %v852
      %v854 = vpop.f32.mrb[0].mxu0
      %v855 = vpop.f32.mrb[0].mxu0
      %v856 = vadd.f32 0.0, %v855
      %v857 = vpop.f32.mrb[0].mxu0
      %858 = vmatprep.mubr.bf16.mxu0 %v703
      %859 = vmatmul.mubr.bf16.gmra.mrb[0].mxu0 %v702
      %v860 = vpop.f32.mrb[0].mxu0
      %v861 = vadd.f32 0.0, %v860
      %v862 = vpop.f32.mrb[0].mxu0
      %v863 = vpop.f32.mrb[0].mxu0
      %v864 = vadd.f32 0.0, %v863
      %v865 = vpop.f32.mrb[0].mxu0
      %866 = vmatprep.mubr.bf16.mxu0 %v705
      %867 = vmatmul.mubr.bf16.gmra.mrb[0].mxu0 %v704
      %v868 = vpop.f32.mrb[0].mxu0
      %v869 = vadd.f32 0.0, %v868
      %v870 = vpop.f32.mrb[0].mxu0
      %v871 = vpop.f32.mrb[0].mxu0
      %v872 = vadd.f32 0.0, %v871
      %v873 = vpop.f32.mrb[0].mxu0
      %874 = vdwg.mxu0
      %v875 = vmul.f32 %v845, 0.999995
      %v876 = vmul.f32 %v848, 0.999995
      %v877 = vmul.f32 %v853, 0.999995
      %v878 = vmul.f32 %v856, 0.999995
      %v879 = vmul.f32 %v861, 0.999995
      %v880 = vmul.f32 %v864, 0.999995
      %v881 = vmul.f32 %v869, 0.999995
      %v882 = vmul.f32 %v872, 0.999995
      %v883 = vmax.f32 %v875, 0.0
      %v884 = vmax.f32 %v876, 0.0
      %v885 = vmax.f32 %v877, 0.0
      %v886 = vmax.f32 %v878, 0.0
      %v887 = vmax.f32 %v879, 0.0
      %v888 = vmax.f32 %v880, 0.0
      %v889 = vmax.f32 %v881, 0.0
      %v890 = vmax.f32 %v882, 0.0
      %v891 = vmul.f32 %v883, %v883
      %v892 = vmul.f32 %v884, %v884
      %v893 = vmul.f32 %v885, %v885
      %v894 = vmul.f32 %v886, %v886
      %v895 = vmul.f32 %v887, %v887
      %v896 = vmul.f32 %v888, %v888
      %v897 = vmul.f32 %v889, %v889
      %v898 = vmul.f32 %v890, %v890
      %vm899 = vcmask 523264
      %v900 = vsel %vm899, %v891, 0.0
      %901 = vadd.xlane.f32.xlu0 %v900
      %v902 = vpop.xlane.xlu0 %901
      %v903 = vsel %vm899, %v892, 0.0
      %904 = vadd.xlane.f32.xlu0 %v903
      %v905 = vpop.xlane.xlu0 %904
      %v906 = vsel %vm899, %v893, 0.0
      %907 = vadd.xlane.f32.xlu0 %v906
      %v908 = vpop.xlane.xlu0 %907
      %v909 = vsel %vm899, %v894, 0.0
      %910 = vadd.xlane.f32.xlu0 %v909
      %v911 = vpop.xlane.xlu0 %910
      %v912 = vsel %vm899, %v895, 0.0
      %913 = vadd.xlane.f32.xlu0 %v912
      %v914 = vpop.xlane.xlu0 %913
      %v915 = vsel %vm899, %v896, 0.0
      %916 = vadd.xlane.f32.xlu0 %v915
      %v917 = vpop.xlane.xlu0 %916
      %v918 = vsel %vm899, %v897, 0.0
      %919 = vadd.xlane.f32.xlu0 %v918
      %v920 = vpop.xlane.xlu0 %919
      %v921 = vsel %vm899, %v898, 0.0
      %922 = vadd.xlane.f32.xlu0 %v921
      %v923 = vpop.xlane.xlu0 %922
      %v924 = vmax.f32 %v902, 1e-24
      %v925 = vmax.f32 %v905, 1e-24
      %v926 = vmax.f32 %v908, 1e-24
      %v927 = vmax.f32 %v911, 1e-24
      %v928 = vmax.f32 %v914, 1e-24
      %v929 = vmax.f32 %v917, 1e-24
      %v930 = vmax.f32 %v920, 1e-24
      %v931 = vmax.f32 %v923, 1e-24
      %v932 = vrsqrt.pop %v924
      %v933 = vrsqrt.pop %v925
      %v934 = vrsqrt.pop %v926
      %v935 = vrsqrt.pop %v927
      %v936 = vrsqrt.pop %v928
      %v937 = vrsqrt.pop %v929
      %v938 = vrsqrt.pop %v930
      %v939 = vrsqrt.pop %v931
      %v940 = vmul.f32 %v883, %v932
      %v941 = vmul.f32 %v884, %v933
      %v942 = vmul.f32 %v885, %v934
      %v943 = vmul.f32 %v886, %v935
      %v944 = vmul.f32 %v887, %v936
      %v945 = vmul.f32 %v888, %v937
      %v946 = vmul.f32 %v889, %v938
      %v947 = vmul.f32 %v890, %v939
      %v948 = vsel %vm899, %v940, 0.0
      %v949 = vsel %vm899, %v941, 0.0
      %v950 = vadd.f32 %v948, %v949
      %v951 = vsel %vm899, %v942, 0.0
      %v952 = vadd.f32 %v950, %v951
      %v953 = vsel %vm899, %v943, 0.0
      %v954 = vadd.f32 %v952, %v953
      %v955 = vsel %vm899, %v944, 0.0
      %v956 = vadd.f32 %v954, %v955
      %v957 = vsel %vm899, %v945, 0.0
      %v958 = vadd.f32 %v956, %v957
      %v959 = vsel %vm899, %v946, 0.0
      %v960 = vadd.f32 %v958, %v959
      %v961 = vsel %vm899, %v947, 0.0
      %v962 = vadd.f32 %v960, %v961
      %v963 = vrot.slane %v962, 4
      %v964 = vadd.f32 %v962, %v963
      %v965 = vrot.slane %v964, 2
      %v966 = vadd.f32 %v964, %v965
      %v967 = vrot.slane %v966, 1
      %v968 = vadd.f32 %v966, %v967
      %v969 = vrcp.pop 64.0
      %v970 = vmul.f32 %v968, %v969
      %v971 = vmul.f32 %v970, %v632
      %v972 = vpack.c.bf16 %v971, %v971
      %v973 = vld [vmem:[%s4] sm:$0xf]
      %v974 = vld [vmem:[%s4 + $0x4] sm:$0xf]
      %v975 = vld [vmem:[%s4 + $0x8] sm:$0xf]
      %v976 = vld [vmem:[%s4 + $0xc] sm:$0xf]
      %v977 = vld [vmem:[%s4 + $0x10] sm:$0xf]
      %v978 = vld [vmem:[%s4 + $0x14] sm:$0xf]
      %v979 = vld [vmem:[%s4 + $0x18] sm:$0xf]
      %v980 = vld [vmem:[%s4 + $0x1c] sm:$0xf]
      %v981 = vld [vmem:[%s5] sm:$0x1]
      %v983 = vlaneseq
      %v984 = vshrl.u32 %v983, 7
      %v985 = vsub.s32 0, %v984
      %v986 = vrot.slane %v981, %v985
      %v996 = vunpack.c.l.b16 %v973
      %v997 = vunpack.c.l.b16 %v974
      %v998 = vunpack.c.l.b16 %v975
      %v999 = vunpack.c.l.b16 %v976
      %v1000 = vunpack.c.l.b16 %v977
      %v1001 = vunpack.c.l.b16 %v978
      %v1002 = vunpack.c.l.b16 %v979
      %v1003 = vunpack.c.l.b16 %v980
      %v1004 = vpack.c.b16 %v997, %v996
      %v1005 = vpack.c.b16 %v999, %v998
      %v1006 = vpack.c.b16 %v1001, %v1000
      %v1007 = vpack.c.b16 %v1003, %v1002
      %v1013 = vsel %vm899, %v972, 0
      %1015 = vmatprep.subr.bf16.mxu0 0
      %1016 = vmatpush1.bf16.msra.mxu0 %v1004
      %1017 = vmatprep.subr.bf16.mxu0 0
      %1018 = vmatpush1.bf16.msra.mxu0 %v1005
      %1019 = vmatprep.subr.bf16.mxu0 0
      %1020 = vmatpush1.bf16.msra.mxu0 %v1006
      %1021 = vmatprep.subr.bf16.mxu0 0
      %1022 = vmatpush1.bf16.msra.mxu0 %v1007
      %1023 = vmatprep.subr.bf16.mxu0 0
      %1024 = vmatpush1.bf16.msra.mxu0 0
      %1025 = vmatprep.subr.bf16.mxu0 0
      %1026 = vmatpush1.bf16.msra.mxu0 0
      %1027 = vmatprep.subr.bf16.mxu0 0
      %1028 = vmatpush1.bf16.msra.mxu0 0
      %1029 = vmatprep.subr.bf16.mxu0 0
      %1030 = vmatpush1.bf16.msra.mxu0 0
      %1031 = vmatprep.subr.bf16.mxu0 0
      %1032 = vmatpush1.bf16.msra.mxu0 0
      %1033 = vmatprep.subr.bf16.mxu0 0
      %1034 = vmatpush1.bf16.msra.mxu0 0
      %1035 = vmatprep.subr.bf16.mxu0 0
      %1036 = vmatpush1.bf16.msra.mxu0 0
      %1037 = vmatprep.subr.bf16.mxu0 0
      %1038 = vmatpush1.bf16.msra.mxu0 0
      %1039 = vmatprep.subr.bf16.mxu0 0
      %1040 = vmatpush1.bf16.msra.mxu0 0
      %1041 = vmatprep.subr.bf16.mxu0 0
      %1042 = vmatpush1.bf16.msra.mxu0 0
      %1043 = vmatprep.subr.bf16.mxu0 0
      %1044 = vmatpush1.bf16.msra.mxu0 0
      %1045 = vmatprep.subr.bf16.mxu0 0
      %1046 = vmatpush1.bf16.msra.mxu0 0
      %1047 = vmatprep.mubr.bf16.mxu0 0
      %1048 = vmatmul.mubr.bf16.gmra.mrb[0].mxu0 %v1013
      %v1049 = vpop.f32.mrb[0].mxu0
      %v1050 = vadd.f32 %v986, %v1049
      %v1051 = vpop.f32.mrb[0].mxu0
      %v1052 = vpop.f32.mrb[0].mxu0
      %v1053 = vpop.f32.mrb[0].mxu0
      %1054 = vdwg.mxu0
      %v1055 = vtanh.pop %v1050
      %v1056 = vld [vmem:[%s6] sm:$0x1]
      %v1058 = vlaneseq
      %v1059 = vshrl.u32 %v1058, 7
      %v1060 = vsub.s32 0, %v1059
      %v1061 = vrot.slane %v1056, %v1060
      %v1063 = vmul.f32 %v1055, %v1061
      %vm1064 = vcmask 261120
      %v1065 = vsel %vm1064, %v1063, 0.0
      %1066 = vadd.xlane.f32.xlu0 %v1065
      %v1067 = vpop.xlane.xlu0 %1066
      %v1068 = vld [vmem:[%s7] sm:$0x1]
      %v1070 = vlaneseq
      %v1071 = vshrl.u32 %v1070, 7
      %v1072 = vsub.s32 0, %v1071
      %v1073 = vrot.slane %v1068, %v1072
      %v1075 = vadd.f32 %v1067, %v1073
      %v1076 = vmul.f32 %v1075, 10.0
      %vm1077 = vcmask 7168
      %v1078 = vsel %vm1077, %v1076, -inf
      %v1079 = vrot.slane %v1078, 4
      %v1080 = vmax.f32 %v1078, %v1079
      %v1081 = vrot.slane %v1080, 2
      %v1082 = vmax.f32 %v1080, %v1081
      %v1083 = vrot.slane %v1082, 1
      %v1084 = vmax.f32 %v1082, %v1083
      %v1085 = vsub.f32 %v1076, %v1084
      %v1086 = vmul.f32 %v1085, 1.442695
      %v1087 = vpow.pop %v1086
      %v1088 = vsel %vm1077, %v1087, 0.0
      %v1089 = vrot.slane %v1088, 4
      %v1090 = vadd.f32 %v1088, %v1089
      %v1091 = vrot.slane %v1090, 2
      %v1092 = vadd.f32 %v1090, %v1091
      %v1093 = vrot.slane %v1092, 1
      %v1094 = vadd.f32 %v1092, %v1093
      %v1095 = vrcp.pop %v1094
      %v1096 = vmul.f32 %v1087, %v1095
      %v1097 = vmul.f32 %v1096, %v633
      %v1098 = vsel %vm1077, %v1097, 0.0
      %v1099 = vrot.slane %v1098, 4
      %v1100 = vadd.f32 %v1098, %v1099
      %v1101 = vrot.slane %v1100, 2
      %v1102 = vadd.f32 %v1100, %v1101
      %v1103 = vrot.slane %v1102, 1
      %v1104 = vadd.f32 %v1102, %v1103
      %v1105 = vadd.f32 %v1104, 1e-08
      %v1106 = vrcp.pop %v1105
      %v1107 = vmul.f32 %v1097, %v1106
      %1109 = vset.pattern.permute.xlu0 0
      %1110 = vperm.xlu0 %1109, %v1107
      %v1111 = vpop.permute.xlu0 %1110
      %v1113 = vmul.f32 %v1111, %v632
      %v1114 = vsel %vm899, %v1113, 0.0
      %v1115 = vrot.slane %v1114, 4
      %v1116 = vadd.f32 %v1114, %v1115
      %v1117 = vrot.slane %v1116, 2
      %v1118 = vadd.f32 %v1116, %v1117
      %v1119 = vrot.slane %v1118, 1
      %v1120 = vadd.f32 %v1118, %v1119
      %v1121 = vpack.c.bf16 %v1120, %v1120
      %v1122 = vld [vmem:[%s8] sm:$0xf]
      %v1123 = vld [vmem:[%s8 + $0x4] sm:$0xf]
      %v1124 = vld [vmem:[%s8 + $0x8] sm:$0xf]
      %v1125 = vld [vmem:[%s8 + $0xc] sm:$0xf]
      %v1126 = vld [vmem:[%s8 + $0x10] sm:$0xf]
      %v1127 = vld [vmem:[%s8 + $0x14] sm:$0xf]
      %v1128 = vld [vmem:[%s8 + $0x18] sm:$0xf]
      %v1129 = vld [vmem:[%s8 + $0x1c] sm:$0xf]
      %v1130 = vld [vmem:[%s9] sm:$0x1]
      %v1139 = vunpack.c.l.b16 %v1122
      %v1140 = vunpack.c.l.b16 %v1123
      %v1141 = vunpack.c.l.b16 %v1124
      %v1142 = vunpack.c.l.b16 %v1125
      %v1143 = vunpack.c.l.b16 %v1126
      %v1144 = vunpack.c.l.b16 %v1127
      %v1145 = vunpack.c.l.b16 %v1128
      %v1146 = vunpack.c.l.b16 %v1129
      %v1147 = vpack.c.b16 %v1140, %v1139
      %v1148 = vpack.c.b16 %v1142, %v1141
      %v1149 = vpack.c.b16 %v1144, %v1143
      %v1150 = vpack.c.b16 %v1146, %v1145
      %v1156 = vsel %vm899, %v1121, 0
      %1158 = vmatprep.subr.bf16.mxu0 0
      %1159 = vmatpush1.bf16.msra.mxu0 %v1147
      %1160 = vmatprep.subr.bf16.mxu0 0
      %1161 = vmatpush1.bf16.msra.mxu0 %v1148
      %1162 = vmatprep.subr.bf16.mxu0 0
      %1163 = vmatpush1.bf16.msra.mxu0 %v1149
      %1164 = vmatprep.subr.bf16.mxu0 0
      %1165 = vmatpush1.bf16.msra.mxu0 %v1150
      %1166 = vmatprep.subr.bf16.mxu0 0
      %1167 = vmatpush1.bf16.msra.mxu0 0
      %1168 = vmatprep.subr.bf16.mxu0 0
      %1169 = vmatpush1.bf16.msra.mxu0 0
      %1170 = vmatprep.subr.bf16.mxu0 0
      %1171 = vmatpush1.bf16.msra.mxu0 0
      %1172 = vmatprep.subr.bf16.mxu0 0
      %1173 = vmatpush1.bf16.msra.mxu0 0
      %1174 = vmatprep.subr.bf16.mxu0 0
      %1175 = vmatpush1.bf16.msra.mxu0 0
      %1176 = vmatprep.subr.bf16.mxu0 0
      %1177 = vmatpush1.bf16.msra.mxu0 0
      %1178 = vmatprep.subr.bf16.mxu0 0
      %1179 = vmatpush1.bf16.msra.mxu0 0
      %1180 = vmatprep.subr.bf16.mxu0 0
      %1181 = vmatpush1.bf16.msra.mxu0 0
      %1182 = vmatprep.subr.bf16.mxu0 0
      %1183 = vmatpush1.bf16.msra.mxu0 0
      %1184 = vmatprep.subr.bf16.mxu0 0
      %1185 = vmatpush1.bf16.msra.mxu0 0
      %1186 = vmatprep.subr.bf16.mxu0 0
      %1187 = vmatpush1.bf16.msra.mxu0 0
      %1188 = vmatprep.subr.bf16.mxu0 0
      %1189 = vmatpush1.bf16.msra.mxu0 0
      %1190 = vmatprep.mubr.bf16.mxu0 0
      %1191 = vmatmul.mubr.bf16.gmra.mrb[0].mxu0 %v1156
      %v1192 = vpop.f32.mrb[0].mxu0
      %v1193 = vadd.f32 %v1130, %v1192
      %v1194 = vpop.f32.mrb[0].mxu0
      %v1195 = vpop.f32.mrb[0].mxu0
      %v1196 = vpop.f32.mrb[0].mxu0
      %1197 = vdwg.mxu0
      %v1198 = vtanh.pop %v1193
      %v1199 = vpack.c.bf16 %v941, %v940
      %v1200 = vpack.c.bf16 %v943, %v942
      %v1201 = vpack.c.bf16 %v945, %v944
      %v1202 = vpack.c.bf16 %v947, %v946
      %v1203 = vld [vmem:[%s10] sm:$0xf]
      %v1204 = vld [vmem:[%s10 + $0x4] sm:$0xf]
      %v1205 = vld [vmem:[%s10 + $0x8] sm:$0xf]
      %v1206 = vld [vmem:[%s10 + $0xc] sm:$0xf]
      %v1207 = vld [vmem:[%s10 + $0x10] sm:$0xf]
      %v1208 = vld [vmem:[%s10 + $0x14] sm:$0xf]
      %v1209 = vld [vmem:[%s10 + $0x18] sm:$0xf]
      %v1210 = vld [vmem:[%s10 + $0x1c] sm:$0xf]
      %v1211 = vld [vmem:[%s11] sm:$0xff]
      %v1212 = vld [vmem:[%s11 + $0x8] sm:$0xff]
      %v1213 = vld [vmem:[%s11 + $0x10] sm:$0xff]
      %v1214 = vld [vmem:[%s11 + $0x18] sm:$0xff]
      %v1215 = vld [vmem:[%s11 + $0x20] sm:$0xff]
      %v1216 = vld [vmem:[%s11 + $0x28] sm:$0xff]
      %v1217 = vld [vmem:[%s11 + $0x30] sm:$0xff]
      %v1218 = vld [vmem:[%s11 + $0x38] sm:$0xff]
      %v1227 = vunpack.c.l.b16 %v1203
      %v1228 = vunpack.c.l.b16 %v1204
      %v1229 = vunpack.c.l.b16 %v1205
      %v1230 = vunpack.c.l.b16 %v1206
      %v1231 = vunpack.c.l.b16 %v1207
      %v1232 = vunpack.c.l.b16 %v1208
      %v1233 = vunpack.c.l.b16 %v1209
      %v1234 = vunpack.c.l.b16 %v1210
      %v1235 = vpack.c.b16 %v1228, %v1227
      %v1236 = vpack.c.b16 %v1230, %v1229
      %v1237 = vpack.c.b16 %v1232, %v1231
      %v1238 = vpack.c.b16 %v1234, %v1233
      %v1244 = vsel %vm899, %v1199, 0
      %v1247 = vsel %vm899, %v1200, 0
      %v1250 = vsel %vm899, %v1201, 0
      %v1253 = vsel %vm899, %v1202, 0
      %1255 = vmatprep.subr.bf16.mxu0 0
      %1256 = vmatpush1.bf16.msra.mxu0 %v1235
      %1257 = vmatprep.subr.bf16.mxu0 0
      %1258 = vmatpush1.bf16.msra.mxu0 %v1236
      %1259 = vmatprep.subr.bf16.mxu0 0
      %1260 = vmatpush1.bf16.msra.mxu0 %v1237
      %1261 = vmatprep.subr.bf16.mxu0 0
      %1262 = vmatpush1.bf16.msra.mxu0 %v1238
      %1263 = vmatprep.subr.bf16.mxu0 0
      %1264 = vmatpush1.bf16.msra.mxu0 0
      %1265 = vmatprep.subr.bf16.mxu0 0
      %1266 = vmatpush1.bf16.msra.mxu0 0
      %1267 = vmatprep.subr.bf16.mxu0 0
      %1268 = vmatpush1.bf16.msra.mxu0 0
      %1269 = vmatprep.subr.bf16.mxu0 0
      %1270 = vmatpush1.bf16.msra.mxu0 0
      %1271 = vmatprep.subr.bf16.mxu0 0
      %1272 = vmatpush1.bf16.msra.mxu0 0
      %1273 = vmatprep.subr.bf16.mxu0 0
      %1274 = vmatpush1.bf16.msra.mxu0 0
      %1275 = vmatprep.subr.bf16.mxu0 0
      %1276 = vmatpush1.bf16.msra.mxu0 0
      %1277 = vmatprep.subr.bf16.mxu0 0
      %1278 = vmatpush1.bf16.msra.mxu0 0
      %1279 = vmatprep.subr.bf16.mxu0 0
      %1280 = vmatpush1.bf16.msra.mxu0 0
      %1281 = vmatprep.subr.bf16.mxu0 0
      %1282 = vmatpush1.bf16.msra.mxu0 0
      %1283 = vmatprep.subr.bf16.mxu0 0
      %1284 = vmatpush1.bf16.msra.mxu0 0
      %1285 = vmatprep.subr.bf16.mxu0 0
      %1286 = vmatpush1.bf16.msra.mxu0 0
      %1287 = vmatprep.mubr.bf16.mxu0 0
      %1288 = vmatmul.mubr.bf16.gmra.mrb[0].mxu0 %v1244
      %v1289 = vpop.f32.mrb[0].mxu0
      %v1290 = vadd.f32 %v1211, %v1289
      %v1291 = vpop.f32.mrb[0].mxu0
      %v1292 = vpop.f32.mrb[0].mxu0
      %v1293 = vadd.f32 %v1212, %v1292
      %v1294 = vpop.f32.mrb[0].mxu0
      %1295 = vmatprep.mubr.bf16.mxu0 0
      %1296 = vmatmul.mubr.bf16.gmra.mrb[0].mxu0 %v1247
      %v1297 = vpop.f32.mrb[0].mxu0
      %v1298 = vadd.f32 %v1213, %v1297
      %v1299 = vpop.f32.mrb[0].mxu0
      %v1300 = vpop.f32.mrb[0].mxu0
      %v1301 = vadd.f32 %v1214, %v1300
      %v1302 = vpop.f32.mrb[0].mxu0
      %1303 = vmatprep.mubr.bf16.mxu0 0
      %1304 = vmatmul.mubr.bf16.gmra.mrb[0].mxu0 %v1250
      %v1305 = vpop.f32.mrb[0].mxu0
      %v1306 = vadd.f32 %v1215, %v1305
      %v1307 = vpop.f32.mrb[0].mxu0
      %v1308 = vpop.f32.mrb[0].mxu0
      %v1309 = vadd.f32 %v1216, %v1308
      %v1310 = vpop.f32.mrb[0].mxu0
      %1311 = vmatprep.mubr.bf16.mxu0 0
      %1312 = vmatmul.mubr.bf16.gmra.mrb[0].mxu0 %v1253
      %v1313 = vpop.f32.mrb[0].mxu0
      %v1314 = vadd.f32 %v1217, %v1313
      %v1315 = vpop.f32.mrb[0].mxu0
      %v1316 = vpop.f32.mrb[0].mxu0
      %v1317 = vadd.f32 %v1218, %v1316
      %v1318 = vpop.f32.mrb[0].mxu0
      %1319 = vdwg.mxu0
      %v1320 = vsel %vm899, %v1290, 0.0
      %v1321 = vsel %vm899, %v1293, 0.0
      %v1322 = vadd.f32 %v1320, %v1321
      %v1323 = vsel %vm899, %v1298, 0.0
      %v1324 = vadd.f32 %v1322, %v1323
      %v1325 = vsel %vm899, %v1301, 0.0
      %v1326 = vadd.f32 %v1324, %v1325
      %v1327 = vsel %vm899, %v1306, 0.0
      %v1328 = vadd.f32 %v1326, %v1327
      %v1329 = vsel %vm899, %v1309, 0.0
      %v1330 = vadd.f32 %v1328, %v1329
      %v1331 = vsel %vm899, %v1314, 0.0
      %v1332 = vadd.f32 %v1330, %v1331
      %v1333 = vsel %vm899, %v1317, 0.0
      %v1334 = vadd.f32 %v1332, %v1333
      %v1335 = vrot.slane %v1334, 4
      %v1336 = vadd.f32 %v1334, %v1335
      %v1337 = vrot.slane %v1336, 2
      %v1338 = vadd.f32 %v1336, %v1337
      %v1339 = vrot.slane %v1338, 1
      %v1340 = vadd.f32 %v1338, %v1339
      %v1341 = vmul.f32 %v1340, %v969
      %v1342 = vsub.f32 %v1290, %v1341
      %v1343 = vsub.f32 %v1293, %v1341
      %v1344 = vsub.f32 %v1298, %v1341
      %v1345 = vsub.f32 %v1301, %v1341
      %v1346 = vsub.f32 %v1306, %v1341
      %v1347 = vsub.f32 %v1309, %v1341
      %v1348 = vsub.f32 %v1314, %v1341
      %v1349 = vsub.f32 %v1317, %v1341
      %v1350 = vmul.f32 %v1342, %v1342
      %v1351 = vmul.f32 %v1343, %v1343
      %v1352 = vmul.f32 %v1344, %v1344
      %v1353 = vmul.f32 %v1345, %v1345
      %v1354 = vmul.f32 %v1346, %v1346
      %v1355 = vmul.f32 %v1347, %v1347
      %v1356 = vmul.f32 %v1348, %v1348
      %v1357 = vmul.f32 %v1349, %v1349
      %v1358 = vsel %vm899, %v1350, 0.0
      %v1359 = vsel %vm899, %v1351, 0.0
      %v1360 = vadd.f32 %v1358, %v1359
      %v1361 = vsel %vm899, %v1352, 0.0
      %v1362 = vadd.f32 %v1360, %v1361
      %v1363 = vsel %vm899, %v1353, 0.0
      %v1364 = vadd.f32 %v1362, %v1363
      %v1365 = vsel %vm899, %v1354, 0.0
      %v1366 = vadd.f32 %v1364, %v1365
      %v1367 = vsel %vm899, %v1355, 0.0
      %v1368 = vadd.f32 %v1366, %v1367
      %v1369 = vsel %vm899, %v1356, 0.0
      %v1370 = vadd.f32 %v1368, %v1369
      %v1371 = vsel %vm899, %v1357, 0.0
      %v1372 = vadd.f32 %v1370, %v1371
      %v1373 = vrot.slane %v1372, 4
      %v1374 = vadd.f32 %v1372, %v1373
      %v1375 = vrot.slane %v1374, 2
      %v1376 = vadd.f32 %v1374, %v1375
      %v1377 = vrot.slane %v1376, 1
      %v1378 = vadd.f32 %v1376, %v1377
      %v1379 = vmul.f32 %v1378, %v969
      %v1380 = vadd.f32 %v1379, 1e-05
      %v1381 = vrsqrt.pop %v1380
      %v1382 = vmul.f32 %v1342, %v1381
      %v1383 = vmul.f32 %v1343, %v1381
      %v1384 = vmul.f32 %v1344, %v1381
      %v1385 = vmul.f32 %v1345, %v1381
      %v1386 = vmul.f32 %v1346, %v1381
      %v1387 = vmul.f32 %v1347, %v1381
      %v1388 = vmul.f32 %v1348, %v1381
      %v1389 = vmul.f32 %v1349, %v1381
      %v1390 = vlaneseq
      %v1391 = vshrl.u32 %v1390, 7
      %v1392 = vsub.s32 0, %v1391
      %v1393 = vrot.slane %v1198, %v1392
      %v1394 = vmul.f32 %v1393, %v1382
      %v1395 = vmul.f32 %v1393, %v1383
      %v1396 = vmul.f32 %v1393, %v1384
      %v1397 = vmul.f32 %v1393, %v1385
      %v1398 = vmul.f32 %v1393, %v1386
      %v1399 = vmul.f32 %v1393, %v1387
      %v1400 = vmul.f32 %v1393, %v1388
      %v1401 = vmul.f32 %v1393, %v1389
      %1403 = vrot.lane.b32.xlu0 %v1393, 64
      %v1404 = vpop.permute.xlu0 %1403
      %v1406 = vadd.f32 %v1394, %v1404
      %v1407 = vadd.f32 %v1395, %v1404
      %v1408 = vadd.f32 %v1396, %v1404
      %v1409 = vadd.f32 %v1397, %v1404
      %v1410 = vadd.f32 %v1398, %v1404
      %v1411 = vadd.f32 %v1399, %v1404
      %v1412 = vadd.f32 %v1400, %v1404
      %v1413 = vadd.f32 %v1401, %v1404
      %v1414 = vmax.f32 %v1406, 0.0
      %v1415 = vmax.f32 %v1407, 0.0
      %v1416 = vmax.f32 %v1408, 0.0
      %v1417 = vmax.f32 %v1409, 0.0
      %v1418 = vmax.f32 %v1410, 0.0
      %v1419 = vmax.f32 %v1411, 0.0
      %v1420 = vmax.f32 %v1412, 0.0
      %v1421 = vmax.f32 %v1413, 0.0
      %v1422 = vadd.f32 %v1414, %v940
      %v1423 = vadd.f32 %v1415, %v941
      %v1424 = vadd.f32 %v1416, %v942
      %v1425 = vadd.f32 %v1417, %v943
      %v1426 = vadd.f32 %v1418, %v944
      %v1427 = vadd.f32 %v1419, %v945
      %v1428 = vadd.f32 %v1420, %v946
      %v1429 = vadd.f32 %v1421, %v947
      %v1430 = vlaneseq
      %v1431 = vshrl.u32 %v1430, 7
      %v1432 = vadd.s32 %v1431, 8
      %v1433 = vadd.s32 %v1431, 16
      %v1434 = vadd.s32 %v1431, 24
      %v1435 = vadd.s32 %v1431, 32
      %v1436 = vadd.s32 %v1431, 40
      %v1437 = vadd.s32 %v1431, 48
      %v1438 = vadd.s32 %v1431, 56
      %v1439 = vcvt.s32.f32 %v1431
      %v1440 = vcvt.s32.f32 %v1432
      %v1441 = vcvt.s32.f32 %v1433
      %v1442 = vcvt.s32.f32 %v1434
      %v1443 = vcvt.s32.f32 %v1435
      %v1444 = vcvt.s32.f32 %v1436
      %v1445 = vcvt.s32.f32 %v1437
      %v1446 = vcvt.s32.f32 %v1438
      %v1447 = vadd.f32 %v1439, 0.5
      %v1448 = vadd.f32 %v1440, 0.5
      %v1449 = vadd.f32 %v1441, 0.5
      %v1450 = vadd.f32 %v1442, 0.5
      %v1451 = vadd.f32 %v1443, 0.5
      %v1452 = vadd.f32 %v1444, 0.5
      %v1453 = vadd.f32 %v1445, 0.5
      %v1454 = vadd.f32 %v1446, 0.5
      %v1455 = vmul.f32 %v1447, 0.125
      %v1456 = vmul.f32 %v1448, 0.125
      %v1457 = vmul.f32 %v1449, 0.125
      %v1458 = vmul.f32 %v1450, 0.125
      %v1459 = vmul.f32 %v1451, 0.125
      %v1460 = vmul.f32 %v1452, 0.125
      %v1461 = vmul.f32 %v1453, 0.125
      %v1462 = vmul.f32 %v1454, 0.125
      %v1463 = vfloor.f32 %v1455
      %v1464 = vfloor.f32 %v1456
      %v1465 = vfloor.f32 %v1457
      %v1466 = vfloor.f32 %v1458
      %v1467 = vfloor.f32 %v1459
      %v1468 = vfloor.f32 %v1460
      %v1469 = vfloor.f32 %v1461
      %v1470 = vfloor.f32 %v1462
      %v1471 = vmul.f32 %v1463, 8.0
      %v1472 = vmul.f32 %v1464, 8.0
      %v1473 = vmul.f32 %v1465, 8.0
      %v1474 = vmul.f32 %v1466, 8.0
      %v1475 = vmul.f32 %v1467, 8.0
      %v1476 = vmul.f32 %v1468, 8.0
      %v1477 = vmul.f32 %v1469, 8.0
      %v1478 = vmul.f32 %v1470, 8.0
      %v1479 = vsub.f32 %v1439, %v1471
      %v1480 = vsub.f32 %v1440, %v1472
      %v1481 = vsub.f32 %v1441, %v1473
      %v1482 = vsub.f32 %v1442, %v1474
      %v1483 = vsub.f32 %v1443, %v1475
      %v1484 = vsub.f32 %v1444, %v1476
      %v1485 = vsub.f32 %v1445, %v1477
      %v1486 = vsub.f32 %v1446, %v1478
      %v1487 = vrot.slane %v1422, 7
      %v1488 = vrot.slane %v1423, 7
      %v1489 = vrot.slane %v1424, 7
      %v1490 = vrot.slane %v1425, 7
      %v1491 = vrot.slane %v1426, 7
      %v1492 = vrot.slane %v1427, 7
      %v1493 = vrot.slane %v1428, 7
      %v1494 = vrot.slane %v1429, 7
      %vm1495 = vcmp.lt.s32.totalorder %v1431, 1
      %v1496 = vsel %vm1495, %v1493, %v1494
      %v1497 = vsel %vm1495, %v1492, %v1493
      %v1498 = vsel %vm1495, %v1491, %v1492
      %v1499 = vsel %vm1495, %v1490, %v1491
      %v1500 = vsel %vm1495, %v1489, %v1490
      %v1501 = vsel %vm1495, %v1488, %v1489
      %v1502 = vsel %vm1495, %v1487, %v1488
      %v1503 = vsel %vm1495, %v1494, %v1487
      %v1504 = vadd.f32 %v1463, -1.0
      %v1505 = vadd.f32 %v1464, -1.0
      %v1506 = vadd.f32 %v1465, -1.0
      %v1507 = vadd.f32 %v1466, -1.0
      %v1508 = vadd.f32 %v1467, -1.0
      %v1509 = vadd.f32 %v1468, -1.0
      %v1510 = vadd.f32 %v1469, -1.0
      %v1511 = vadd.f32 %v1470, -1.0
      %vm1512 = vcmp.ge.f32.partialorder %v1504, 0.0
      %vm1513 = vcmp.ge.f32.partialorder %v1505, 0.0
      %vm1514 = vcmp.ge.f32.partialorder %v1506, 0.0
      %vm1515 = vcmp.ge.f32.partialorder %v1507, 0.0
      %vm1516 = vcmp.ge.f32.partialorder %v1508, 0.0
      %vm1517 = vcmp.ge.f32.partialorder %v1509, 0.0
      %vm1518 = vcmp.ge.f32.partialorder %v1510, 0.0
      %vm1519 = vcmp.ge.f32.partialorder %v1511, 0.0
      %vm1520 = vcmp.lt.f32.partialorder %v1504, 8.0
      %vm1521 = vcmp.lt.f32.partialorder %v1505, 8.0
      %vm1522 = vcmp.lt.f32.partialorder %v1506, 8.0
      %vm1523 = vcmp.lt.f32.partialorder %v1507, 8.0
      %vm1524 = vcmp.lt.f32.partialorder %v1508, 8.0
      %vm1525 = vcmp.lt.f32.partialorder %v1509, 8.0
      %vm1526 = vcmp.lt.f32.partialorder %v1510, 8.0
      %vm1527 = vcmp.lt.f32.partialorder %v1511, 8.0
      %vm1528 = vmand %vm1512, %vm1520
      %vm1529 = vmand %vm1513, %vm1521
      %vm1530 = vmand %vm1514, %vm1522
      %vm1531 = vmand %vm1515, %vm1523
      %vm1532 = vmand %vm1516, %vm1524
      %vm1533 = vmand %vm1517, %vm1525
      %vm1534 = vmand %vm1518, %vm1526
      %vm1535 = vmand %vm1519, %vm1527
      %v1536 = vadd.f32 %v1479, -1.0
      %v1537 = vadd.f32 %v1480, -1.0
      %v1538 = vadd.f32 %v1481, -1.0
      %v1539 = vadd.f32 %v1482, -1.0
      %v1540 = vadd.f32 %v1483, -1.0
      %v1541 = vadd.f32 %v1484, -1.0
      %v1542 = vadd.f32 %v1485, -1.0
      %v1543 = vadd.f32 %v1486, -1.0
      %vm1544 = vcmp.ge.f32.partialorder %v1536, 0.0
      %vm1545 = vcmp.ge.f32.partialorder %v1537, 0.0
      %vm1546 = vcmp.ge.f32.partialorder %v1538, 0.0
      %vm1547 = vcmp.ge.f32.partialorder %v1539, 0.0
      %vm1548 = vcmp.ge.f32.partialorder %v1540, 0.0
      %vm1549 = vcmp.ge.f32.partialorder %v1541, 0.0
      %vm1550 = vcmp.ge.f32.partialorder %v1542, 0.0
      %vm1551 = vcmp.ge.f32.partialorder %v1543, 0.0
      %vm1552 = vmand %vm1528, %vm1544
      %vm1553 = vmand %vm1529, %vm1545
      %vm1554 = vmand %vm1530, %vm1546
      %vm1555 = vmand %vm1531, %vm1547
      %vm1556 = vmand %vm1532, %vm1548
      %vm1557 = vmand %vm1533, %vm1549
      %vm1558 = vmand %vm1534, %vm1550
      %vm1559 = vmand %vm1535, %vm1551
      %vm1560 = vcmp.lt.f32.partialorder %v1536, 8.0
      %vm1561 = vcmp.lt.f32.partialorder %v1537, 8.0
      %vm1562 = vcmp.lt.f32.partialorder %v1538, 8.0
      %vm1563 = vcmp.lt.f32.partialorder %v1539, 8.0
      %vm1564 = vcmp.lt.f32.partialorder %v1540, 8.0
      %vm1565 = vcmp.lt.f32.partialorder %v1541, 8.0
      %vm1566 = vcmp.lt.f32.partialorder %v1542, 8.0
      %vm1567 = vcmp.lt.f32.partialorder %v1543, 8.0
      %vm1568 = vmand %vm1552, %vm1560
      %vm1569 = vmand %vm1553, %vm1561
      %vm1570 = vmand %vm1554, %vm1562
      %vm1571 = vmand %vm1555, %vm1563
      %vm1572 = vmand %vm1556, %vm1564
      %vm1573 = vmand %vm1557, %vm1565
      %vm1574 = vmand %vm1558, %vm1566
      %vm1575 = vmand %vm1559, %vm1567
      %v1576 = vsel %vm1568, 1, 0
      %v1577 = vsel %vm1569, 1, 0
      %v1578 = vsel %vm1570, 1, 0
      %v1579 = vsel %vm1571, 1, 0
      %v1580 = vsel %vm1572, 1, 0
      %v1581 = vsel %vm1573, 1, 0
      %v1582 = vsel %vm1574, 1, 0
      %v1583 = vsel %vm1575, 1, 0
      %vm1584 = vcmp.eq.s32.totalorder %v1576, 1
      %vm1585 = vcmp.eq.s32.totalorder %v1577, 1
      %vm1586 = vcmp.eq.s32.totalorder %v1578, 1
      %vm1587 = vcmp.eq.s32.totalorder %v1579, 1
      %vm1588 = vcmp.eq.s32.totalorder %v1580, 1
      %vm1589 = vcmp.eq.s32.totalorder %v1581, 1
      %vm1590 = vcmp.eq.s32.totalorder %v1582, 1
      %vm1591 = vcmp.eq.s32.totalorder %v1583, 1
      %v1592 = vsel %vm1584, %v1496, 0.0
      %v1593 = vsel %vm1585, %v1503, 0.0
      %v1594 = vsel %vm1586, %v1502, 0.0
      %v1595 = vsel %vm1587, %v1501, 0.0
      %v1596 = vsel %vm1588, %v1500, 0.0
      %v1597 = vsel %vm1589, %v1499, 0.0
      %v1598 = vsel %vm1590, %v1498, 0.0
      %v1599 = vsel %vm1591, %v1497, 0.0
      %v1600 = vadd.f32 %v1479, 0.0
      %v1601 = vadd.f32 %v1480, 0.0
      %v1602 = vadd.f32 %v1481, 0.0
      %v1603 = vadd.f32 %v1482, 0.0
      %v1604 = vadd.f32 %v1483, 0.0
      %v1605 = vadd.f32 %v1484, 0.0
      %v1606 = vadd.f32 %v1485, 0.0
      %v1607 = vadd.f32 %v1486, 0.0
      %vm1608 = vcmp.ge.f32.partialorder %v1600, 0.0
      %vm1609 = vcmp.ge.f32.partialorder %v1601, 0.0
      %vm1610 = vcmp.ge.f32.partialorder %v1602, 0.0
      %vm1611 = vcmp.ge.f32.partialorder %v1603, 0.0
      %vm1612 = vcmp.ge.f32.partialorder %v1604, 0.0
      %vm1613 = vcmp.ge.f32.partialorder %v1605, 0.0
      %vm1614 = vcmp.ge.f32.partialorder %v1606, 0.0
      %vm1615 = vcmp.ge.f32.partialorder %v1607, 0.0
      %vm1616 = vmand %vm1528, %vm1608
      %vm1617 = vmand %vm1529, %vm1609
      %vm1618 = vmand %vm1530, %vm1610
      %vm1619 = vmand %vm1531, %vm1611
      %vm1620 = vmand %vm1532, %vm1612
      %vm1621 = vmand %vm1533, %vm1613
      %vm1622 = vmand %vm1534, %vm1614
      %vm1623 = vmand %vm1535, %vm1615
      %vm1624 = vcmp.lt.f32.partialorder %v1600, 8.0
      %vm1625 = vcmp.lt.f32.partialorder %v1601, 8.0
      %vm1626 = vcmp.lt.f32.partialorder %v1602, 8.0
      %vm1627 = vcmp.lt.f32.partialorder %v1603, 8.0
      %vm1628 = vcmp.lt.f32.partialorder %v1604, 8.0
      %vm1629 = vcmp.lt.f32.partialorder %v1605, 8.0
      %vm1630 = vcmp.lt.f32.partialorder %v1606, 8.0
      %vm1631 = vcmp.lt.f32.partialorder %v1607, 8.0
      %vm1632 = vmand %vm1616, %vm1624
      %vm1633 = vmand %vm1617, %vm1625
      %vm1634 = vmand %vm1618, %vm1626
      %vm1635 = vmand %vm1619, %vm1627
      %vm1636 = vmand %vm1620, %vm1628
      %vm1637 = vmand %vm1621, %vm1629
      %vm1638 = vmand %vm1622, %vm1630
      %vm1639 = vmand %vm1623, %vm1631
      %v1640 = vsel %vm1632, 1, 0
      %v1641 = vsel %vm1633, 1, 0
      %v1642 = vsel %vm1634, 1, 0
      %v1643 = vsel %vm1635, 1, 0
      %v1644 = vsel %vm1636, 1, 0
      %v1645 = vsel %vm1637, 1, 0
      %v1646 = vsel %vm1638, 1, 0
      %v1647 = vsel %vm1639, 1, 0
      %vm1648 = vcmp.eq.s32.totalorder %v1640, 1
      %vm1649 = vcmp.eq.s32.totalorder %v1641, 1
      %vm1650 = vcmp.eq.s32.totalorder %v1642, 1
      %vm1651 = vcmp.eq.s32.totalorder %v1643, 1
      %vm1652 = vcmp.eq.s32.totalorder %v1644, 1
      %vm1653 = vcmp.eq.s32.totalorder %v1645, 1
      %vm1654 = vcmp.eq.s32.totalorder %v1646, 1
      %vm1655 = vcmp.eq.s32.totalorder %v1647, 1
      %v1656 = vsel %vm1648, %v1429, 0.0
      %v1657 = vsel %vm1649, %v1422, 0.0
      %v1658 = vsel %vm1650, %v1423, 0.0
      %v1659 = vsel %vm1651, %v1424, 0.0
      %v1660 = vsel %vm1652, %v1425, 0.0
      %v1661 = vsel %vm1653, %v1426, 0.0
      %v1662 = vsel %vm1654, %v1427, 0.0
      %v1663 = vsel %vm1655, %v1428, 0.0
      %v1664 = vrot.slane %v1422, 1
      %v1665 = vrot.slane %v1423, 1
      %v1666 = vrot.slane %v1424, 1
      %v1667 = vrot.slane %v1425, 1
      %v1668 = vrot.slane %v1426, 1
      %v1669 = vrot.slane %v1427, 1
      %v1670 = vrot.slane %v1428, 1
      %v1671 = vrot.slane %v1429, 1
      %vm1672 = vcmp.lt.s32.totalorder %v1431, 7
      %v1673 = vsel %vm1672, %v1670, %v1671
      %v1674 = vsel %vm1672, %v1669, %v1670
      %v1675 = vsel %vm1672, %v1668, %v1669
      %v1676 = vsel %vm1672, %v1667, %v1668
      %v1677 = vsel %vm1672, %v1666, %v1667
      %v1678 = vsel %vm1672, %v1665, %v1666
      %v1679 = vsel %vm1672, %v1664, %v1665
      %v1680 = vsel %vm1672, %v1671, %v1664
      %v1681 = vadd.f32 %v1479, 1.0
      %v1682 = vadd.f32 %v1480, 1.0
      %v1683 = vadd.f32 %v1481, 1.0
      %v1684 = vadd.f32 %v1482, 1.0
      %v1685 = vadd.f32 %v1483, 1.0
      %v1686 = vadd.f32 %v1484, 1.0
      %v1687 = vadd.f32 %v1485, 1.0
      %v1688 = vadd.f32 %v1486, 1.0
      %vm1689 = vcmp.ge.f32.partialorder %v1681, 0.0
      %vm1690 = vcmp.ge.f32.partialorder %v1682, 0.0
      %vm1691 = vcmp.ge.f32.partialorder %v1683, 0.0
      %vm1692 = vcmp.ge.f32.partialorder %v1684, 0.0
      %vm1693 = vcmp.ge.f32.partialorder %v1685, 0.0
      %vm1694 = vcmp.ge.f32.partialorder %v1686, 0.0
      %vm1695 = vcmp.ge.f32.partialorder %v1687, 0.0
      %vm1696 = vcmp.ge.f32.partialorder %v1688, 0.0
      %vm1697 = vmand %vm1528, %vm1689
      %vm1698 = vmand %vm1529, %vm1690
      %vm1699 = vmand %vm1530, %vm1691
      %vm1700 = vmand %vm1531, %vm1692
      %vm1701 = vmand %vm1532, %vm1693
      %vm1702 = vmand %vm1533, %vm1694
      %vm1703 = vmand %vm1534, %vm1695
      %vm1704 = vmand %vm1535, %vm1696
      %vm1705 = vcmp.lt.f32.partialorder %v1681, 8.0
      %vm1706 = vcmp.lt.f32.partialorder %v1682, 8.0
      %vm1707 = vcmp.lt.f32.partialorder %v1683, 8.0
      %vm1708 = vcmp.lt.f32.partialorder %v1684, 8.0
      %vm1709 = vcmp.lt.f32.partialorder %v1685, 8.0
      %vm1710 = vcmp.lt.f32.partialorder %v1686, 8.0
      %vm1711 = vcmp.lt.f32.partialorder %v1687, 8.0
      %vm1712 = vcmp.lt.f32.partialorder %v1688, 8.0
      %vm1713 = vmand %vm1697, %vm1705
      %vm1714 = vmand %vm1698, %vm1706
      %vm1715 = vmand %vm1699, %vm1707
      %vm1716 = vmand %vm1700, %vm1708
      %vm1717 = vmand %vm1701, %vm1709
      %vm1718 = vmand %vm1702, %vm1710
      %vm1719 = vmand %vm1703, %vm1711
      %vm1720 = vmand %vm1704, %vm1712
      %v1721 = vsel %vm1713, 1, 0
      %v1722 = vsel %vm1714, 1, 0
      %v1723 = vsel %vm1715, 1, 0
      %v1724 = vsel %vm1716, 1, 0
      %v1725 = vsel %vm1717, 1, 0
      %v1726 = vsel %vm1718, 1, 0
      %v1727 = vsel %vm1719, 1, 0
      %v1728 = vsel %vm1720, 1, 0
      %vm1729 = vcmp.eq.s32.totalorder %v1721, 1
      %vm1730 = vcmp.eq.s32.totalorder %v1722, 1
      %vm1731 = vcmp.eq.s32.totalorder %v1723, 1
      %vm1732 = vcmp.eq.s32.totalorder %v1724, 1
      %vm1733 = vcmp.eq.s32.totalorder %v1725, 1
      %vm1734 = vcmp.eq.s32.totalorder %v1726, 1
      %vm1735 = vcmp.eq.s32.totalorder %v1727, 1
      %vm1736 = vcmp.eq.s32.totalorder %v1728, 1
      %v1737 = vsel %vm1729, %v1680, 0.0
      %v1738 = vsel %vm1730, %v1679, 0.0
      %v1739 = vsel %vm1731, %v1678, 0.0
      %v1740 = vsel %vm1732, %v1677, 0.0
      %v1741 = vsel %vm1733, %v1676, 0.0
      %v1742 = vsel %vm1734, %v1675, 0.0
      %v1743 = vsel %vm1735, %v1674, 0.0
      %v1744 = vsel %vm1736, %v1673, 0.0
      %v1745 = vadd.f32 %v1463, 0.0
      %v1746 = vadd.f32 %v1464, 0.0
      %v1747 = vadd.f32 %v1465, 0.0
      %v1748 = vadd.f32 %v1466, 0.0
      %v1749 = vadd.f32 %v1467, 0.0
      %v1750 = vadd.f32 %v1468, 0.0
      %v1751 = vadd.f32 %v1469, 0.0
      %v1752 = vadd.f32 %v1470, 0.0
      %vm1753 = vcmp.ge.f32.partialorder %v1745, 0.0
      %vm1754 = vcmp.ge.f32.partialorder %v1746, 0.0
      %vm1755 = vcmp.ge.f32.partialorder %v1747, 0.0
      %vm1756 = vcmp.ge.f32.partialorder %v1748, 0.0
      %vm1757 = vcmp.ge.f32.partialorder %v1749, 0.0
      %vm1758 = vcmp.ge.f32.partialorder %v1750, 0.0
      %vm1759 = vcmp.ge.f32.partialorder %v1751, 0.0
      %vm1760 = vcmp.ge.f32.partialorder %v1752, 0.0
      %vm1761 = vcmp.lt.f32.partialorder %v1745, 8.0
      %vm1762 = vcmp.lt.f32.partialorder %v1746, 8.0
      %vm1763 = vcmp.lt.f32.partialorder %v1747, 8.0
      %vm1764 = vcmp.lt.f32.partialorder %v1748, 8.0
      %vm1765 = vcmp.lt.f32.partialorder %v1749, 8.0
      %vm1766 = vcmp.lt.f32.partialorder %v1750, 8.0
      %vm1767 = vcmp.lt.f32.partialorder %v1751, 8.0
      %vm1768 = vcmp.lt.f32.partialorder %v1752, 8.0
      %vm1769 = vmand %vm1753, %vm1761
      %vm1770 = vmand %vm1754, %vm1762
      %vm1771 = vmand %vm1755, %vm1763
      %vm1772 = vmand %vm1756, %vm1764
      %vm1773 = vmand %vm1757, %vm1765
      %vm1774 = vmand %vm1758, %vm1766
      %vm1775 = vmand %vm1759, %vm1767
      %vm1776 = vmand %vm1760, %vm1768
      %vm1777 = vmand %vm1769, %vm1544
      %vm1778 = vmand %vm1770, %vm1545
      %vm1779 = vmand %vm1771, %vm1546
      %vm1780 = vmand %vm1772, %vm1547
      %vm1781 = vmand %vm1773, %vm1548
      %vm1782 = vmand %vm1774, %vm1549
      %vm1783 = vmand %vm1775, %vm1550
      %vm1784 = vmand %vm1776, %vm1551
      %vm1785 = vmand %vm1777, %vm1560
      %vm1786 = vmand %vm1778, %vm1561
      %vm1787 = vmand %vm1779, %vm1562
      %vm1788 = vmand %vm1780, %vm1563
      %vm1789 = vmand %vm1781, %vm1564
      %vm1790 = vmand %vm1782, %vm1565
      %vm1791 = vmand %vm1783, %vm1566
      %vm1792 = vmand %vm1784, %vm1567
      %v1793 = vsel %vm1785, 1, 0
      %v1794 = vsel %vm1786, 1, 0
      %v1795 = vsel %vm1787, 1, 0
      %v1796 = vsel %vm1788, 1, 0
      %v1797 = vsel %vm1789, 1, 0
      %v1798 = vsel %vm1790, 1, 0
      %v1799 = vsel %vm1791, 1, 0
      %v1800 = vsel %vm1792, 1, 0
      %vm1801 = vcmp.eq.s32.totalorder %v1793, 1
      %vm1802 = vcmp.eq.s32.totalorder %v1794, 1
      %vm1803 = vcmp.eq.s32.totalorder %v1795, 1
      %vm1804 = vcmp.eq.s32.totalorder %v1796, 1
      %vm1805 = vcmp.eq.s32.totalorder %v1797, 1
      %vm1806 = vcmp.eq.s32.totalorder %v1798, 1
      %vm1807 = vcmp.eq.s32.totalorder %v1799, 1
      %vm1808 = vcmp.eq.s32.totalorder %v1800, 1
      %v1809 = vsel %vm1801, %v1503, 0.0
      %v1810 = vsel %vm1802, %v1502, 0.0
      %v1811 = vsel %vm1803, %v1501, 0.0
      %v1812 = vsel %vm1804, %v1500, 0.0
      %v1813 = vsel %vm1805, %v1499, 0.0
      %v1814 = vsel %vm1806, %v1498, 0.0
      %v1815 = vsel %vm1807, %v1497, 0.0
      %v1816 = vsel %vm1808, %v1496, 0.0
      %vm1817 = vmand %vm1769, %vm1689
      %vm1818 = vmand %vm1770, %vm1690
      %vm1819 = vmand %vm1771, %vm1691
      %vm1820 = vmand %vm1772, %vm1692
      %vm1821 = vmand %vm1773, %vm1693
      %vm1822 = vmand %vm1774, %vm1694
      %vm1823 = vmand %vm1775, %vm1695
      %vm1824 = vmand %vm1776, %vm1696
      %vm1825 = vmand %vm1817, %vm1705
      %vm1826 = vmand %vm1818, %vm1706
      %vm1827 = vmand %vm1819, %vm1707
      %vm1828 = vmand %vm1820, %vm1708
      %vm1829 = vmand %vm1821, %vm1709
      %vm1830 = vmand %vm1822, %vm1710
      %vm1831 = vmand %vm1823, %vm1711
      %vm1832 = vmand %vm1824, %vm1712
      %v1833 = vsel %vm1825, 1, 0
      %v1834 = vsel %vm1826, 1, 0
      %v1835 = vsel %vm1827, 1, 0
      %v1836 = vsel %vm1828, 1, 0
      %v1837 = vsel %vm1829, 1, 0
      %v1838 = vsel %vm1830, 1, 0
      %v1839 = vsel %vm1831, 1, 0
      %v1840 = vsel %vm1832, 1, 0
      %vm1841 = vcmp.eq.s32.totalorder %v1833, 1
      %vm1842 = vcmp.eq.s32.totalorder %v1834, 1
      %vm1843 = vcmp.eq.s32.totalorder %v1835, 1
      %vm1844 = vcmp.eq.s32.totalorder %v1836, 1
      %vm1845 = vcmp.eq.s32.totalorder %v1837, 1
      %vm1846 = vcmp.eq.s32.totalorder %v1838, 1
      %vm1847 = vcmp.eq.s32.totalorder %v1839, 1
      %vm1848 = vcmp.eq.s32.totalorder %v1840, 1
      %v1849 = vsel %vm1841, %v1679, 0.0
      %v1850 = vsel %vm1842, %v1678, 0.0
      %v1851 = vsel %vm1843, %v1677, 0.0
      %v1852 = vsel %vm1844, %v1676, 0.0
      %v1853 = vsel %vm1845, %v1675, 0.0
      %v1854 = vsel %vm1846, %v1674, 0.0
      %v1855 = vsel %vm1847, %v1673, 0.0
      %v1856 = vsel %vm1848, %v1680, 0.0
      %v1857 = vadd.f32 %v1463, 1.0
      %v1858 = vadd.f32 %v1464, 1.0
      %v1859 = vadd.f32 %v1465, 1.0
      %v1860 = vadd.f32 %v1466, 1.0
      %v1861 = vadd.f32 %v1467, 1.0
      %v1862 = vadd.f32 %v1468, 1.0
      %v1863 = vadd.f32 %v1469, 1.0
      %v1864 = vadd.f32 %v1470, 1.0
      %vm1865 = vcmp.ge.f32.partialorder %v1857, 0.0
      %vm1866 = vcmp.ge.f32.partialorder %v1858, 0.0
      %vm1867 = vcmp.ge.f32.partialorder %v1859, 0.0
      %vm1868 = vcmp.ge.f32.partialorder %v1860, 0.0
      %vm1869 = vcmp.ge.f32.partialorder %v1861, 0.0
      %vm1870 = vcmp.ge.f32.partialorder %v1862, 0.0
      %vm1871 = vcmp.ge.f32.partialorder %v1863, 0.0
      %vm1872 = vcmp.ge.f32.partialorder %v1864, 0.0
      %vm1873 = vcmp.lt.f32.partialorder %v1857, 8.0
      %vm1874 = vcmp.lt.f32.partialorder %v1858, 8.0
      %vm1875 = vcmp.lt.f32.partialorder %v1859, 8.0
      %vm1876 = vcmp.lt.f32.partialorder %v1860, 8.0
      %vm1877 = vcmp.lt.f32.partialorder %v1861, 8.0
      %vm1878 = vcmp.lt.f32.partialorder %v1862, 8.0
      %vm1879 = vcmp.lt.f32.partialorder %v1863, 8.0
      %vm1880 = vcmp.lt.f32.partialorder %v1864, 8.0
      %vm1881 = vmand %vm1865, %vm1873
      %vm1882 = vmand %vm1866, %vm1874
      %vm1883 = vmand %vm1867, %vm1875
      %vm1884 = vmand %vm1868, %vm1876
      %vm1885 = vmand %vm1869, %vm1877
      %vm1886 = vmand %vm1870, %vm1878
      %vm1887 = vmand %vm1871, %vm1879
      %vm1888 = vmand %vm1872, %vm1880
      %vm1889 = vmand %vm1881, %vm1544
      %vm1890 = vmand %vm1882, %vm1545
      %vm1891 = vmand %vm1883, %vm1546
      %vm1892 = vmand %vm1884, %vm1547
      %vm1893 = vmand %vm1885, %vm1548
      %vm1894 = vmand %vm1886, %vm1549
      %vm1895 = vmand %vm1887, %vm1550
      %vm1896 = vmand %vm1888, %vm1551
      %vm1897 = vmand %vm1889, %vm1560
      %vm1898 = vmand %vm1890, %vm1561
      %vm1899 = vmand %vm1891, %vm1562
      %vm1900 = vmand %vm1892, %vm1563
      %vm1901 = vmand %vm1893, %vm1564
      %vm1902 = vmand %vm1894, %vm1565
      %vm1903 = vmand %vm1895, %vm1566
      %vm1904 = vmand %vm1896, %vm1567
      %v1905 = vsel %vm1897, 1, 0
      %v1906 = vsel %vm1898, 1, 0
      %v1907 = vsel %vm1899, 1, 0
      %v1908 = vsel %vm1900, 1, 0
      %v1909 = vsel %vm1901, 1, 0
      %v1910 = vsel %vm1902, 1, 0
      %v1911 = vsel %vm1903, 1, 0
      %v1912 = vsel %vm1904, 1, 0
      %vm1913 = vcmp.eq.s32.totalorder %v1905, 1
      %vm1914 = vcmp.eq.s32.totalorder %v1906, 1
      %vm1915 = vcmp.eq.s32.totalorder %v1907, 1
      %vm1916 = vcmp.eq.s32.totalorder %v1908, 1
      %vm1917 = vcmp.eq.s32.totalorder %v1909, 1
      %vm1918 = vcmp.eq.s32.totalorder %v1910, 1
      %vm1919 = vcmp.eq.s32.totalorder %v1911, 1
      %vm1920 = vcmp.eq.s32.totalorder %v1912, 1
      %v1921 = vsel %vm1913, %v1502, 0.0
      %v1922 = vsel %vm1914, %v1501, 0.0
      %v1923 = vsel %vm1915, %v1500, 0.0
      %v1924 = vsel %vm1916, %v1499, 0.0
      %v1925 = vsel %vm1917, %v1498, 0.0
      %v1926 = vsel %vm1918, %v1497, 0.0
      %v1927 = vsel %vm1919, %v1496, 0.0
      %v1928 = vsel %vm1920, %v1503, 0.0
      %vm1929 = vmand %vm1881, %vm1608
      %vm1930 = vmand %vm1882, %vm1609
      %vm1931 = vmand %vm1883, %vm1610
      %vm1932 = vmand %vm1884, %vm1611
      %vm1933 = vmand %vm1885, %vm1612
      %vm1934 = vmand %vm1886, %vm1613
      %vm1935 = vmand %vm1887, %vm1614
      %vm1936 = vmand %vm1888, %vm1615
      %vm1937 = vmand %vm1929, %vm1624
      %vm1938 = vmand %vm1930, %vm1625
      %vm1939 = vmand %vm1931, %vm1626
      %vm1940 = vmand %vm1932, %vm1627
      %vm1941 = vmand %vm1933, %vm1628
      %vm1942 = vmand %vm1934, %vm1629
      %vm1943 = vmand %vm1935, %vm1630
      %vm1944 = vmand %vm1936, %vm1631
      %v1945 = vsel %vm1937, 1, 0
      %v1946 = vsel %vm1938, 1, 0
      %v1947 = vsel %vm1939, 1, 0
      %v1948 = vsel %vm1940, 1, 0
      %v1949 = vsel %vm1941, 1, 0
      %v1950 = vsel %vm1942, 1, 0
      %v1951 = vsel %vm1943, 1, 0
      %v1952 = vsel %vm1944, 1, 0
      %vm1953 = vcmp.eq.s32.totalorder %v1945, 1
      %vm1954 = vcmp.eq.s32.totalorder %v1946, 1
      %vm1955 = vcmp.eq.s32.totalorder %v1947, 1
      %vm1956 = vcmp.eq.s32.totalorder %v1948, 1
      %vm1957 = vcmp.eq.s32.totalorder %v1949, 1
      %vm1958 = vcmp.eq.s32.totalorder %v1950, 1
      %vm1959 = vcmp.eq.s32.totalorder %v1951, 1
      %vm1960 = vcmp.eq.s32.totalorder %v1952, 1
      %v1961 = vsel %vm1953, %v1423, 0.0
      %v1962 = vsel %vm1954, %v1424, 0.0
      %v1963 = vsel %vm1955, %v1425, 0.0
      %v1964 = vsel %vm1956, %v1426, 0.0
      %v1965 = vsel %vm1957, %v1427, 0.0
      %v1966 = vsel %vm1958, %v1428, 0.0
      %v1967 = vsel %vm1959, %v1429, 0.0
      %v1968 = vsel %vm1960, %v1422, 0.0
      %vm1969 = vmand %vm1881, %vm1689
      %vm1970 = vmand %vm1882, %vm1690
      %vm1971 = vmand %vm1883, %vm1691
      %vm1972 = vmand %vm1884, %vm1692
      %vm1973 = vmand %vm1885, %vm1693
      %vm1974 = vmand %vm1886, %vm1694
      %vm1975 = vmand %vm1887, %vm1695
      %vm1976 = vmand %vm1888, %vm1696
      %vm1977 = vmand %vm1969, %vm1705
      %vm1978 = vmand %vm1970, %vm1706
      %vm1979 = vmand %vm1971, %vm1707
      %vm1980 = vmand %vm1972, %vm1708
      %vm1981 = vmand %vm1973, %vm1709
      %vm1982 = vmand %vm1974, %vm1710
      %vm1983 = vmand %vm1975, %vm1711
      %vm1984 = vmand %vm1976, %vm1712
      %v1985 = vsel %vm1977, 1, 0
      %v1986 = vsel %vm1978, 1, 0
      %v1987 = vsel %vm1979, 1, 0
      %v1988 = vsel %vm1980, 1, 0
      %v1989 = vsel %vm1981, 1, 0
      %v1990 = vsel %vm1982, 1, 0
      %v1991 = vsel %vm1983, 1, 0
      %v1992 = vsel %vm1984, 1, 0
      %vm1993 = vcmp.eq.s32.totalorder %v1985, 1
      %vm1994 = vcmp.eq.s32.totalorder %v1986, 1
      %vm1995 = vcmp.eq.s32.totalorder %v1987, 1
      %vm1996 = vcmp.eq.s32.totalorder %v1988, 1
      %vm1997 = vcmp.eq.s32.totalorder %v1989, 1
      %vm1998 = vcmp.eq.s32.totalorder %v1990, 1
      %vm1999 = vcmp.eq.s32.totalorder %v1991, 1
      %vm2000 = vcmp.eq.s32.totalorder %v1992, 1
      %v2001 = vsel %vm1993, %v1678, 0.0
      %v2002 = vsel %vm1994, %v1677, 0.0
      %v2003 = vsel %vm1995, %v1676, 0.0
      %v2004 = vsel %vm1996, %v1675, 0.0
      %v2005 = vsel %vm1997, %v1674, 0.0
      %v2006 = vsel %vm1998, %v1673, 0.0
      %v2007 = vsel %vm1999, %v1680, 0.0
      %v2008 = vsel %vm2000, %v1679, 0.0
      %2017 = vrot.lane.b32.xlu0 %v1656, 64
      %v2018 = vpop.permute.xlu0 %2017
      %2019 = vrot.lane.b32.xlu0 %v1657, 64
      %v2020 = vpop.permute.xlu0 %2019
      %2021 = vrot.lane.b32.xlu0 %v1658, 64
      %v2022 = vpop.permute.xlu0 %2021
      %2023 = vrot.lane.b32.xlu0 %v1659, 64
      %v2024 = vpop.permute.xlu0 %2023
      %2025 = vrot.lane.b32.xlu0 %v1660, 64
      %v2026 = vpop.permute.xlu0 %2025
      %2027 = vrot.lane.b32.xlu0 %v1661, 64
      %v2028 = vpop.permute.xlu0 %2027
      %2029 = vrot.lane.b32.xlu0 %v1662, 64
      %v2030 = vpop.permute.xlu0 %2029
      %2031 = vrot.lane.b32.xlu0 %v1663, 64
      %v2032 = vpop.permute.xlu0 %2031
      %2049 = vrot.lane.b32.xlu0 %v1809, 64
      %v2050 = vpop.permute.xlu0 %2049
      %2051 = vrot.lane.b32.xlu0 %v1810, 64
      %v2052 = vpop.permute.xlu0 %2051
      %2053 = vrot.lane.b32.xlu0 %v1811, 64
      %v2054 = vpop.permute.xlu0 %2053
      %2055 = vrot.lane.b32.xlu0 %v1812, 64
      %v2056 = vpop.permute.xlu0 %2055
      %2057 = vrot.lane.b32.xlu0 %v1813, 64
      %v2058 = vpop.permute.xlu0 %2057
      %2059 = vrot.lane.b32.xlu0 %v1814, 64
      %v2060 = vpop.permute.xlu0 %2059
      %2061 = vrot.lane.b32.xlu0 %v1815, 64
      %v2062 = vpop.permute.xlu0 %2061
      %2063 = vrot.lane.b32.xlu0 %v1816, 64
      %v2064 = vpop.permute.xlu0 %2063
      %2081 = vrot.lane.b32.xlu0 %v1849, 64
      %v2082 = vpop.permute.xlu0 %2081
      %2083 = vrot.lane.b32.xlu0 %v1850, 64
      %v2084 = vpop.permute.xlu0 %2083
      %2085 = vrot.lane.b32.xlu0 %v1851, 64
      %v2086 = vpop.permute.xlu0 %2085
      %2087 = vrot.lane.b32.xlu0 %v1852, 64
      %v2088 = vpop.permute.xlu0 %2087
      %2089 = vrot.lane.b32.xlu0 %v1853, 64
      %v2090 = vpop.permute.xlu0 %2089
      %2091 = vrot.lane.b32.xlu0 %v1854, 64
      %v2092 = vpop.permute.xlu0 %2091
      %2093 = vrot.lane.b32.xlu0 %v1855, 64
      %v2094 = vpop.permute.xlu0 %2093
      %2095 = vrot.lane.b32.xlu0 %v1856, 64
      %v2096 = vpop.permute.xlu0 %2095
      %2113 = vrot.lane.b32.xlu0 %v1961, 64
      %v2114 = vpop.permute.xlu0 %2113
      %2115 = vrot.lane.b32.xlu0 %v1962, 64
      %v2116 = vpop.permute.xlu0 %2115
      %2117 = vrot.lane.b32.xlu0 %v1963, 64
      %v2118 = vpop.permute.xlu0 %2117
      %2119 = vrot.lane.b32.xlu0 %v1964, 64
      %v2120 = vpop.permute.xlu0 %2119
      %2121 = vrot.lane.b32.xlu0 %v1965, 64
      %v2122 = vpop.permute.xlu0 %2121
      %2123 = vrot.lane.b32.xlu0 %v1966, 64
      %v2124 = vpop.permute.xlu0 %2123
      %2125 = vrot.lane.b32.xlu0 %v1967, 64
      %v2126 = vpop.permute.xlu0 %2125
      %2127 = vrot.lane.b32.xlu0 %v1968, 64
      %v2128 = vpop.permute.xlu0 %2127
      %v2137 = vsel %vm899, %v1592, %v2018
      %v2138 = vsel %vm899, %v1593, %v2020
      %v2139 = vsel %vm899, %v1594, %v2022
      %v2140 = vsel %vm899, %v1595, %v2024
      %v2141 = vsel %vm899, %v1596, %v2026
      %v2142 = vsel %vm899, %v1597, %v2028
      %v2143 = vsel %vm899, %v1598, %v2030
      %v2144 = vsel %vm899, %v1599, %v2032
      %v2145 = vsel %vm899, %v1737, %v2050
      %v2146 = vsel %vm899, %v1738, %v2052
      %v2147 = vsel %vm899, %v1739, %v2054
      %v2148 = vsel %vm899, %v1740, %v2056
      %v2149 = vsel %vm899, %v1741, %v2058
      %v2150 = vsel %vm899, %v1742, %v2060
      %v2151 = vsel %vm899, %v1743, %v2062
      %v2152 = vsel %vm899, %v1744, %v2064
      %v2153 = vsel %vm899, %v1422, %v2082
      %v2154 = vsel %vm899, %v1423, %v2084
      %v2155 = vsel %vm899, %v1424, %v2086
      %v2156 = vsel %vm899, %v1425, %v2088
      %v2157 = vsel %vm899, %v1426, %v2090
      %v2158 = vsel %vm899, %v1427, %v2092
      %v2159 = vsel %vm899, %v1428, %v2094
      %v2160 = vsel %vm899, %v1429, %v2096
      %v2161 = vsel %vm899, %v1921, %v2114
      %v2162 = vsel %vm899, %v1922, %v2116
      %v2163 = vsel %vm899, %v1923, %v2118
      %v2164 = vsel %vm899, %v1924, %v2120
      %v2165 = vsel %vm899, %v1925, %v2122
      %v2166 = vsel %vm899, %v1926, %v2124
      %v2167 = vsel %vm899, %v1927, %v2126
      %v2168 = vsel %vm899, %v1928, %v2128
      %v2169 = vpack.c.bf16 %v2138, %v2137
      %v2170 = vpack.c.bf16 %v2146, %v2145
      %v2171 = vpack.c.bf16 %v2154, %v2153
      %v2172 = vpack.c.bf16 %v2162, %v2161
      %v2173 = vpack.c.bf16 %v2002, %v2001
      %v2174 = vpack.c.bf16 %v2140, %v2139
      %v2175 = vpack.c.bf16 %v2148, %v2147
      %v2176 = vpack.c.bf16 %v2156, %v2155
      %v2177 = vpack.c.bf16 %v2164, %v2163
      %v2178 = vpack.c.bf16 %v2004, %v2003
      %v2179 = vpack.c.bf16 %v2142, %v2141
      %v2180 = vpack.c.bf16 %v2150, %v2149
      %v2181 = vpack.c.bf16 %v2158, %v2157
      %v2182 = vpack.c.bf16 %v2166, %v2165
      %v2183 = vpack.c.bf16 %v2006, %v2005
      %v2184 = vpack.c.bf16 %v2144, %v2143
      %v2185 = vpack.c.bf16 %v2152, %v2151
      %v2186 = vpack.c.bf16 %v2160, %v2159
      %v2187 = vpack.c.bf16 %v2168, %v2167
      %v2188 = vpack.c.bf16 %v2008, %v2007
      %v2189 = vld [vmem:[%s12] sm:$0xf]
      %v2190 = vld [vmem:[%s12 + $0x4] sm:$0xf]
      %v2191 = vld [vmem:[%s12 + $0x8] sm:$0xf]
      %v2192 = vld [vmem:[%s12 + $0xc] sm:$0xf]
      %v2193 = vld [vmem:[%s12 + $0x10] sm:$0xf]
      %v2194 = vld [vmem:[%s12 + $0x14] sm:$0xf]
      %v2195 = vld [vmem:[%s12 + $0x18] sm:$0xf]
      %v2196 = vld [vmem:[%s12 + $0x1c] sm:$0xf]
      %v2197 = vld [vmem:[%s12 + $0x20] sm:$0xf]
      %v2198 = vld [vmem:[%s12 + $0x24] sm:$0xf]
      %v2199 = vld [vmem:[%s12 + $0x28] sm:$0xf]
      %v2200 = vld [vmem:[%s12 + $0x2c] sm:$0xf]
      %v2201 = vld [vmem:[%s12 + $0x30] sm:$0xf]
      %v2202 = vld [vmem:[%s12 + $0x34] sm:$0xf]
      %v2203 = vld [vmem:[%s12 + $0x38] sm:$0xf]
      %v2204 = vld [vmem:[%s12 + $0x3c] sm:$0xf]
      %v2205 = vld [vmem:[%s12 + $0x40] sm:$0xf]
      %v2206 = vld [vmem:[%s12 + $0x44] sm:$0xf]
      %v2207 = vld [vmem:[%s12 + $0x48] sm:$0xf]
      %v2208 = vld [vmem:[%s12 + $0x4c] sm:$0xf]
      %v2209 = vld [vmem:[%s12 + $0x50] sm:$0xf]
      %v2210 = vld [vmem:[%s12 + $0x54] sm:$0xf]
      %v2211 = vld [vmem:[%s12 + $0x58] sm:$0xf]
      %v2212 = vld [vmem:[%s12 + $0x5c] sm:$0xf]
      %v2213 = vld [vmem:[%s12 + $0x60] sm:$0xf]
      %v2214 = vld [vmem:[%s12 + $0x64] sm:$0xf]
      %v2215 = vld [vmem:[%s12 + $0x68] sm:$0xf]
      %v2216 = vld [vmem:[%s12 + $0x6c] sm:$0xf]
      %v2217 = vld [vmem:[%s12 + $0x70] sm:$0xf]
      %v2218 = vld [vmem:[%s12 + $0x74] sm:$0xf]
      %v2219 = vld [vmem:[%s12 + $0x78] sm:$0xf]
      %v2220 = vld [vmem:[%s12 + $0x7c] sm:$0xf]
      %v2221 = vld [vmem:[%s12 + $0x80] sm:$0xf]
      %v2222 = vld [vmem:[%s12 + $0x84] sm:$0xf]
      %v2223 = vld [vmem:[%s12 + $0x88] sm:$0xf]
      %v2224 = vld [vmem:[%s12 + $0x8c] sm:$0xf]
      %v2225 = vld [vmem:[%s12 + $0x90] sm:$0xf]
      %v2226 = vld [vmem:[%s12 + $0x94] sm:$0xf]
      %v2227 = vld [vmem:[%s12 + $0x98] sm:$0xf]
      %v2228 = vld [vmem:[%s12 + $0x9c] sm:$0xf]
      %v2229 = vld [vmem:[%s12 + $0xa0] sm:$0xf]
      %v2230 = vld [vmem:[%s12 + $0xa4] sm:$0xf]
      %v2231 = vld [vmem:[%s12 + $0xa8] sm:$0xf]
      %v2232 = vld [vmem:[%s12 + $0xac] sm:$0xf]
      %v2233 = vld [vmem:[%s12 + $0xb0] sm:$0xf]
      %v2234 = vld [vmem:[%s12 + $0xb4] sm:$0xf]
      %v2235 = vld [vmem:[%s12 + $0xb8] sm:$0xf]
      %v2236 = vld [vmem:[%s12 + $0xbc] sm:$0xf]
      %v2237 = vld [vmem:[%s12 + $0xc0] sm:$0xf]
      %v2238 = vld [vmem:[%s12 + $0xc4] sm:$0xf]
      %v2239 = vld [vmem:[%s12 + $0xc8] sm:$0xf]
      %v2240 = vld [vmem:[%s12 + $0xcc] sm:$0xf]
      %v2241 = vld [vmem:[%s12 + $0xd0] sm:$0xf]
      %v2242 = vld [vmem:[%s12 + $0xd4] sm:$0xf]
      %v2243 = vld [vmem:[%s12 + $0xd8] sm:$0xf]
      %v2244 = vld [vmem:[%s12 + $0xdc] sm:$0xf]
      %v2245 = vld [vmem:[%s12 + $0xe0] sm:$0xf]
      %v2246 = vld [vmem:[%s12 + $0xe4] sm:$0xf]
      %v2247 = vld [vmem:[%s12 + $0xe8] sm:$0xf]
      %v2248 = vld [vmem:[%s12 + $0xec] sm:$0xf]
      %v2249 = vld [vmem:[%s12 + $0xf0] sm:$0xf]
      %v2250 = vld [vmem:[%s12 + $0xf4] sm:$0xf]
      %v2251 = vld [vmem:[%s12 + $0xf8] sm:$0xf]
      %v2252 = vld [vmem:[%s12 + $0xfc] sm:$0xf]
      %v2253 = vld [vmem:[%s12 + $0x100] sm:$0xf]
      %v2254 = vld [vmem:[%s12 + $0x104] sm:$0xf]
      %v2255 = vld [vmem:[%s12 + $0x108] sm:$0xf]
      %v2256 = vld [vmem:[%s12 + $0x10c] sm:$0xf]
      %v2257 = vld [vmem:[%s12 + $0x110] sm:$0xf]
      %v2258 = vld [vmem:[%s12 + $0x114] sm:$0xf]
      %v2259 = vld [vmem:[%s12 + $0x118] sm:$0xf]
      %v2260 = vld [vmem:[%s12 + $0x11c] sm:$0xf]
      %v2333 = vunpack.c.l.b16 %v2189
      %v2334 = vunpack.c.l.b16 %v2190
      %v2335 = vunpack.c.l.b16 %v2191
      %v2336 = vunpack.c.l.b16 %v2192
      %v2337 = vunpack.c.l.b16 %v2193
      %v2338 = vunpack.c.l.b16 %v2194
      %v2339 = vunpack.c.l.b16 %v2195
      %v2340 = vunpack.c.l.b16 %v2196
      %v2341 = vunpack.c.l.b16 %v2197
      %v2342 = vunpack.c.l.b16 %v2198
      %v2343 = vunpack.c.l.b16 %v2199
      %v2344 = vunpack.c.l.b16 %v2200
      %v2345 = vunpack.c.l.b16 %v2201
      %v2346 = vunpack.c.l.b16 %v2202
      %v2347 = vunpack.c.l.b16 %v2203
      %v2348 = vunpack.c.l.b16 %v2204
      %v2349 = vunpack.c.l.b16 %v2205
      %v2350 = vunpack.c.l.b16 %v2206
      %v2351 = vunpack.c.l.b16 %v2207
      %v2352 = vunpack.c.l.b16 %v2208
      %v2353 = vunpack.c.l.b16 %v2209
      %v2354 = vunpack.c.l.b16 %v2210
      %v2355 = vunpack.c.l.b16 %v2211
      %v2356 = vunpack.c.l.b16 %v2212
      %v2357 = vunpack.c.l.b16 %v2213
      %v2358 = vunpack.c.l.b16 %v2214
      %v2359 = vunpack.c.l.b16 %v2215
      %v2360 = vunpack.c.l.b16 %v2216
      %v2361 = vunpack.c.l.b16 %v2217
      %v2362 = vunpack.c.l.b16 %v2218
      %v2363 = vunpack.c.l.b16 %v2219
      %v2364 = vunpack.c.l.b16 %v2220
      %v2365 = vunpack.c.l.b16 %v2221
      %v2366 = vunpack.c.l.b16 %v2222
      %v2367 = vunpack.c.l.b16 %v2223
      %v2368 = vunpack.c.l.b16 %v2224
      %v2369 = vunpack.c.l.b16 %v2225
      %v2370 = vunpack.c.l.b16 %v2226
      %v2371 = vunpack.c.l.b16 %v2227
      %v2372 = vunpack.c.l.b16 %v2228
      %v2373 = vunpack.c.l.b16 %v2229
      %v2374 = vunpack.c.l.b16 %v2230
      %v2375 = vunpack.c.l.b16 %v2231
      %v2376 = vunpack.c.l.b16 %v2232
      %v2377 = vunpack.c.l.b16 %v2233
      %v2378 = vunpack.c.l.b16 %v2234
      %v2379 = vunpack.c.l.b16 %v2235
      %v2380 = vunpack.c.l.b16 %v2236
      %v2381 = vunpack.c.l.b16 %v2237
      %v2382 = vunpack.c.l.b16 %v2238
      %v2383 = vunpack.c.l.b16 %v2239
      %v2384 = vunpack.c.l.b16 %v2240
      %v2385 = vunpack.c.l.b16 %v2241
      %v2386 = vunpack.c.l.b16 %v2242
      %v2387 = vunpack.c.l.b16 %v2243
      %v2388 = vunpack.c.l.b16 %v2244
      %v2389 = vunpack.c.l.b16 %v2245
      %v2390 = vunpack.c.l.b16 %v2246
      %v2391 = vunpack.c.l.b16 %v2247
      %v2392 = vunpack.c.l.b16 %v2248
      %v2393 = vunpack.c.l.b16 %v2249
      %v2394 = vunpack.c.l.b16 %v2250
      %v2395 = vunpack.c.l.b16 %v2251
      %v2396 = vunpack.c.l.b16 %v2252
      %v2397 = vunpack.c.l.b16 %v2253
      %v2398 = vunpack.c.l.b16 %v2254
      %v2399 = vunpack.c.l.b16 %v2255
      %v2400 = vunpack.c.l.b16 %v2256
      %v2401 = vunpack.c.l.b16 %v2257
      %v2402 = vunpack.c.l.b16 %v2258
      %v2403 = vunpack.c.l.b16 %v2259
      %v2404 = vunpack.c.l.b16 %v2260
      %v2405 = vpack.c.b16 %v2334, %v2333
      %v2406 = vpack.c.b16 %v2336, %v2335
      %v2407 = vpack.c.b16 %v2338, %v2337
      %v2408 = vpack.c.b16 %v2340, %v2339
      %v2409 = vpack.c.b16 %v2342, %v2341
      %v2410 = vpack.c.b16 %v2344, %v2343
      %v2411 = vpack.c.b16 %v2346, %v2345
      %v2412 = vpack.c.b16 %v2348, %v2347
      %v2413 = vpack.c.b16 %v2350, %v2349
      %v2414 = vpack.c.b16 %v2352, %v2351
      %v2415 = vpack.c.b16 %v2354, %v2353
      %v2416 = vpack.c.b16 %v2356, %v2355
      %v2417 = vpack.c.b16 %v2358, %v2357
      %v2418 = vpack.c.b16 %v2360, %v2359
      %v2419 = vpack.c.b16 %v2362, %v2361
      %v2420 = vpack.c.b16 %v2364, %v2363
      %v2421 = vpack.c.b16 %v2366, %v2365
      %v2422 = vpack.c.b16 %v2368, %v2367
      %v2423 = vpack.c.b16 %v2370, %v2369
      %v2424 = vpack.c.b16 %v2372, %v2371
      %v2425 = vpack.c.b16 %v2374, %v2373
      %v2426 = vpack.c.b16 %v2376, %v2375
      %v2427 = vpack.c.b16 %v2378, %v2377
      %v2428 = vpack.c.b16 %v2380, %v2379
      %v2429 = vpack.c.b16 %v2382, %v2381
      %v2430 = vpack.c.b16 %v2384, %v2383
      %v2431 = vpack.c.b16 %v2386, %v2385
      %v2432 = vpack.c.b16 %v2388, %v2387
      %v2433 = vpack.c.b16 %v2390, %v2389
      %v2434 = vpack.c.b16 %v2392, %v2391
      %v2435 = vpack.c.b16 %v2394, %v2393
      %v2436 = vpack.c.b16 %v2396, %v2395
      %v2437 = vpack.c.b16 %v2398, %v2397
      %v2438 = vpack.c.b16 %v2400, %v2399
      %v2439 = vpack.c.b16 %v2402, %v2401
      %v2440 = vpack.c.b16 %v2404, %v2403
      %v2478 = vsel %vm899, %v2173, 0
      %v2481 = vsel %vm899, %v2178, 0
      %v2484 = vsel %vm899, %v2183, 0
      %v2487 = vsel %vm899, %v2188, 0
      %2489 = vmatprep.subr.bf16.mxu0 0
      %2490 = vmatpush1.bf16.msra.mxu0 %v2405
      %2491 = vmatprep.subr.bf16.mxu0 0
      %2492 = vmatpush1.bf16.msra.mxu0 %v2406
      %2493 = vmatprep.subr.bf16.mxu0 0
      %2494 = vmatpush1.bf16.msra.mxu0 %v2407
      %2495 = vmatprep.subr.bf16.mxu0 0
      %2496 = vmatpush1.bf16.msra.mxu0 %v2408
      %2497 = vmatprep.subr.bf16.mxu0 0
      %2498 = vmatpush1.bf16.msra.mxu0 %v2409
      %2499 = vmatprep.subr.bf16.mxu0 0
      %2500 = vmatpush1.bf16.msra.mxu0 %v2410
      %2501 = vmatprep.subr.bf16.mxu0 0
      %2502 = vmatpush1.bf16.msra.mxu0 %v2411
      %2503 = vmatprep.subr.bf16.mxu0 0
      %2504 = vmatpush1.bf16.msra.mxu0 %v2412
      %2505 = vmatprep.subr.bf16.mxu0 0
      %2506 = vmatpush1.bf16.msra.mxu0 %v2413
      %2507 = vmatprep.subr.bf16.mxu0 0
      %2508 = vmatpush1.bf16.msra.mxu0 %v2414
      %2509 = vmatprep.subr.bf16.mxu0 0
      %2510 = vmatpush1.bf16.msra.mxu0 %v2415
      %2511 = vmatprep.subr.bf16.mxu0 0
      %2512 = vmatpush1.bf16.msra.mxu0 %v2416
      %2513 = vmatprep.subr.bf16.mxu0 0
      %2514 = vmatpush1.bf16.msra.mxu0 %v2417
      %2515 = vmatprep.subr.bf16.mxu0 0
      %2516 = vmatpush1.bf16.msra.mxu0 %v2418
      %2517 = vmatprep.subr.bf16.mxu0 0
      %2518 = vmatpush1.bf16.msra.mxu0 %v2419
      %2519 = vmatprep.subr.bf16.mxu0 0
      %2520 = vmatpush1.bf16.msra.mxu0 %v2420
      %2521 = vmatprep.mubr.bf16.mxu0 %v2170
      %2522 = vmatmul.mubr.bf16.gmra.mrb[0].mxu0 %v2169
      %v2523 = vpop.f32.mrb[0].mxu0
      %v2524 = vadd.f32 0.0, %v2523
      %v2525 = vpop.f32.mrb[0].mxu0
      %v2526 = vpop.f32.mrb[0].mxu0
      %v2527 = vadd.f32 0.0, %v2526
      %v2528 = vpop.f32.mrb[0].mxu0
      %2529 = vmatprep.mubr.bf16.mxu0 %v2175
      %2530 = vmatmul.mubr.bf16.gmra.mrb[0].mxu0 %v2174
      %v2531 = vpop.f32.mrb[0].mxu0
      %v2532 = vadd.f32 0.0, %v2531
      %v2533 = vpop.f32.mrb[0].mxu0
      %v2534 = vpop.f32.mrb[0].mxu0
      %v2535 = vadd.f32 0.0, %v2534
      %v2536 = vpop.f32.mrb[0].mxu0
      %2537 = vmatprep.mubr.bf16.mxu0 %v2180
      %2538 = vmatmul.mubr.bf16.gmra.mrb[0].mxu0 %v2179
      %v2539 = vpop.f32.mrb[0].mxu0
      %v2540 = vadd.f32 0.0, %v2539
      %v2541 = vpop.f32.mrb[0].mxu0
      %v2542 = vpop.f32.mrb[0].mxu0
      %v2543 = vadd.f32 0.0, %v2542
      %v2544 = vpop.f32.mrb[0].mxu0
      %2545 = vmatprep.mubr.bf16.mxu0 %v2185
      %2546 = vmatmul.mubr.bf16.gmra.mrb[0].mxu0 %v2184
      %v2547 = vpop.f32.mrb[0].mxu0
      %v2548 = vadd.f32 0.0, %v2547
      %v2549 = vpop.f32.mrb[0].mxu0
      %v2550 = vpop.f32.mrb[0].mxu0
      %v2551 = vadd.f32 0.0, %v2550
      %v2552 = vpop.f32.mrb[0].mxu0
      %2553 = vdwg.mxu0
      %2554 = vmatprep.subr.bf16.mxu0 0
      %2555 = vmatpush1.bf16.msra.mxu0 %v2421
      %2556 = vmatprep.subr.bf16.mxu0 0
      %2557 = vmatpush1.bf16.msra.mxu0 %v2422
      %2558 = vmatprep.subr.bf16.mxu0 0
      %2559 = vmatpush1.bf16.msra.mxu0 %v2423
      %2560 = vmatprep.subr.bf16.mxu0 0
      %2561 = vmatpush1.bf16.msra.mxu0 %v2424
      %2562 = vmatprep.subr.bf16.mxu0 0
      %2563 = vmatpush1.bf16.msra.mxu0 %v2425
      %2564 = vmatprep.subr.bf16.mxu0 0
      %2565 = vmatpush1.bf16.msra.mxu0 %v2426
      %2566 = vmatprep.subr.bf16.mxu0 0
      %2567 = vmatpush1.bf16.msra.mxu0 %v2427
      %2568 = vmatprep.subr.bf16.mxu0 0
      %2569 = vmatpush1.bf16.msra.mxu0 %v2428
      %2570 = vmatprep.subr.bf16.mxu0 0
      %2571 = vmatpush1.bf16.msra.mxu0 %v2429
      %2572 = vmatprep.subr.bf16.mxu0 0
      %2573 = vmatpush1.bf16.msra.mxu0 %v2430
      %2574 = vmatprep.subr.bf16.mxu0 0
      %2575 = vmatpush1.bf16.msra.mxu0 %v2431
      %2576 = vmatprep.subr.bf16.mxu0 0
      %2577 = vmatpush1.bf16.msra.mxu0 %v2432
      %2578 = vmatprep.subr.bf16.mxu0 0
      %2579 = vmatpush1.bf16.msra.mxu0 %v2433
      %2580 = vmatprep.subr.bf16.mxu0 0
      %2581 = vmatpush1.bf16.msra.mxu0 %v2434
      %2582 = vmatprep.subr.bf16.mxu0 0
      %2583 = vmatpush1.bf16.msra.mxu0 %v2435
      %2584 = vmatprep.subr.bf16.mxu0 0
      %2585 = vmatpush1.bf16.msra.mxu0 %v2436
      %2586 = vmatprep.mubr.bf16.mxu0 %v2172
      %2587 = vmatmul.mubr.bf16.gmra.mrb[0].mxu0 %v2171
      %v2588 = vpop.f32.mrb[0].mxu0
      %v2589 = vadd.f32 %v2524, %v2588
      %v2590 = vpop.f32.mrb[0].mxu0
      %v2591 = vpop.f32.mrb[0].mxu0
      %v2592 = vadd.f32 %v2527, %v2591
      %v2593 = vpop.f32.mrb[0].mxu0
      %2594 = vmatprep.mubr.bf16.mxu0 %v2177
      %2595 = vmatmul.mubr.bf16.gmra.mrb[0].mxu0 %v2176
      %v2596 = vpop.f32.mrb[0].mxu0
      %v2597 = vadd.f32 %v2532, %v2596
      %v2598 = vpop.f32.mrb[0].mxu0
      %v2599 = vpop.f32.mrb[0].mxu0
      %v2600 = vadd.f32 %v2535, %v2599
      %v2601 = vpop.f32.mrb[0].mxu0
      %2602 = vmatprep.mubr.bf16.mxu0 %v2182
      %2603 = vmatmul.mubr.bf16.gmra.mrb[0].mxu0 %v2181
      %v2604 = vpop.f32.mrb[0].mxu0
      %v2605 = vadd.f32 %v2540, %v2604
      %v2606 = vpop.f32.mrb[0].mxu0
      %v2607 = vpop.f32.mrb[0].mxu0
      %v2608 = vadd.f32 %v2543, %v2607
      %v2609 = vpop.f32.mrb[0].mxu0
      %2610 = vmatprep.mubr.bf16.mxu0 %v2187
      %2611 = vmatmul.mubr.bf16.gmra.mrb[0].mxu0 %v2186
      %v2612 = vpop.f32.mrb[0].mxu0
      %v2613 = vadd.f32 %v2548, %v2612
      %v2614 = vpop.f32.mrb[0].mxu0
      %v2615 = vpop.f32.mrb[0].mxu0
      %v2616 = vadd.f32 %v2551, %v2615
      %v2617 = vpop.f32.mrb[0].mxu0
      %2618 = vdwg.mxu0
      %2619 = vmatprep.subr.bf16.mxu0 0
      %2620 = vmatpush1.bf16.msra.mxu0 %v2437
      %2621 = vmatprep.subr.bf16.mxu0 0
      %2622 = vmatpush1.bf16.msra.mxu0 %v2438
      %2623 = vmatprep.subr.bf16.mxu0 0
      %2624 = vmatpush1.bf16.msra.mxu0 %v2439
      %2625 = vmatprep.subr.bf16.mxu0 0
      %2626 = vmatpush1.bf16.msra.mxu0 %v2440
      %2627 = vmatprep.subr.bf16.mxu0 0
      %2628 = vmatpush1.bf16.msra.mxu0 0
      %2629 = vmatprep.subr.bf16.mxu0 0
      %2630 = vmatpush1.bf16.msra.mxu0 0
      %2631 = vmatprep.subr.bf16.mxu0 0
      %2632 = vmatpush1.bf16.msra.mxu0 0
      %2633 = vmatprep.subr.bf16.mxu0 0
      %2634 = vmatpush1.bf16.msra.mxu0 0
      %2635 = vmatprep.subr.bf16.mxu0 0
      %2636 = vmatpush1.bf16.msra.mxu0 0
      %2637 = vmatprep.subr.bf16.mxu0 0
      %2638 = vmatpush1.bf16.msra.mxu0 0
      %2639 = vmatprep.subr.bf16.mxu0 0
      %2640 = vmatpush1.bf16.msra.mxu0 0
      %2641 = vmatprep.subr.bf16.mxu0 0
      %2642 = vmatpush1.bf16.msra.mxu0 0
      %2643 = vmatprep.subr.bf16.mxu0 0
      %2644 = vmatpush1.bf16.msra.mxu0 0
      %2645 = vmatprep.subr.bf16.mxu0 0
      %2646 = vmatpush1.bf16.msra.mxu0 0
      %2647 = vmatprep.subr.bf16.mxu0 0
      %2648 = vmatpush1.bf16.msra.mxu0 0
      %2649 = vmatprep.subr.bf16.mxu0 0
      %2650 = vmatpush1.bf16.msra.mxu0 0
      %2651 = vmatprep.mubr.bf16.mxu0 0
      %2652 = vmatmul.mubr.bf16.gmra.mrb[0].mxu0 %v2478
      %v2653 = vpop.f32.mrb[0].mxu0
      %v2654 = vadd.f32 %v2589, %v2653
      %v2655 = vpop.f32.mrb[0].mxu0
      %v2656 = vpop.f32.mrb[0].mxu0
      %v2657 = vadd.f32 %v2592, %v2656
      %v2658 = vpop.f32.mrb[0].mxu0
      %2659 = vmatprep.mubr.bf16.mxu0 0
      %2660 = vmatmul.mubr.bf16.gmra.mrb[0].mxu0 %v2481
      %v2661 = vpop.f32.mrb[0].mxu0
      %v2662 = vadd.f32 %v2597, %v2661
      %v2663 = vpop.f32.mrb[0].mxu0
      %v2664 = vpop.f32.mrb[0].mxu0
      %v2665 = vadd.f32 %v2600, %v2664
      %v2666 = vpop.f32.mrb[0].mxu0
      %2667 = vmatprep.mubr.bf16.mxu0 0
      %2668 = vmatmul.mubr.bf16.gmra.mrb[0].mxu0 %v2484
      %v2669 = vpop.f32.mrb[0].mxu0
      %v2670 = vadd.f32 %v2605, %v2669
      %v2671 = vpop.f32.mrb[0].mxu0
      %v2672 = vpop.f32.mrb[0].mxu0
      %v2673 = vadd.f32 %v2608, %v2672
      %v2674 = vpop.f32.mrb[0].mxu0
      %2675 = vmatprep.mubr.bf16.mxu0 0
      %2676 = vmatmul.mubr.bf16.gmra.mrb[0].mxu0 %v2487
      %v2677 = vpop.f32.mrb[0].mxu0
      %v2678 = vadd.f32 %v2613, %v2677
      %v2679 = vpop.f32.mrb[0].mxu0
      %v2680 = vpop.f32.mrb[0].mxu0
      %v2681 = vadd.f32 %v2616, %v2680
      %v2682 = vpop.f32.mrb[0].mxu0
      %2683 = vdwg.mxu0
      %v2684 = vmul.f32 %v2654, 0.999995
      %v2685 = vmul.f32 %v2657, 0.999995
      %v2686 = vmul.f32 %v2662, 0.999995
      %v2687 = vmul.f32 %v2665, 0.999995
      %v2688 = vmul.f32 %v2670, 0.999995
      %v2689 = vmul.f32 %v2673, 0.999995
      %v2690 = vmul.f32 %v2678, 0.999995
      %v2691 = vmul.f32 %v2681, 0.999995
      %v2692 = vmax.f32 %v2684, 0.0
      %v2693 = vmax.f32 %v2685, 0.0
      %v2694 = vmax.f32 %v2686, 0.0
      %v2695 = vmax.f32 %v2687, 0.0
      %v2696 = vmax.f32 %v2688, 0.0
      %v2697 = vmax.f32 %v2689, 0.0
      %v2698 = vmax.f32 %v2690, 0.0
      %v2699 = vmax.f32 %v2691, 0.0
      %v2700 = vmax.f32 %v1107, 0.0
      %v2701 = vmin.f32 %v2700, 1.0
      %v2702 = vsub.f32 1.0, %v2701
      %v2703 = vsel %vm899, %v2692, 0.0
      %v2704 = vsel %vm899, %v2693, 0.0
      %v2705 = vadd.f32 %v2703, %v2704
      %v2706 = vsel %vm899, %v2694, 0.0
      %v2707 = vadd.f32 %v2705, %v2706
      %v2708 = vsel %vm899, %v2695, 0.0
      %v2709 = vadd.f32 %v2707, %v2708
      %v2710 = vsel %vm899, %v2696, 0.0
      %v2711 = vadd.f32 %v2709, %v2710
      %v2712 = vsel %vm899, %v2697, 0.0
      %v2713 = vadd.f32 %v2711, %v2712
      %v2714 = vsel %vm899, %v2698, 0.0
      %v2715 = vadd.f32 %v2713, %v2714
      %v2716 = vsel %vm899, %v2699, 0.0
      %v2717 = vadd.f32 %v2715, %v2716
      %v2718 = vrot.slane %v2717, 4
      %v2719 = vadd.f32 %v2717, %v2718
      %v2720 = vrot.slane %v2719, 2
      %v2721 = vadd.f32 %v2719, %v2720
      %v2722 = vrot.slane %v2721, 1
      %v2723 = vadd.f32 %v2721, %v2722
      %v2724 = vmul.f32 %v2723, %v969
      %v2725 = vmul.f32 %v2724, %v632
      %2727 = vset.pattern.permute.xlu0 0
      %2728 = vperm.xlu0 %2727, %v2702
      %v2729 = vpop.permute.xlu0 %2728
      %v2731 = vmul.f32 %v2725, %v2729
      %v2732 = vpack.c.bf16 %v2731, %v2731
      %s2733 = scalar_lea.vmem %s4, 32
      %v2734 = vld [vmem:[%s2733] sm:$0xf]
      %v2735 = vld [vmem:[%s2733 + $0x4] sm:$0xf]
      %v2736 = vld [vmem:[%s2733 + $0x8] sm:$0xf]
      %v2737 = vld [vmem:[%s2733 + $0xc] sm:$0xf]
      %v2738 = vld [vmem:[%s2733 + $0x10] sm:$0xf]
      %v2739 = vld [vmem:[%s2733 + $0x14] sm:$0xf]
      %v2740 = vld [vmem:[%s2733 + $0x18] sm:$0xf]
      %v2741 = vld [vmem:[%s2733 + $0x1c] sm:$0xf]
      %s2742 = scalar_lea.vmem %s5, 1
      %v2743 = vld [vmem:[%s2742] sm:$0x1]
      %v2745 = vlaneseq
      %v2746 = vshrl.u32 %v2745, 7
      %v2747 = vsub.s32 0, %v2746
      %v2748 = vrot.slane %v2743, %v2747
      %v2758 = vunpack.c.l.b16 %v2734
      %v2759 = vunpack.c.l.b16 %v2735
      %v2760 = vunpack.c.l.b16 %v2736
      %v2761 = vunpack.c.l.b16 %v2737
      %v2762 = vunpack.c.l.b16 %v2738
      %v2763 = vunpack.c.l.b16 %v2739
      %v2764 = vunpack.c.l.b16 %v2740
      %v2765 = vunpack.c.l.b16 %v2741
      %v2766 = vpack.c.b16 %v2759, %v2758
      %v2767 = vpack.c.b16 %v2761, %v2760
      %v2768 = vpack.c.b16 %v2763, %v2762
      %v2769 = vpack.c.b16 %v2765, %v2764
      %v2775 = vsel %vm899, %v2732, 0
      %2777 = vmatprep.subr.bf16.mxu0 0
      %2778 = vmatpush1.bf16.msra.mxu0 %v2766
      %2779 = vmatprep.subr.bf16.mxu0 0
      %2780 = vmatpush1.bf16.msra.mxu0 %v2767
      %2781 = vmatprep.subr.bf16.mxu0 0
      %2782 = vmatpush1.bf16.msra.mxu0 %v2768
      %2783 = vmatprep.subr.bf16.mxu0 0
      %2784 = vmatpush1.bf16.msra.mxu0 %v2769
      %2785 = vmatprep.subr.bf16.mxu0 0
      %2786 = vmatpush1.bf16.msra.mxu0 0
      %2787 = vmatprep.subr.bf16.mxu0 0
      %2788 = vmatpush1.bf16.msra.mxu0 0
      %2789 = vmatprep.subr.bf16.mxu0 0
      %2790 = vmatpush1.bf16.msra.mxu0 0
      %2791 = vmatprep.subr.bf16.mxu0 0
      %2792 = vmatpush1.bf16.msra.mxu0 0
      %2793 = vmatprep.subr.bf16.mxu0 0
      %2794 = vmatpush1.bf16.msra.mxu0 0
      %2795 = vmatprep.subr.bf16.mxu0 0
      %2796 = vmatpush1.bf16.msra.mxu0 0
      %2797 = vmatprep.subr.bf16.mxu0 0
      %2798 = vmatpush1.bf16.msra.mxu0 0
      %2799 = vmatprep.subr.bf16.mxu0 0
      %2800 = vmatpush1.bf16.msra.mxu0 0
      %2801 = vmatprep.subr.bf16.mxu0 0
      %2802 = vmatpush1.bf16.msra.mxu0 0
      %2803 = vmatprep.subr.bf16.mxu0 0
      %2804 = vmatpush1.bf16.msra.mxu0 0
      %2805 = vmatprep.subr.bf16.mxu0 0
      %2806 = vmatpush1.bf16.msra.mxu0 0
      %2807 = vmatprep.subr.bf16.mxu0 0
      %2808 = vmatpush1.bf16.msra.mxu0 0
      %2809 = vmatprep.mubr.bf16.mxu0 0
      %2810 = vmatmul.mubr.bf16.gmra.mrb[0].mxu0 %v2775
      %v2811 = vpop.f32.mrb[0].mxu0
      %v2812 = vadd.f32 %v2748, %v2811
      %v2813 = vpop.f32.mrb[0].mxu0
      %v2814 = vpop.f32.mrb[0].mxu0
      %v2815 = vpop.f32.mrb[0].mxu0
      %2816 = vdwg.mxu0
      %v2817 = vtanh.pop %v2812
      %s2818 = scalar_lea.vmem %s6, 1
      %v2819 = vld [vmem:[%s2818] sm:$0x1]
      %v2821 = vlaneseq
      %v2822 = vshrl.u32 %v2821, 7
      %v2823 = vsub.s32 0, %v2822
      %v2824 = vrot.slane %v2819, %v2823
      %v2826 = vmul.f32 %v2817, %v2824
      %v2827 = vsel %vm1064, %v2826, 0.0
      %2828 = vadd.xlane.f32.xlu0 %v2827
      %v2829 = vpop.xlane.xlu0 %2828
      %s2830 = scalar_lea.vmem %s7, 1
      %v2831 = vld [vmem:[%s2830] sm:$0x1]
      %v2833 = vlaneseq
      %v2834 = vshrl.u32 %v2833, 7
      %v2835 = vsub.s32 0, %v2834
      %v2836 = vrot.slane %v2831, %v2835
      %v2838 = vadd.f32 %v2829, %v2836
      %v2839 = vmul.f32 %v2838, 10.0
      %v2840 = vsel %vm1077, %v2839, -inf
      %v2841 = vrot.slane %v2840, 4
      %v2842 = vmax.f32 %v2840, %v2841
      %v2843 = vrot.slane %v2842, 2
      %v2844 = vmax.f32 %v2842, %v2843
      %v2845 = vrot.slane %v2844, 1
      %v2846 = vmax.f32 %v2844, %v2845
      %v2847 = vsub.f32 %v2839, %v2846
      %v2848 = vmul.f32 %v2847, 1.442695
      %v2849 = vpow.pop %v2848
      %v2850 = vsel %vm1077, %v2849, 0.0
      %v2851 = vrot.slane %v2850, 4
      %v2852 = vadd.f32 %v2850, %v2851
      %v2853 = vrot.slane %v2852, 2
      %v2854 = vadd.f32 %v2852, %v2853
      %v2855 = vrot.slane %v2854, 1
      %v2856 = vadd.f32 %v2854, %v2855
      %v2857 = vrcp.pop %v2856
      %v2858 = vmul.f32 %v2849, %v2857
      %v2859 = vmul.f32 %v2858, %v633
      %v2860 = vsel %vm1077, %v2859, 0.0
      %v2861 = vrot.slane %v2860, 4
      %v2862 = vadd.f32 %v2860, %v2861
      %v2863 = vrot.slane %v2862, 2
      %v2864 = vadd.f32 %v2862, %v2863
      %v2865 = vrot.slane %v2864, 1
      %v2866 = vadd.f32 %v2864, %v2865
      %v2867 = vadd.f32 %v2866, 1e-08
      %v2868 = vrcp.pop %v2867
      %v2869 = vmul.f32 %v2859, %v2868
      %2871 = vset.pattern.permute.xlu0 0
      %2872 = vperm.xlu0 %2871, %v2869
      %v2873 = vpop.permute.xlu0 %2872
      %v2875 = vmul.f32 %v2873, %v632
      %v2876 = vsel %vm899, %v2875, 0.0
      %v2877 = vrot.slane %v2876, 4
      %v2878 = vadd.f32 %v2876, %v2877
      %v2879 = vrot.slane %v2878, 2
      %v2880 = vadd.f32 %v2878, %v2879
      %v2881 = vrot.slane %v2880, 1
      %v2882 = vadd.f32 %v2880, %v2881
      %v2883 = vpack.c.bf16 %v2882, %v2882
      %s2884 = scalar_lea.vmem %s8, 32
      %v2885 = vld [vmem:[%s2884] sm:$0xf]
      %v2886 = vld [vmem:[%s2884 + $0x4] sm:$0xf]
      %v2887 = vld [vmem:[%s2884 + $0x8] sm:$0xf]
      %v2888 = vld [vmem:[%s2884 + $0xc] sm:$0xf]
      %v2889 = vld [vmem:[%s2884 + $0x10] sm:$0xf]
      %v2890 = vld [vmem:[%s2884 + $0x14] sm:$0xf]
      %v2891 = vld [vmem:[%s2884 + $0x18] sm:$0xf]
      %v2892 = vld [vmem:[%s2884 + $0x1c] sm:$0xf]
      %s2893 = scalar_lea.vmem %s9, 1
      %v2894 = vld [vmem:[%s2893] sm:$0x1]
      %v2903 = vunpack.c.l.b16 %v2885
      %v2904 = vunpack.c.l.b16 %v2886
      %v2905 = vunpack.c.l.b16 %v2887
      %v2906 = vunpack.c.l.b16 %v2888
      %v2907 = vunpack.c.l.b16 %v2889
      %v2908 = vunpack.c.l.b16 %v2890
      %v2909 = vunpack.c.l.b16 %v2891
      %v2910 = vunpack.c.l.b16 %v2892
      %v2911 = vpack.c.b16 %v2904, %v2903
      %v2912 = vpack.c.b16 %v2906, %v2905
      %v2913 = vpack.c.b16 %v2908, %v2907
      %v2914 = vpack.c.b16 %v2910, %v2909
      %v2920 = vsel %vm899, %v2883, 0
      %2922 = vmatprep.subr.bf16.mxu0 0
      %2923 = vmatpush1.bf16.msra.mxu0 %v2911
      %2924 = vmatprep.subr.bf16.mxu0 0
      %2925 = vmatpush1.bf16.msra.mxu0 %v2912
      %2926 = vmatprep.subr.bf16.mxu0 0
      %2927 = vmatpush1.bf16.msra.mxu0 %v2913
      %2928 = vmatprep.subr.bf16.mxu0 0
      %2929 = vmatpush1.bf16.msra.mxu0 %v2914
      %2930 = vmatprep.subr.bf16.mxu0 0
      %2931 = vmatpush1.bf16.msra.mxu0 0
      %2932 = vmatprep.subr.bf16.mxu0 0
      %2933 = vmatpush1.bf16.msra.mxu0 0
      %2934 = vmatprep.subr.bf16.mxu0 0
      %2935 = vmatpush1.bf16.msra.mxu0 0
      %2936 = vmatprep.subr.bf16.mxu0 0
      %2937 = vmatpush1.bf16.msra.mxu0 0
      %2938 = vmatprep.subr.bf16.mxu0 0
      %2939 = vmatpush1.bf16.msra.mxu0 0
      %2940 = vmatprep.subr.bf16.mxu0 0
      %2941 = vmatpush1.bf16.msra.mxu0 0
      %2942 = vmatprep.subr.bf16.mxu0 0
      %2943 = vmatpush1.bf16.msra.mxu0 0
      %2944 = vmatprep.subr.bf16.mxu0 0
      %2945 = vmatpush1.bf16.msra.mxu0 0
      %2946 = vmatprep.subr.bf16.mxu0 0
      %2947 = vmatpush1.bf16.msra.mxu0 0
      %2948 = vmatprep.subr.bf16.mxu0 0
      %2949 = vmatpush1.bf16.msra.mxu0 0
      %2950 = vmatprep.subr.bf16.mxu0 0
      %2951 = vmatpush1.bf16.msra.mxu0 0
      %2952 = vmatprep.subr.bf16.mxu0 0
      %2953 = vmatpush1.bf16.msra.mxu0 0
      %2954 = vmatprep.mubr.bf16.mxu0 0
      %2955 = vmatmul.mubr.bf16.gmra.mrb[0].mxu0 %v2920
      %v2956 = vpop.f32.mrb[0].mxu0
      %v2957 = vadd.f32 %v2894, %v2956
      %v2958 = vpop.f32.mrb[0].mxu0
      %v2959 = vpop.f32.mrb[0].mxu0
      %v2960 = vpop.f32.mrb[0].mxu0
      %2961 = vdwg.mxu0
      %v2962 = vtanh.pop %v2957
      %v2963 = vpack.c.bf16 %v2693, %v2692
      %v2964 = vpack.c.bf16 %v2695, %v2694
      %v2965 = vpack.c.bf16 %v2697, %v2696
      %v2966 = vpack.c.bf16 %v2699, %v2698
      %s2967 = scalar_lea.vmem %s10, 32
      %v2968 = vld [vmem:[%s2967] sm:$0xf]
      %v2969 = vld [vmem:[%s2967 + $0x4] sm:$0xf]
      %v2970 = vld [vmem:[%s2967 + $0x8] sm:$0xf]
      %v2971 = vld [vmem:[%s2967 + $0xc] sm:$0xf]
      %v2972 = vld [vmem:[%s2967 + $0x10] sm:$0xf]
      %v2973 = vld [vmem:[%s2967 + $0x14] sm:$0xf]
      %v2974 = vld [vmem:[%s2967 + $0x18] sm:$0xf]
      %v2975 = vld [vmem:[%s2967 + $0x1c] sm:$0xf]
      %s2976 = scalar_lea.vmem %s11, 64
      %v2977 = vld [vmem:[%s2976] sm:$0xff]
      %v2978 = vld [vmem:[%s2976 + $0x8] sm:$0xff]
      %v2979 = vld [vmem:[%s2976 + $0x10] sm:$0xff]
      %v2980 = vld [vmem:[%s2976 + $0x18] sm:$0xff]
      %v2981 = vld [vmem:[%s2976 + $0x20] sm:$0xff]
      %v2982 = vld [vmem:[%s2976 + $0x28] sm:$0xff]
      %v2983 = vld [vmem:[%s2976 + $0x30] sm:$0xff]
      %v2984 = vld [vmem:[%s2976 + $0x38] sm:$0xff]
      %v2993 = vunpack.c.l.b16 %v2968
      %v2994 = vunpack.c.l.b16 %v2969
      %v2995 = vunpack.c.l.b16 %v2970
      %v2996 = vunpack.c.l.b16 %v2971
      %v2997 = vunpack.c.l.b16 %v2972
      %v2998 = vunpack.c.l.b16 %v2973
      %v2999 = vunpack.c.l.b16 %v2974
      %v3000 = vunpack.c.l.b16 %v2975
      %v3001 = vpack.c.b16 %v2994, %v2993
      %v3002 = vpack.c.b16 %v2996, %v2995
      %v3003 = vpack.c.b16 %v2998, %v2997
      %v3004 = vpack.c.b16 %v3000, %v2999
      %v3010 = vsel %vm899, %v2963, 0
      %v3013 = vsel %vm899, %v2964, 0
      %v3016 = vsel %vm899, %v2965, 0
      %v3019 = vsel %vm899, %v2966, 0
      %3021 = vmatprep.subr.bf16.mxu0 0
      %3022 = vmatpush1.bf16.msra.mxu0 %v3001
      %3023 = vmatprep.subr.bf16.mxu0 0
      %3024 = vmatpush1.bf16.msra.mxu0 %v3002
      %3025 = vmatprep.subr.bf16.mxu0 0
      %3026 = vmatpush1.bf16.msra.mxu0 %v3003
      %3027 = vmatprep.subr.bf16.mxu0 0
      %3028 = vmatpush1.bf16.msra.mxu0 %v3004
      %3029 = vmatprep.subr.bf16.mxu0 0
      %3030 = vmatpush1.bf16.msra.mxu0 0
      %3031 = vmatprep.subr.bf16.mxu0 0
      %3032 = vmatpush1.bf16.msra.mxu0 0
      %3033 = vmatprep.subr.bf16.mxu0 0
      %3034 = vmatpush1.bf16.msra.mxu0 0
      %3035 = vmatprep.subr.bf16.mxu0 0
      %3036 = vmatpush1.bf16.msra.mxu0 0
      %3037 = vmatprep.subr.bf16.mxu0 0
      %3038 = vmatpush1.bf16.msra.mxu0 0
      %3039 = vmatprep.subr.bf16.mxu0 0
      %3040 = vmatpush1.bf16.msra.mxu0 0
      %3041 = vmatprep.subr.bf16.mxu0 0
      %3042 = vmatpush1.bf16.msra.mxu0 0
      %3043 = vmatprep.subr.bf16.mxu0 0
      %3044 = vmatpush1.bf16.msra.mxu0 0
      %3045 = vmatprep.subr.bf16.mxu0 0
      %3046 = vmatpush1.bf16.msra.mxu0 0
      %3047 = vmatprep.subr.bf16.mxu0 0
      %3048 = vmatpush1.bf16.msra.mxu0 0
      %3049 = vmatprep.subr.bf16.mxu0 0
      %3050 = vmatpush1.bf16.msra.mxu0 0
      %3051 = vmatprep.subr.bf16.mxu0 0
      %3052 = vmatpush1.bf16.msra.mxu0 0
      %3053 = vmatprep.mubr.bf16.mxu0 0
      %3054 = vmatmul.mubr.bf16.gmra.mrb[0].mxu0 %v3010
      %v3055 = vpop.f32.mrb[0].mxu0
      %v3056 = vadd.f32 %v2977, %v3055
      %v3057 = vpop.f32.mrb[0].mxu0
      %v3058 = vpop.f32.mrb[0].mxu0
      %v3059 = vadd.f32 %v2978, %v3058
      %v3060 = vpop.f32.mrb[0].mxu0
      %3061 = vmatprep.mubr.bf16.mxu0 0
      %3062 = vmatmul.mubr.bf16.gmra.mrb[0].mxu0 %v3013
      %v3063 = vpop.f32.mrb[0].mxu0
      %v3064 = vadd.f32 %v2979, %v3063
      %v3065 = vpop.f32.mrb[0].mxu0
      %v3066 = vpop.f32.mrb[0].mxu0
      %v3067 = vadd.f32 %v2980, %v3066
      %v3068 = vpop.f32.mrb[0].mxu0
      %3069 = vmatprep.mubr.bf16.mxu0 0
      %3070 = vmatmul.mubr.bf16.gmra.mrb[0].mxu0 %v3016
      %v3071 = vpop.f32.mrb[0].mxu0
      %v3072 = vadd.f32 %v2981, %v3071
      %v3073 = vpop.f32.mrb[0].mxu0
      %v3074 = vpop.f32.mrb[0].mxu0
      %v3075 = vadd.f32 %v2982, %v3074
      %v3076 = vpop.f32.mrb[0].mxu0
      %3077 = vmatprep.mubr.bf16.mxu0 0
      %3078 = vmatmul.mubr.bf16.gmra.mrb[0].mxu0 %v3019
      %v3079 = vpop.f32.mrb[0].mxu0
      %v3080 = vadd.f32 %v2983, %v3079
      %v3081 = vpop.f32.mrb[0].mxu0
      %v3082 = vpop.f32.mrb[0].mxu0
      %v3083 = vadd.f32 %v2984, %v3082
      %v3084 = vpop.f32.mrb[0].mxu0
      %3085 = vdwg.mxu0
      %v3086 = vsel %vm899, %v3056, 0.0
      %v3087 = vsel %vm899, %v3059, 0.0
      %v3088 = vadd.f32 %v3086, %v3087
      %v3089 = vsel %vm899, %v3064, 0.0
      %v3090 = vadd.f32 %v3088, %v3089
      %v3091 = vsel %vm899, %v3067, 0.0
      %v3092 = vadd.f32 %v3090, %v3091
      %v3093 = vsel %vm899, %v3072, 0.0
      %v3094 = vadd.f32 %v3092, %v3093
      %v3095 = vsel %vm899, %v3075, 0.0
      %v3096 = vadd.f32 %v3094, %v3095
      %v3097 = vsel %vm899, %v3080, 0.0
      %v3098 = vadd.f32 %v3096, %v3097
      %v3099 = vsel %vm899, %v3083, 0.0
      %v3100 = vadd.f32 %v3098, %v3099
      %v3101 = vrot.slane %v3100, 4
      %v3102 = vadd.f32 %v3100, %v3101
      %v3103 = vrot.slane %v3102, 2
      %v3104 = vadd.f32 %v3102, %v3103
      %v3105 = vrot.slane %v3104, 1
      %v3106 = vadd.f32 %v3104, %v3105
      %v3107 = vmul.f32 %v3106, %v969
      %v3108 = vsub.f32 %v3056, %v3107
      %v3109 = vsub.f32 %v3059, %v3107
      %v3110 = vsub.f32 %v3064, %v3107
      %v3111 = vsub.f32 %v3067, %v3107
      %v3112 = vsub.f32 %v3072, %v3107
      %v3113 = vsub.f32 %v3075, %v3107
      %v3114 = vsub.f32 %v3080, %v3107
      %v3115 = vsub.f32 %v3083, %v3107
      %v3116 = vmul.f32 %v3108, %v3108
      %v3117 = vmul.f32 %v3109, %v3109
      %v3118 = vmul.f32 %v3110, %v3110
      %v3119 = vmul.f32 %v3111, %v3111
      %v3120 = vmul.f32 %v3112, %v3112
      %v3121 = vmul.f32 %v3113, %v3113
      %v3122 = vmul.f32 %v3114, %v3114
      %v3123 = vmul.f32 %v3115, %v3115
      %v3124 = vsel %vm899, %v3116, 0.0
      %v3125 = vsel %vm899, %v3117, 0.0
      %v3126 = vadd.f32 %v3124, %v3125
      %v3127 = vsel %vm899, %v3118, 0.0
      %v3128 = vadd.f32 %v3126, %v3127
      %v3129 = vsel %vm899, %v3119, 0.0
      %v3130 = vadd.f32 %v3128, %v3129
      %v3131 = vsel %vm899, %v3120, 0.0
      %v3132 = vadd.f32 %v3130, %v3131
      %v3133 = vsel %vm899, %v3121, 0.0
      %v3134 = vadd.f32 %v3132, %v3133
      %v3135 = vsel %vm899, %v3122, 0.0
      %v3136 = vadd.f32 %v3134, %v3135
      %v3137 = vsel %vm899, %v3123, 0.0
      %v3138 = vadd.f32 %v3136, %v3137
      %v3139 = vrot.slane %v3138, 4
      %v3140 = vadd.f32 %v3138, %v3139
      %v3141 = vrot.slane %v3140, 2
      %v3142 = vadd.f32 %v3140, %v3141
      %v3143 = vrot.slane %v3142, 1
      %v3144 = vadd.f32 %v3142, %v3143
      %v3145 = vmul.f32 %v3144, %v969
      %v3146 = vadd.f32 %v3145, 1e-05
      %v3147 = vrsqrt.pop %v3146
      %v3148 = vmul.f32 %v3108, %v3147
      %v3149 = vmul.f32 %v3109, %v3147
      %v3150 = vmul.f32 %v3110, %v3147
      %v3151 = vmul.f32 %v3111, %v3147
      %v3152 = vmul.f32 %v3112, %v3147
      %v3153 = vmul.f32 %v3113, %v3147
      %v3154 = vmul.f32 %v3114, %v3147
      %v3155 = vmul.f32 %v3115, %v3147
      %v3156 = vlaneseq
      %v3157 = vshrl.u32 %v3156, 7
      %v3158 = vsub.s32 0, %v3157
      %v3159 = vrot.slane %v2962, %v3158
      %v3160 = vmul.f32 %v3159, %v3148
      %v3161 = vmul.f32 %v3159, %v3149
      %v3162 = vmul.f32 %v3159, %v3150
      %v3163 = vmul.f32 %v3159, %v3151
      %v3164 = vmul.f32 %v3159, %v3152
      %v3165 = vmul.f32 %v3159, %v3153
      %v3166 = vmul.f32 %v3159, %v3154
      %v3167 = vmul.f32 %v3159, %v3155
      %3169 = vrot.lane.b32.xlu0 %v3159, 64
      %v3170 = vpop.permute.xlu0 %3169
      %v3172 = vadd.f32 %v3160, %v3170
      %v3173 = vadd.f32 %v3161, %v3170
      %v3174 = vadd.f32 %v3162, %v3170
      %v3175 = vadd.f32 %v3163, %v3170
      %v3176 = vadd.f32 %v3164, %v3170
      %v3177 = vadd.f32 %v3165, %v3170
      %v3178 = vadd.f32 %v3166, %v3170
      %v3179 = vadd.f32 %v3167, %v3170
      %v3180 = vmax.f32 %v3172, 0.0
      %v3181 = vmax.f32 %v3173, 0.0
      %v3182 = vmax.f32 %v3174, 0.0
      %v3183 = vmax.f32 %v3175, 0.0
      %v3184 = vmax.f32 %v3176, 0.0
      %v3185 = vmax.f32 %v3177, 0.0
      %v3186 = vmax.f32 %v3178, 0.0
      %v3187 = vmax.f32 %v3179, 0.0
      %v3188 = vadd.f32 %v3180, %v2692
      %v3189 = vadd.f32 %v3181, %v2693
      %v3190 = vadd.f32 %v3182, %v2694
      %v3191 = vadd.f32 %v3183, %v2695
      %v3192 = vadd.f32 %v3184, %v2696
      %v3193 = vadd.f32 %v3185, %v2697
      %v3194 = vadd.f32 %v3186, %v2698
      %v3195 = vadd.f32 %v3187, %v2699
      %v3196 = vpack.c.bf16 %v3189, %v3188
      %v3197 = vpack.c.bf16 %v3191, %v3190
      %v3198 = vpack.c.bf16 %v3193, %v3192
      %v3199 = vpack.c.bf16 %v3195, %v3194
      %v3200 = vld [vmem:[%s13] sm:$0xf]
      %v3201 = vld [vmem:[%s13 + $0x4] sm:$0xf]
      %v3202 = vld [vmem:[%s13 + $0x8] sm:$0xf]
      %v3203 = vld [vmem:[%s13 + $0xc] sm:$0xf]
      %v3204 = vld [vmem:[%s13 + $0x10] sm:$0xf]
      %v3205 = vld [vmem:[%s13 + $0x14] sm:$0xf]
      %v3206 = vld [vmem:[%s13 + $0x18] sm:$0xf]
      %v3207 = vld [vmem:[%s13 + $0x1c] sm:$0xf]
      %v3216 = vunpack.c.l.b16 %v3200
      %v3217 = vunpack.c.l.b16 %v3201
      %v3218 = vunpack.c.l.b16 %v3202
      %v3219 = vunpack.c.l.b16 %v3203
      %v3220 = vunpack.c.l.b16 %v3204
      %v3221 = vunpack.c.l.b16 %v3205
      %v3222 = vunpack.c.l.b16 %v3206
      %v3223 = vunpack.c.l.b16 %v3207
      %v3224 = vpack.c.b16 %v3217, %v3216
      %v3225 = vpack.c.b16 %v3219, %v3218
      %v3226 = vpack.c.b16 %v3221, %v3220
      %v3227 = vpack.c.b16 %v3223, %v3222
      %v3233 = vsel %vm899, %v3196, 0
      %v3236 = vsel %vm899, %v3197, 0
      %v3239 = vsel %vm899, %v3198, 0
      %v3242 = vsel %vm899, %v3199, 0
      %3244 = vmatprep.subr.bf16.mxu0 0
      %3245 = vmatpush1.bf16.msra.mxu0 %v3224
      %3246 = vmatprep.subr.bf16.mxu0 0
      %3247 = vmatpush1.bf16.msra.mxu0 %v3225
      %3248 = vmatprep.subr.bf16.mxu0 0
      %3249 = vmatpush1.bf16.msra.mxu0 %v3226
      %3250 = vmatprep.subr.bf16.mxu0 0
      %3251 = vmatpush1.bf16.msra.mxu0 %v3227
      %3252 = vmatprep.subr.bf16.mxu0 0
      %3253 = vmatpush1.bf16.msra.mxu0 0
      %3254 = vmatprep.subr.bf16.mxu0 0
      %3255 = vmatpush1.bf16.msra.mxu0 0
      %3256 = vmatprep.subr.bf16.mxu0 0
      %3257 = vmatpush1.bf16.msra.mxu0 0
      %3258 = vmatprep.subr.bf16.mxu0 0
      %3259 = vmatpush1.bf16.msra.mxu0 0
      %3260 = vmatprep.subr.bf16.mxu0 0
      %3261 = vmatpush1.bf16.msra.mxu0 0
      %3262 = vmatprep.subr.bf16.mxu0 0
      %3263 = vmatpush1.bf16.msra.mxu0 0
      %3264 = vmatprep.subr.bf16.mxu0 0
      %3265 = vmatpush1.bf16.msra.mxu0 0
      %3266 = vmatprep.subr.bf16.mxu0 0
      %3267 = vmatpush1.bf16.msra.mxu0 0
      %3268 = vmatprep.subr.bf16.mxu0 0
      %3269 = vmatpush1.bf16.msra.mxu0 0
      %3270 = vmatprep.subr.bf16.mxu0 0
      %3271 = vmatpush1.bf16.msra.mxu0 0
      %3272 = vmatprep.subr.bf16.mxu0 0
      %3273 = vmatpush1.bf16.msra.mxu0 0
      %3274 = vmatprep.subr.bf16.mxu0 0
      %3275 = vmatpush1.bf16.msra.mxu0 0
      %3276 = vmatprep.mubr.bf16.mxu0 0
      %3277 = vmatmul.mubr.bf16.gmra.mrb[0].mxu0 %v3233
      %v3278 = vpop.f32.mrb[0].mxu0
      %v3279 = vadd.f32 0.0, %v3278
      %v3280 = vpop.f32.mrb[0].mxu0
      %v3281 = vpop.f32.mrb[0].mxu0
      %v3282 = vadd.f32 0.0, %v3281
      %v3283 = vpop.f32.mrb[0].mxu0
      %3284 = vmatprep.mubr.bf16.mxu0 0
      %3285 = vmatmul.mubr.bf16.gmra.mrb[0].mxu0 %v3236
      %v3286 = vpop.f32.mrb[0].mxu0
      %v3287 = vadd.f32 0.0, %v3286
      %v3288 = vpop.f32.mrb[0].mxu0
      %v3289 = vpop.f32.mrb[0].mxu0
      %v3290 = vadd.f32 0.0, %v3289
      %v3291 = vpop.f32.mrb[0].mxu0
      %3292 = vmatprep.mubr.bf16.mxu0 0
      %3293 = vmatmul.mubr.bf16.gmra.mrb[0].mxu0 %v3239
      %v3294 = vpop.f32.mrb[0].mxu0
      %v3295 = vadd.f32 0.0, %v3294
      %v3296 = vpop.f32.mrb[0].mxu0
      %v3297 = vpop.f32.mrb[0].mxu0
      %v3298 = vadd.f32 0.0, %v3297
      %v3299 = vpop.f32.mrb[0].mxu0
      %3300 = vmatprep.mubr.bf16.mxu0 0
      %3301 = vmatmul.mubr.bf16.gmra.mrb[0].mxu0 %v3242
      %v3302 = vpop.f32.mrb[0].mxu0
      %v3303 = vadd.f32 0.0, %v3302
      %v3304 = vpop.f32.mrb[0].mxu0
      %v3305 = vpop.f32.mrb[0].mxu0
      %v3306 = vadd.f32 0.0, %v3305
      %v3307 = vpop.f32.mrb[0].mxu0
      %3308 = vdwg.mxu0
      %v3309 = vmul.f32 %v3279, 0.999995
      %v3310 = vmul.f32 %v3282, 0.999995
      %v3311 = vmul.f32 %v3287, 0.999995
      %v3312 = vmul.f32 %v3290, 0.999995
      %v3313 = vmul.f32 %v3295, 0.999995
      %v3314 = vmul.f32 %v3298, 0.999995
      %v3315 = vmul.f32 %v3303, 0.999995
      %v3316 = vmul.f32 %v3306, 0.999995
      %v3317 = vmax.f32 %v3309, 0.0
      %v3318 = vmax.f32 %v3310, 0.0
      %v3319 = vmax.f32 %v3311, 0.0
      %v3320 = vmax.f32 %v3312, 0.0
      %v3321 = vmax.f32 %v3313, 0.0
      %v3322 = vmax.f32 %v3314, 0.0
      %v3323 = vmax.f32 %v3315, 0.0
      %v3324 = vmax.f32 %v3316, 0.0
      %v3325 = vpack.c.bf16 %v3318, %v3317
      %v3326 = vpack.c.bf16 %v3320, %v3319
      %v3327 = vpack.c.bf16 %v3322, %v3321
      %v3328 = vpack.c.bf16 %v3324, %v3323
      %v3329 = vld [vmem:[%s14] sm:$0xf]
      %v3330 = vld [vmem:[%s14 + $0x4] sm:$0xf]
      %v3331 = vld [vmem:[%s14 + $0x8] sm:$0xf]
      %v3332 = vld [vmem:[%s14 + $0xc] sm:$0xf]
      %v3333 = vld [vmem:[%s14 + $0x10] sm:$0xf]
      %v3334 = vld [vmem:[%s14 + $0x14] sm:$0xf]
      %v3335 = vld [vmem:[%s14 + $0x18] sm:$0xf]
      %v3336 = vld [vmem:[%s14 + $0x1c] sm:$0xf]
      %v3337 = vld [vmem:[%s14 + $0x20] sm:$0xf]
      %v3338 = vld [vmem:[%s14 + $0x24] sm:$0xf]
      %v3339 = vld [vmem:[%s14 + $0x28] sm:$0xf]
      %v3340 = vld [vmem:[%s14 + $0x2c] sm:$0xf]
      %v3341 = vld [vmem:[%s14 + $0x30] sm:$0xf]
      %v3342 = vld [vmem:[%s14 + $0x34] sm:$0xf]
      %v3343 = vld [vmem:[%s14 + $0x38] sm:$0xf]
      %v3344 = vld [vmem:[%s14 + $0x3c] sm:$0xf]
      %v3345 = vld [vmem:[%s15] sm:$0x1]
      %v3347 = vlaneseq
      %v3348 = vshrl.u32 %v3347, 7
      %v3349 = vsub.s32 0, %v3348
      %v3350 = vrot.slane %v3345, %v3349
      %v3368 = vunpack.c.l.b16 %v3329
      %v3369 = vunpack.c.l.b16 %v3330
      %v3370 = vunpack.c.l.b16 %v3331
      %v3371 = vunpack.c.l.b16 %v3332
      %v3372 = vunpack.c.l.b16 %v3333
      %v3373 = vunpack.c.l.b16 %v3334
      %v3374 = vunpack.c.l.b16 %v3335
      %v3375 = vunpack.c.l.b16 %v3336
      %v3376 = vunpack.c.l.b16 %v3337
      %v3377 = vunpack.c.l.b16 %v3338
      %v3378 = vunpack.c.l.b16 %v3339
      %v3379 = vunpack.c.l.b16 %v3340
      %v3380 = vunpack.c.l.b16 %v3341
      %v3381 = vunpack.c.l.b16 %v3342
      %v3382 = vunpack.c.l.b16 %v3343
      %v3383 = vunpack.c.l.b16 %v3344
      %v3384 = vpack.c.b16 %v3369, %v3368
      %v3385 = vpack.c.b16 %v3371, %v3370
      %v3386 = vpack.c.b16 %v3373, %v3372
      %v3387 = vpack.c.b16 %v3375, %v3374
      %v3388 = vpack.c.b16 %v3377, %v3376
      %v3389 = vpack.c.b16 %v3379, %v3378
      %v3390 = vpack.c.b16 %v3381, %v3380
      %v3391 = vpack.c.b16 %v3383, %v3382
      %3400 = vmatprep.subr.bf16.mxu0 0
      %3401 = vmatpush1.bf16.msra.mxu0 %v3384
      %3402 = vmatprep.subr.bf16.mxu0 0
      %3403 = vmatpush1.bf16.msra.mxu0 %v3385
      %3404 = vmatprep.subr.bf16.mxu0 0
      %3405 = vmatpush1.bf16.msra.mxu0 %v3386
      %3406 = vmatprep.subr.bf16.mxu0 0
      %3407 = vmatpush1.bf16.msra.mxu0 %v3387
      %3408 = vmatprep.subr.bf16.mxu0 0
      %3409 = vmatpush1.bf16.msra.mxu0 %v3388
      %3410 = vmatprep.subr.bf16.mxu0 0
      %3411 = vmatpush1.bf16.msra.mxu0 %v3389
      %3412 = vmatprep.subr.bf16.mxu0 0
      %3413 = vmatpush1.bf16.msra.mxu0 %v3390
      %3414 = vmatprep.subr.bf16.mxu0 0
      %3415 = vmatpush1.bf16.msra.mxu0 %v3391
      %3416 = vmatprep.subr.bf16.mxu0 0
      %3417 = vmatpush1.bf16.msra.mxu0 0
      %3418 = vmatprep.subr.bf16.mxu0 0
      %3419 = vmatpush1.bf16.msra.mxu0 0
      %3420 = vmatprep.subr.bf16.mxu0 0
      %3421 = vmatpush1.bf16.msra.mxu0 0
      %3422 = vmatprep.subr.bf16.mxu0 0
      %3423 = vmatpush1.bf16.msra.mxu0 0
      %3424 = vmatprep.subr.bf16.mxu0 0
      %3425 = vmatpush1.bf16.msra.mxu0 0
      %3426 = vmatprep.subr.bf16.mxu0 0
      %3427 = vmatpush1.bf16.msra.mxu0 0
      %3428 = vmatprep.subr.bf16.mxu0 0
      %3429 = vmatpush1.bf16.msra.mxu0 0
      %3430 = vmatprep.subr.bf16.mxu0 0
      %3431 = vmatpush1.bf16.msra.mxu0 0
      %3432 = vmatprep.mubr.bf16.mxu0 0
      %3433 = vmatmul.mubr.bf16.gmra.mrb[0].mxu0 %v3325
      %v3434 = vpop.f32.mrb[0].mxu0
      %v3435 = vadd.f32 %v3350, %v3434
      %v3436 = vpop.f32.mrb[0].mxu0
      %v3437 = vpop.f32.mrb[0].mxu0
      %v3438 = vadd.f32 %v3350, %v3437
      %v3439 = vpop.f32.mrb[0].mxu0
      %3440 = vmatprep.mubr.bf16.mxu0 0
      %3441 = vmatmul.mubr.bf16.gmra.mrb[0].mxu0 %v3326
      %v3442 = vpop.f32.mrb[0].mxu0
      %v3443 = vadd.f32 %v3350, %v3442
      %v3444 = vpop.f32.mrb[0].mxu0
      %v3445 = vpop.f32.mrb[0].mxu0
      %v3446 = vadd.f32 %v3350, %v3445
      %v3447 = vpop.f32.mrb[0].mxu0
      %3448 = vmatprep.mubr.bf16.mxu0 0
      %3449 = vmatmul.mubr.bf16.gmra.mrb[0].mxu0 %v3327
      %v3450 = vpop.f32.mrb[0].mxu0
      %v3451 = vadd.f32 %v3350, %v3450
      %v3452 = vpop.f32.mrb[0].mxu0
      %v3453 = vpop.f32.mrb[0].mxu0
      %v3454 = vadd.f32 %v3350, %v3453
      %v3455 = vpop.f32.mrb[0].mxu0
      %3456 = vmatprep.mubr.bf16.mxu0 0
      %3457 = vmatmul.mubr.bf16.gmra.mrb[0].mxu0 %v3328
      %v3458 = vpop.f32.mrb[0].mxu0
      %v3459 = vadd.f32 %v3350, %v3458
      %v3460 = vpop.f32.mrb[0].mxu0
      %v3461 = vpop.f32.mrb[0].mxu0
      %v3462 = vadd.f32 %v3350, %v3461
      %v3463 = vpop.f32.mrb[0].mxu0
      %3464 = vdwg.mxu0
      %3465 = vst [vmem:[%s622] sm:$0xff] %v3435
      %3466 = vst [vmem:[%s622 + $0x8] sm:$0xff] %v3438
      %3467 = vst [vmem:[%s622 + $0x10] sm:$0xff] %v3443
      %3468 = vst [vmem:[%s622 + $0x18] sm:$0xff] %v3446
      %3469 = vst [vmem:[%s622 + $0x20] sm:$0xff] %v3451
      %3470 = vst [vmem:[%s622 + $0x28] sm:$0xff] %v3454
      %3471 = vst [vmem:[%s622 + $0x30] sm:$0xff] %v3459
      %3472 = vst [vmem:[%s622 + $0x38] sm:$0xff] %v3462
      %3473 = vst.msk [vmem:[%s626] sm:$0xff] %vm1077, %v1075
      %3474 = vst.msk [vmem:[%s630] sm:$0xff] %vm1077, %v2838
      %p3475 = scmp.lt.s32.totalorder %s30, 1
      %s3476 = scalar_select %p3475, %s30, 1
      %s3477 = smul.addr %s3476, 8
      %s3478 = smul.addr %s3477, 8
      %s3479 = scalar_lea.vmem %s16, %s3478
      %p3480 = scmp.lt.s32.totalorder %s30, 1
      %s3481 = scalar_select %p3480, %s30, 1
      %s3482 = smul.addr %s3481, 8
      %s3483 = scalar_lea.vmem %s17, %s3482
      %p3484 = scmp.lt.s32.totalorder %s30, 1
      %s3485 = scalar_select %p3484, %s30, 1
      %s3486 = smul.addr %s3485, 8
      %s3487 = scalar_lea.vmem %s18, %s3486
      // Predicated region
      $region85: #{resc_backbone_forward.3} parent=83 // pred_check
        %p3488 = pneg %p399
      $region86: #{resc_backbone_forward.3} parent=83 // pred_check_branch
        %3490 = sbr.rel (%p3488) target = $region88
      $region87: #{resc_backbone_forward.3} parent=83 // pred_region
        _
      $region88: #{resc_backbone_forward.3} parent=83 // pred_fallthru
        _
      // Predicated region
      $region89: #{resc_backbone_forward.3} parent=83 // pred_check
        %p3491 = pneg %p425
      $region90: #{resc_backbone_forward.3} parent=83 // pred_check_branch
        %3493 = sbr.rel (%p3491) target = $region92
      $region91: #{resc_backbone_forward.3} parent=83 // pred_region
        _
      $region92: #{resc_backbone_forward.3} parent=83 // pred_fallthru
        _
      // Predicated region
      $region93: #{resc_backbone_forward.3} parent=83 // pred_check
        %p3494 = pneg %p451
      $region94: #{resc_backbone_forward.3} parent=83 // pred_check_branch
        %3496 = sbr.rel (%p3494) target = $region96
      $region95: #{resc_backbone_forward.3} parent=83 // pred_region
        _
      $region96: #{resc_backbone_forward.3} parent=83 // pred_fallthru
        _
    $region84: #{resc_backbone_forward.3} parent=5 // pred_fallthru
      _
    %p3497 = scmp.le.s32.totalorder 2, %s25
    // Predicated region
    $region97: #{resc_backbone_forward.3} parent=5 // pred_check
      %p3498 = pneg %p3497
    $region98: #{resc_backbone_forward.3} parent=5 // pred_check_branch
      %3500 = sbr.rel (%p3498) target = $region100
    $region99: #{resc_backbone_forward.3} parent=5 // pred_region
      %s3501 = ssub.s32 %s25, 2
      // Predicated region
      $region101: #{resc_backbone_forward.3} parent=99 // pred_check
        %p3502 = pneg %p405
      $region102: #{resc_backbone_forward.3} parent=99 // pred_check_branch
        %3504 = sbr.rel (%p3502) target = $region104
      $region103: #{resc_backbone_forward.3} parent=99 // pred_region
        %p3505 = scmp.lt.s32.totalorder %s31, 1
        %s3506 = scalar_select %p3505, %s31, 1
        %s3507 = smul.addr %s3506, 8
        %s3508 = smul.addr %s3507, 8
        %s3509 = scalar_lea.vmem %s16, %s3508
      $region104: #{resc_backbone_forward.3} parent=99 // pred_fallthru
        _
      // Predicated region
      $region105: #{resc_backbone_forward.3} parent=99 // pred_check
        %p3510 = pneg %p431
      $region106: #{resc_backbone_forward.3} parent=99 // pred_check_branch
        %3512 = sbr.rel (%p3510) target = $region108
      $region107: #{resc_backbone_forward.3} parent=99 // pred_region
        %p3513 = scmp.lt.s32.totalorder %s31, 1
        %s3514 = scalar_select %p3513, %s31, 1
        %s3515 = smul.addr %s3514, 8
        %s3516 = scalar_lea.vmem %s17, %s3515
      $region108: #{resc_backbone_forward.3} parent=99 // pred_fallthru
        _
      // Predicated region
      $region109: #{resc_backbone_forward.3} parent=99 // pred_check
        %p3517 = pneg %p457
      $region110: #{resc_backbone_forward.3} parent=99 // pred_check_branch
        %3519 = sbr.rel (%p3517) target = $region112
      $region111: #{resc_backbone_forward.3} parent=99 // pred_region
        %p3520 = scmp.lt.s32.totalorder %s31, 1
        %s3521 = scalar_select %p3520, %s31, 1
        %s3522 = smul.addr %s3521, 8
        %s3523 = scalar_lea.vmem %s18, %s3522
      $region112: #{resc_backbone_forward.3} parent=99 // pred_fallthru
        _
    $region100: #{resc_backbone_forward.3} parent=5 // pred_fallthru
      _
  $region6: #{resc_backbone_forward.3} parent=0 // loop_footer
    %s29 = sadd.s32 1, %s25
  $region7: #{resc_backbone_forward.3} parent=0 // loop_footer_branch
    %24 = sbr.rel target = $region3
  $region8: #{resc_backbone_forward.3} parent=0 // loop_exit
    _

</llo_original>
